<compile_context>
chip_gen: v7x
topology: tpu7x:2x2x1
jax: 0.10.0
libtpu: 0.0.40
codegen_flags: <defaults>
</compile_context>

<pallas_src>
import functools
import math

import jax
import jax.numpy as jnp
import numpy as np
from jax import lax
from jax.experimental import pallas as pl
from jax.experimental.pallas import tpu as pltpu


def _rel_shift_vectorized(bd_full, masks, T, width):
    """out[i, j] = bd_full[i, j + (T - 1 - i)] for j in [0, T).

    Log-depth barrel shifter: per-row circular LEFT rotation by (T-1-i) built from
    ceil(log2(T)) uniform pltpu.roll rotations (XLU) + per-row selects (VPU).  Since
    j + (T-1-i) <= 2T-2 < width, the circular wrap and the zero padding are never read.
    """
    x = bd_full
    for b, mask in enumerate(masks):
        # left-rotate by (1 << b)  ==  roll by +(width - (1 << b))
        x = jnp.where(mask, pltpu.roll(x, width - (1 << b), 1), x)
    return x[:, :T]


def _rel_attn_kernel(q_in, kT_in, v_in, pbT_in,
                     wq, bq, wkT, bkT, wv, bv, wo, bo,
                     pbu, pbv,
                     out_ref,
                     *, n_head, d_pad):
    """One batch element per grid step.

    q_in / v_in : (1, T, C)  bf16
    kT_in       : (1, C, T)  bf16  (key, pre-transposed in the wrapper)
    pbT_in      : (1, C_pad, W) bf16  (precomputed, padded, transposed pos projection)
    wq, wv      : (C, C_pad) bf16   (wq pre-scaled by 1/sqrt(d_k))
    wkT         : (C_pad, C) bf16   (Wk^T, head-padded)
    wo          : (C_pad, C) bf16
    bq/bv/pbu/pbv : (1, C_pad) f32 ; bkT : (C_pad, 1) f32 ; bo : (1, C) f32
    """
    T = q_in.shape[1]
    W = pbT_in.shape[2]
    f32 = jnp.float32
    bf16 = jnp.bfloat16

    xq = q_in[0]      # (T, C) bf16
    xkT = kT_in[0]    # (C, T) bf16
    xv = v_in[0]      # (T, C) bf16

    # Projections: bf16 operands on the MXU, f32 accumulation.
    # Q-path scale (1/sqrt(d_k)) already folded into wq/bq/pbu/pbv by the wrapper.
    q = jnp.dot(xq, wq[...], preferred_element_type=f32) + bq[...]        # (T, C_pad)
    kT = jnp.dot(wkT[...], xkT, preferred_element_type=f32) + bkT[...]    # (C_pad, T)
    v = jnp.dot(xv, wv[...], preferred_element_type=f32) + bv[...]        # (T, C_pad)

    # Positional-bias adds hoisted out of the head loop.
    qu = (q + pbu[...]).astype(bf16)
    qv = (q + pbv[...]).astype(bf16)
    kTb = kT.astype(bf16)
    vb = v.astype(bf16)

    # Per-row rotation bit masks for the vectorized rel_shift (hoisted + pre-broadcast,
    # shared across heads).
    row = lax.broadcasted_iota(jnp.int32, (T, 1), 0)
    lshift = (T - 1) - row                               # left-rotate amount per row
    nbits = max(1, (T - 1).bit_length())
    masks = [jnp.broadcast_to(((lshift >> b) & 1) == 1, (T, W)) for b in range(nbits)]

    out_acc = bo[...]                                    # (1, C) f32, broadcasts to (T, C)
    for h in range(n_head):
        sl = slice(h * d_pad, (h + 1) * d_pad)

        # (T, d_pad) @ (d_pad, T) and (T, d_pad) @ (d_pad, W): plain A @ B, K = d_pad.
        ac = jnp.dot(qu[:, sl], kTb[sl, :], preferred_element_type=f32)        # (T, T)
        ph = pbT_in[0, sl, :]                                                  # (d_pad, W)
        bd_full = jnp.dot(qv[:, sl], ph, preferred_element_type=f32)           # (T, W)

        scores = ac + _rel_shift_vectorized(bd_full, masks, T, W)

        # softmax over keys (scores already carry the 1/sqrt(d_k) scaling via the Q path)
        m = jnp.max(scores, axis=-1, keepdims=True)
        e = jnp.exp(scores - m)
        s = jnp.sum(e, axis=-1, keepdims=True)
        attn = (e * pl.reciprocal(s, approx=True)).astype(bf16)

        ctx = jnp.dot(attn, vb[:, sl], preferred_element_type=f32)             # (T, d_pad)
        # Accumulate the output projection per head into one lane-dense (T, C) f32 acc.
        out_acc = out_acc + jnp.dot(ctx.astype(bf16), wo[sl, :],
                                    preferred_element_type=f32)

    out_ref[0] = out_acc.astype(out_ref.dtype)


def _vmem_limit_bytes(T, C, C_pad, W, out_itemsize):
    """Rough working-set estimate with per-generation cap (advisory limit only)."""
    bf, f = 2, 4
    per_step = 2 * (2 * T * C * bf + C * T * bf + T * C * out_itemsize)     # q,v,kT + out
    invariant = 2 * ((2 * C * C_pad + 2 * C_pad * C + C_pad * W) * bf
                     + (5 * C_pad + 2 * C) * f)                             # weights/biases
    interm = 3 * T * C_pad * (f + bf) + 3 * (T * W + 2 * T * T) * f + T * C * f
    need = per_step + invariant + interm + (4 << 20)
    try:
        kind = jax.devices()[0].device_kind.lower()
    except Exception:
        kind = ""
    if "v7" in kind:
        cap = 48 << 20       # 64 MiB physical VMEM on v7x: leave headroom
    elif any(v in kind for v in ("v4", "v5", "v6")):
        cap = 96 << 20       # 128 MiB physical VMEM
    else:
        cap = 32 << 20       # conservative default for older / unknown parts
    return int(min(cap, max(32 << 20, need)))


def rel_pos_mha(query, key, value, pos_emb, params, n_head):
    B, T, C = query.shape
    d_k = C // n_head
    P = pos_emb.shape[1]
    assert P == 2 * T - 1 and pos_emb.shape[0] == 1

    scale = 1.0 / math.sqrt(d_k)
    f32, bf16 = jnp.float32, jnp.bfloat16

    # MXU / lane-layout friendly padded sizes.
    d_pad = ((d_k + 127) // 128) * 128          # per-head width padded to 128 lanes
    C_pad = n_head * d_pad
    W = ((2 * T + 127) // 128) * 128            # lane-dense positional width (>= 2T-1)

    def pad_cols(w):
        """(..., H*d_k) -> (..., H*d_pad): zero-pad each head block along the last dim."""
        lead = w.shape[:-1]
        w = w.reshape(lead + (n_head, d_k))
        w = jnp.pad(w, [(0, 0)] * len(lead) + [(0, 0), (0, d_pad - d_k)])
        return w.reshape(lead + (n_head * d_pad,))

    def pad_rows_headed(w):
        """(H*d_k, C) -> (H*d_pad, C): zero-pad each head block along the first dim."""
        w = w.reshape(n_head, d_k, C)
        w = jnp.pad(w, [(0, 0), (0, d_pad - d_k), (0, 0)])
        return w.reshape(n_head * d_pad, C)

    # bf16 matmul operands (halves HBM/VMEM traffic); biases stay f32.
    q_in = query.astype(bf16)                           # (B, T, C)
    kT_in = key.swapaxes(1, 2).astype(bf16)             # (B, C, T)  key pre-transposed
    v_in = value.astype(bf16)                           # (B, T, C)

    # Fold the 1/sqrt(d_k) score scaling into the Q projection and the positional biases;
    # zero-pad every head block so per-head slices are 128-lane aligned.
    wq = pad_cols(params["wq"] * scale).astype(bf16)                       # (C, C_pad)
    bq = pad_cols((params["bq"] * scale).reshape(1, C)).astype(f32)        # (1, C_pad)
    wkT = pad_cols(params["wk"]).astype(bf16).T                            # (C_pad, C)
    bkT = pad_cols(params["bk"].reshape(1, C)).astype(f32).reshape(C_pad, 1)
    wv = pad_cols(params["wv"]).astype(bf16)                               # (C, C_pad)
    bv = pad_cols(params["bv"].reshape(1, C)).astype(f32)                  # (1, C_pad)
    wo = pad_rows_headed(params["wo"]).astype(bf16)                        # (C_pad, C)
    bo = params["bo"].reshape(1, C).astype(f32)                            # (1, C)
    pbu = pad_cols((params["pbu"] * scale).reshape(1, C)).astype(f32)      # (1, C_pad)
    pbv = pad_cols((params["pbv"] * scale).reshape(1, C)).astype(f32)      # (1, C_pad)

    # Precompute the batch-invariant positional projection once in XLA, zero-pad the
    # positional axis to W (extra rows are never read by the rel-shift), and pass it
    # pre-transposed so the kernel does no per-step pos matmul and no transposes.
    wp_pad = pad_cols(params["wp"]).astype(bf16)                           # (C, C_pad)
    p = jnp.dot(pos_emb[0].astype(bf16), wp_pad, preferred_element_type=f32)  # (2T-1, C_pad)
    p = jnp.pad(p, ((0, W - P), (0, 0)))                                   # (W, C_pad)
    pbT = p.T.astype(bf16)[None]                                           # (1, C_pad, W)

    kernel = functools.partial(_rel_attn_kernel, n_head=n_head, d_pad=d_pad)

    def rep(shape):
        n = len(shape)
        return pl.BlockSpec(shape, lambda b, _n=n: (0,) * _n)

    return pl.pallas_call(
        kernel,
        out_shape=jax.ShapeDtypeStruct((B, T, C), query.dtype),
        grid_spec=pltpu.PrefetchScalarGridSpec(
            num_scalar_prefetch=0,
            grid=(B,),
            in_specs=[
                pl.BlockSpec((1, T, C), lambda b: (b, 0, 0)),        # query
                pl.BlockSpec((1, C, T), lambda b: (b, 0, 0)),        # key (transposed)
                pl.BlockSpec((1, T, C), lambda b: (b, 0, 0)),        # value
                pl.BlockSpec((1, C_pad, W), lambda b: (0, 0, 0)),    # pbT (shared)
                rep((C, C_pad)), rep((1, C_pad)),                    # Wq*s, bq*s
                rep((C_pad, C)), rep((C_pad, 1)),                    # Wk^T, bk^T
                rep((C, C_pad)), rep((1, C_pad)),                    # Wv, bv
                rep((C_pad, C)), rep((1, C)),                        # Wout, bout
                rep((1, C_pad)), rep((1, C_pad)),                    # pos_bias_u*s, pos_bias_v*s
            ],
            out_specs=pl.BlockSpec((1, T, C), lambda b: (b, 0, 0)),
        ),
        compiler_params=pltpu.CompilerParams(
            dimension_semantics=("parallel",),
            vmem_limit_bytes=_vmem_limit_bytes(T, C, C_pad, W, query.dtype.itemsize)),
    )(q_in, kT_in, v_in, pbT,
      wq, bq, wkT, bkT, wv, bv, wo, bo, pbu, pbv)


def rel_pos_mha_reference(query, key, value, pos_emb, params, n_head):
    """Pure-JAX reference mirroring the PyTorch forward (eval mode, no mask).

    Matmul inputs/weights are rounded through bf16 (as the kernel does) but all math runs
    in f32, so the comparison only measures kernel-internal precision.
    """
    B, T, C = query.shape
    d_k = C // n_head
    r = lambda x: x.astype(jnp.bfloat16).astype(jnp.float32)

    q = r(query) @ r(params["wq"]) + params["bq"]
    k = r(key) @ r(params["wk"]) + params["bk"]
    v = r(value) @ r(params["wv"]) + params["bv"]
    p = r(pos_emb) @ r(params["wp"])

    def heads(x):
        return x.reshape(x.shape[0], x.shape[1], n_head, d_k).transpose(0, 2, 1, 3)

    qh, kh, vh = heads(q), heads(k), heads(v)
    ph = jnp.broadcast_to(heads(p), (B, n_head, 2 * T - 1, d_k))

    q_u = qh + params["pbu"][None, :, None, :]
    q_v = qh + params["pbv"][None, :, None, :]

    ac = jnp.einsum("bhtd,bhsd->bhts", q_u, kh)
    bd_full = jnp.einsum("bhtd,bhsd->bhts", q_v, ph)       # (B, H, T, 2T-1)

    j = jnp.arange(T)[None, :]
    i = jnp.arange(T)[:, None]
    gather_idx = (j - i + (T - 1))[None, None, :, :]        # bd[i,j] = bd_full[i, j-i+T-1]
    bd = jnp.take_along_axis(bd_full, gather_idx, axis=-1)

    scores = (ac + bd) / math.sqrt(d_k)
    attn = jax.nn.softmax(scores, axis=-1)
    ctx = jnp.einsum("bhts,bhsd->bhtd", attn, vh)
    ctx = ctx.transpose(0, 2, 1, 3).reshape(B, T, C)
    return ctx @ r(params["wo"]) + params["bo"]


if __name__ == "__main__":
    B, T, C, H = 2, 8, 32, 4
    d_k = C // H

    root = jax.random.PRNGKey(0)
    keys = jax.random.split(root, 16)

    query = jax.random.normal(keys[0], (B, T, C), jnp.float32)
    key_t = jax.random.normal(keys[1], (B, T, C), jnp.float32)
    value = jax.random.normal(keys[2], (B, T, C), jnp.float32)
    pos_emb = jax.random.normal(keys[3], (1, 2 * T - 1, C), jnp.float32)

    ws = 1.0 / math.sqrt(C)
    params = {
        "wq": ws * jax.random.normal(keys[4], (C, C), jnp.float32),
        "bq": 0.1 * jax.random.normal(keys[5], (C,), jnp.float32),
        "wk": ws * jax.random.normal(keys[6], (C, C), jnp.float32),
        "bk": 0.1 * jax.random.normal(keys[7], (C,), jnp.float32),
        "wv": ws * jax.random.normal(keys[8], (C, C), jnp.float32),
        "bv": 0.1 * jax.random.normal(keys[9], (C,), jnp.float32),
        "wp": ws * jax.random.normal(keys[10], (C, C), jnp.float32),
        "wo": ws * jax.random.normal(keys[11], (C, C), jnp.float32),
        "bo": 0.1 * jax.random.normal(keys[12], (C,), jnp.float32),
        "pbu": 0.1 * jax.random.normal(keys[13], (H, d_k), jnp.float32),
        "pbv": 0.1 * jax.random.normal(keys[14], (H, d_k), jnp.float32),
    }

    out = rel_pos_mha(query, key_t, value, pos_emb, params, H)
    jax.block_until_ready(out)

    ref = rel_pos_mha_reference(query, key_t, value, pos_emb, params, H)
    np.testing.assert_allclose(np.asarray(out), np.asarray(ref), rtol=5e-2, atol=5e-2)

    print("KERNEL_OK")
</pallas_src>

<mosaic_0001>
module attributes {stable_mosaic.version = 11 : i64} {
  func.func @_rel_attn_kernel(%arg0: i32, %arg1: memref<1x8x32xbf16, #tpu.memory_space<vmem>>, %arg2: memref<1x32x8xbf16, #tpu.memory_space<vmem>>, %arg3: memref<1x8x32xbf16, #tpu.memory_space<vmem>>, %arg4: memref<1x512x128xbf16, #tpu.memory_space<vmem>>, %arg5: memref<32x512xbf16, #tpu.memory_space<vmem>>, %arg6: memref<1x512xf32, #tpu.memory_space<vmem>>, %arg7: memref<512x32xbf16, #tpu.memory_space<vmem>>, %arg8: memref<512x1xf32, #tpu.memory_space<vmem>>, %arg9: memref<32x512xbf16, #tpu.memory_space<vmem>>, %arg10: memref<1x512xf32, #tpu.memory_space<vmem>>, %arg11: memref<512x32xbf16, #tpu.memory_space<vmem>>, %arg12: memref<1x32xf32, #tpu.memory_space<vmem>>, %arg13: memref<1x512xf32, #tpu.memory_space<vmem>>, %arg14: memref<1x512xf32, #tpu.memory_space<vmem>>, %arg15: memref<1x8x32xf32, #tpu.memory_space<vmem>>) attributes {dimension_semantics = [#tpu.dimension_semantics<parallel>], iteration_bounds = array<i64: 2>, scalar_prefetch = 0 : i64, scratch_operands = 0 : i64, tpu.core_type = #tpu.core_type<tc>, window_params = [{transform_indices = @transform_0, window_bounds = array<i64: 1, 8, 32>}, {transform_indices = @transform_1, window_bounds = array<i64: 1, 32, 8>}, {transform_indices = @transform_2, window_bounds = array<i64: 1, 8, 32>}, {pipeline_mode = #tpu.pipeline_mode<synchronous>, transform_indices = @transform_3, window_bounds = array<i64: 1, 512, 128>}, {pipeline_mode = #tpu.pipeline_mode<synchronous>, transform_indices = @transform_4, window_bounds = array<i64: 32, 512>}, {pipeline_mode = #tpu.pipeline_mode<synchronous>, transform_indices = @transform_5, window_bounds = array<i64: 1, 512>}, {pipeline_mode = #tpu.pipeline_mode<synchronous>, transform_indices = @transform_6, window_bounds = array<i64: 512, 32>}, {pipeline_mode = #tpu.pipeline_mode<synchronous>, transform_indices = @transform_7, window_bounds = array<i64: 512, 1>}, {pipeline_mode = #tpu.pipeline_mode<synchronous>, transform_indices = @transform_8, window_bounds = array<i64: 32, 512>}, {pipeline_mode = #tpu.pipeline_mode<synchronous>, transform_indices = @transform_9, window_bounds = array<i64: 1, 512>}, {pipeline_mode = #tpu.pipeline_mode<synchronous>, transform_indices = @transform_10, window_bounds = array<i64: 512, 32>}, {pipeline_mode = #tpu.pipeline_mode<synchronous>, transform_indices = @transform_11, window_bounds = array<i64: 1, 32>}, {pipeline_mode = #tpu.pipeline_mode<synchronous>, transform_indices = @transform_12, window_bounds = array<i64: 1, 512>}, {pipeline_mode = #tpu.pipeline_mode<synchronous>, transform_indices = @transform_13, window_bounds = array<i64: 1, 512>}, {transform_indices = @transform_14, window_bounds = array<i64: 1, 8, 32>}]} {
    %c0 = arith.constant 0 : index
    %c0_0 = arith.constant 0 : index
    %c0_1 = arith.constant 0 : index
    %0 = vector.load %arg1[%c0, %c0_0, %c0_1] : memref<1x8x32xbf16, #tpu.memory_space<vmem>>, vector<1x8x32xbf16>
    %1 = vector.shape_cast %0 : vector<1x8x32xbf16> to vector<8x32xbf16>
    %c0_2 = arith.constant 0 : index
    %c0_3 = arith.constant 0 : index
    %c0_4 = arith.constant 0 : index
    %2 = vector.load %arg2[%c0_2, %c0_3, %c0_4] : memref<1x32x8xbf16, #tpu.memory_space<vmem>>, vector<1x32x8xbf16>
    %3 = vector.shape_cast %2 : vector<1x32x8xbf16> to vector<32x8xbf16>
    %c0_5 = arith.constant 0 : index
    %c0_6 = arith.constant 0 : index
    %c0_7 = arith.constant 0 : index
    %4 = vector.load %arg3[%c0_5, %c0_6, %c0_7] : memref<1x8x32xbf16, #tpu.memory_space<vmem>>, vector<1x8x32xbf16>
    %5 = vector.shape_cast %4 : vector<1x8x32xbf16> to vector<8x32xbf16>
    %c0_8 = arith.constant 0 : index
    %c0_9 = arith.constant 0 : index
    %6 = vector.load %arg5[%c0_8, %c0_9] : memref<32x512xbf16, #tpu.memory_space<vmem>>, vector<32x512xbf16>
    %cst = arith.constant dense<0.000000e+00> : vector<8x512xf32>
    %7 = tpu.matmul %1, %6, %cst {dimension_numbers = #tpu.dot_dimension_numbers<[1], [0], [0], [1], [0, 0, 1, 1], [], []>} : vector<8x32xbf16>, vector<32x512xbf16>, vector<8x512xf32> -> vector<8x512xf32>
    %c0_10 = arith.constant 0 : index
    %c0_11 = arith.constant 0 : index
    %8 = vector.load %arg6[%c0_10, %c0_11] : memref<1x512xf32, #tpu.memory_space<vmem>>, vector<1x512xf32>
    %9 = vector.broadcast %8 : vector<1x512xf32> to vector<8x512xf32>
    %10 = arith.addf %7, %9 : vector<8x512xf32>
    %c0_12 = arith.constant 0 : index
    %c0_13 = arith.constant 0 : index
    %11 = vector.load %arg7[%c0_12, %c0_13] : memref<512x32xbf16, #tpu.memory_space<vmem>>, vector<512x32xbf16>
    %cst_14 = arith.constant dense<0.000000e+00> : vector<512x8xf32>
    %12 = tpu.matmul %11, %3, %cst_14 {dimension_numbers = #tpu.dot_dimension_numbers<[1], [0], [0], [1], [0, 0, 1, 1], [], []>} : vector<512x32xbf16>, vector<32x8xbf16>, vector<512x8xf32> -> vector<512x8xf32>
    %c0_15 = arith.constant 0 : index
    %c0_16 = arith.constant 0 : index
    %13 = vector.load %arg8[%c0_15, %c0_16] : memref<512x1xf32, #tpu.memory_space<vmem>>, vector<512x1xf32>
    %14 = vector.broadcast %13 : vector<512x1xf32> to vector<512x8xf32>
    %15 = arith.addf %12, %14 : vector<512x8xf32>
    %c0_17 = arith.constant 0 : index
    %c0_18 = arith.constant 0 : index
    %16 = vector.load %arg9[%c0_17, %c0_18] : memref<32x512xbf16, #tpu.memory_space<vmem>>, vector<32x512xbf16>
    %cst_19 = arith.constant dense<0.000000e+00> : vector<8x512xf32>
    %17 = tpu.matmul %5, %16, %cst_19 {dimension_numbers = #tpu.dot_dimension_numbers<[1], [0], [0], [1], [0, 0, 1, 1], [], []>} : vector<8x32xbf16>, vector<32x512xbf16>, vector<8x512xf32> -> vector<8x512xf32>
    %c0_20 = arith.constant 0 : index
    %c0_21 = arith.constant 0 : index
    %18 = vector.load %arg10[%c0_20, %c0_21] : memref<1x512xf32, #tpu.memory_space<vmem>>, vector<1x512xf32>
    %19 = vector.broadcast %18 : vector<1x512xf32> to vector<8x512xf32>
    %20 = arith.addf %17, %19 : vector<8x512xf32>
    %c0_22 = arith.constant 0 : index
    %c0_23 = arith.constant 0 : index
    %21 = vector.load %arg13[%c0_22, %c0_23] : memref<1x512xf32, #tpu.memory_space<vmem>>, vector<1x512xf32>
    %22 = vector.broadcast %21 : vector<1x512xf32> to vector<8x512xf32>
    %23 = arith.addf %10, %22 : vector<8x512xf32>
    %24 = arith.truncf %23 : vector<8x512xf32> to vector<8x512xbf16>
    %c0_24 = arith.constant 0 : index
    %c0_25 = arith.constant 0 : index
    %25 = vector.load %arg14[%c0_24, %c0_25] : memref<1x512xf32, #tpu.memory_space<vmem>>, vector<1x512xf32>
    %26 = vector.broadcast %25 : vector<1x512xf32> to vector<8x512xf32>
    %27 = arith.addf %10, %26 : vector<8x512xf32>
    %28 = arith.truncf %27 : vector<8x512xf32> to vector<8x512xbf16>
    %29 = arith.truncf %15 : vector<512x8xf32> to vector<512x8xbf16>
    %30 = arith.truncf %20 : vector<8x512xf32> to vector<8x512xbf16>
    %31 = tpu.iota {dimensions = array<i32: 0>} : vector<8x1xi32>
    %c7_i32 = arith.constant 7 : i32
    %32 = vector.broadcast %c7_i32 : i32 to vector<8x1xi32>
    %33 = arith.subi %32, %31 : vector<8x1xi32>
    %c0_i32 = arith.constant 0 : i32
    %34 = vector.broadcast %c0_i32 : i32 to vector<8x1xi32>
    %35 = arith.shrsi %33, %34 : vector<8x1xi32>
    %c1_i32 = arith.constant 1 : i32
    %36 = vector.broadcast %c1_i32 : i32 to vector<8x1xi32>
    %37 = arith.andi %35, %36 : vector<8x1xi32>
    %c1_i32_26 = arith.constant 1 : i32
    %38 = vector.broadcast %c1_i32_26 : i32 to vector<8x1xi32>
    %39 = arith.cmpi eq, %37, %38 : vector<8x1xi32>
    %40 = vector.shape_cast %39 : vector<8x1xi1> to vector<8x1xi1>
    %41 = vector.broadcast %40 : vector<8x1xi1> to vector<8x128xi1>
    %c1_i32_27 = arith.constant 1 : i32
    %42 = vector.broadcast %c1_i32_27 : i32 to vector<8x1xi32>
    %43 = arith.shrsi %33, %42 : vector<8x1xi32>
    %c1_i32_28 = arith.constant 1 : i32
    %44 = vector.broadcast %c1_i32_28 : i32 to vector<8x1xi32>
    %45 = arith.andi %43, %44 : vector<8x1xi32>
    %c1_i32_29 = arith.constant 1 : i32
    %46 = vector.broadcast %c1_i32_29 : i32 to vector<8x1xi32>
    %47 = arith.cmpi eq, %45, %46 : vector<8x1xi32>
    %48 = vector.shape_cast %47 : vector<8x1xi1> to vector<8x1xi1>
    %49 = vector.broadcast %48 : vector<8x1xi1> to vector<8x128xi1>
    %c2_i32 = arith.constant 2 : i32
    %50 = vector.broadcast %c2_i32 : i32 to vector<8x1xi32>
    %51 = arith.shrsi %33, %50 : vector<8x1xi32>
    %c1_i32_30 = arith.constant 1 : i32
    %52 = vector.broadcast %c1_i32_30 : i32 to vector<8x1xi32>
    %53 = arith.andi %51, %52 : vector<8x1xi32>
    %c1_i32_31 = arith.constant 1 : i32
    %54 = vector.broadcast %c1_i32_31 : i32 to vector<8x1xi32>
    %55 = arith.cmpi eq, %53, %54 : vector<8x1xi32>
    %56 = vector.shape_cast %55 : vector<8x1xi1> to vector<8x1xi1>
    %57 = vector.broadcast %56 : vector<8x1xi1> to vector<8x128xi1>
    %c0_32 = arith.constant 0 : index
    %c0_33 = arith.constant 0 : index
    %58 = vector.load %arg12[%c0_32, %c0_33] : memref<1x32xf32, #tpu.memory_space<vmem>>, vector<1x32xf32>
    %59 = vector.extract_strided_slice %24 {offsets = [0, 0], sizes = [8, 128], strides = [1, 1]} : vector<8x512xbf16> to vector<8x128xbf16>
    %60 = vector.extract_strided_slice %29 {offsets = [0, 0], sizes = [128, 8], strides = [1, 1]} : vector<512x8xbf16> to vector<128x8xbf16>
    %cst_34 = arith.constant dense<0.000000e+00> : vector<8x8xf32>
    %61 = tpu.matmul %59, %60, %cst_34 {dimension_numbers = #tpu.dot_dimension_numbers<[1], [0], [0], [1], [0, 0, 1, 1], [], []>} : vector<8x128xbf16>, vector<128x8xbf16>, vector<8x8xf32> -> vector<8x8xf32>
    %c0_35 = arith.constant 0 : index
    %c0_36 = arith.constant 0 : index
    %c0_37 = arith.constant 0 : index
    %62 = vector.load %arg4[%c0_35, %c0_36, %c0_37] : memref<1x512x128xbf16, #tpu.memory_space<vmem>>, vector<1x128x128xbf16>
    %63 = vector.shape_cast %62 : vector<1x128x128xbf16> to vector<128x128xbf16>
    %64 = vector.extract_strided_slice %28 {offsets = [0, 0], sizes = [8, 128], strides = [1, 1]} : vector<8x512xbf16> to vector<8x128xbf16>
    %cst_38 = arith.constant dense<0.000000e+00> : vector<8x128xf32>
    %65 = tpu.matmul %64, %63, %cst_38 {dimension_numbers = #tpu.dot_dimension_numbers<[1], [0], [0], [1], [0, 0, 1, 1], [], []>} : vector<8x128xbf16>, vector<128x128xbf16>, vector<8x128xf32> -> vector<8x128xf32>
    %c127_i32 = arith.constant 127 : i32
    %66 = tpu.dynamic_rotate %65 by %c127_i32 dim 1 : vector<8x128xf32>, i32 -> vector<8x128xf32>
    %67 = arith.select %41, %66, %65 : vector<8x128xi1>, vector<8x128xf32>
    %c126_i32 = arith.constant 126 : i32
    %68 = tpu.dynamic_rotate %67 by %c126_i32 dim 1 : vector<8x128xf32>, i32 -> vector<8x128xf32>
    %69 = arith.select %49, %68, %67 : vector<8x128xi1>, vector<8x128xf32>
    %c124_i32 = arith.constant 124 : i32
    %70 = tpu.dynamic_rotate %69 by %c124_i32 dim 1 : vector<8x128xf32>, i32 -> vector<8x128xf32>
    %71 = arith.select %57, %70, %69 : vector<8x128xi1>, vector<8x128xf32>
    %72 = vector.extract_strided_slice %71 {offsets = [0, 0], sizes = [8, 8], strides = [1, 1]} : vector<8x128xf32> to vector<8x8xf32>
    %73 = arith.addf %61, %72 : vector<8x8xf32>
    %cst_39 = arith.constant dense<0xFF800000> : vector<8xf32>
    %74 = vector.multi_reduction <maximumf>, %73, %cst_39 [1] : vector<8x8xf32> to vector<8xf32>
    %75 = vector.shape_cast %74 : vector<8xf32> to vector<8x1xf32>
    %76 = vector.broadcast %75 : vector<8x1xf32> to vector<8x8xf32>
    %77 = arith.subf %73, %76 : vector<8x8xf32>
    %78 = math.exp %77 : vector<8x8xf32>
    %cst_40 = arith.constant dense<0.000000e+00> : vector<8xf32>
    %79 = vector.multi_reduction <add>, %78, %cst_40 [1] : vector<8x8xf32> to vector<8xf32>
    %80 = vector.shape_cast %79 : vector<8xf32> to vector<8x1xf32>
    %81 = tpu.reciprocal %80 {approx = true} : vector<8x1xf32> -> vector<8x1xf32>
    %82 = vector.broadcast %81 : vector<8x1xf32> to vector<8x8xf32>
    %83 = arith.mulf %78, %82 : vector<8x8xf32>
    %84 = arith.truncf %83 : vector<8x8xf32> to vector<8x8xbf16>
    %85 = vector.extract_strided_slice %30 {offsets = [0, 0], sizes = [8, 128], strides = [1, 1]} : vector<8x512xbf16> to vector<8x128xbf16>
    %cst_41 = arith.constant dense<0.000000e+00> : vector<8x128xf32>
    %86 = tpu.matmul %84, %85, %cst_41 {dimension_numbers = #tpu.dot_dimension_numbers<[1], [0], [0], [1], [0, 0, 1, 1], [], []>} : vector<8x8xbf16>, vector<8x128xbf16>, vector<8x128xf32> -> vector<8x128xf32>
    %87 = arith.truncf %86 : vector<8x128xf32> to vector<8x128xbf16>
    %c0_42 = arith.constant 0 : index
    %c0_43 = arith.constant 0 : index
    %88 = vector.load %arg11[%c0_42, %c0_43] : memref<512x32xbf16, #tpu.memory_space<vmem>>, vector<128x32xbf16>
    %cst_44 = arith.constant dense<0.000000e+00> : vector<8x32xf32>
    %89 = tpu.matmul %87, %88, %cst_44 {dimension_numbers = #tpu.dot_dimension_numbers<[1], [0], [0], [1], [0, 0, 1, 1], [], []>} : vector<8x128xbf16>, vector<128x32xbf16>, vector<8x32xf32> -> vector<8x32xf32>
    %90 = vector.broadcast %58 : vector<1x32xf32> to vector<8x32xf32>
    %91 = arith.addf %90, %89 : vector<8x32xf32>
    %92 = vector.extract_strided_slice %24 {offsets = [0, 128], sizes = [8, 128], strides = [1, 1]} : vector<8x512xbf16> to vector<8x128xbf16>
    %93 = vector.extract_strided_slice %29 {offsets = [128, 0], sizes = [128, 8], strides = [1, 1]} : vector<512x8xbf16> to vector<128x8xbf16>
    %cst_45 = arith.constant dense<0.000000e+00> : vector<8x8xf32>
    %94 = tpu.matmul %92, %93, %cst_45 {dimension_numbers = #tpu.dot_dimension_numbers<[1], [0], [0], [1], [0, 0, 1, 1], [], []>} : vector<8x128xbf16>, vector<128x8xbf16>, vector<8x8xf32> -> vector<8x8xf32>
    %c0_46 = arith.constant 0 : index
    %c128 = arith.constant 128 : index
    %c0_47 = arith.constant 0 : index
    %95 = vector.load %arg4[%c0_46, %c128, %c0_47] : memref<1x512x128xbf16, #tpu.memory_space<vmem>>, vector<1x128x128xbf16>
    %96 = vector.shape_cast %95 : vector<1x128x128xbf16> to vector<128x128xbf16>
    %97 = vector.extract_strided_slice %28 {offsets = [0, 128], sizes = [8, 128], strides = [1, 1]} : vector<8x512xbf16> to vector<8x128xbf16>
    %cst_48 = arith.constant dense<0.000000e+00> : vector<8x128xf32>
    %98 = tpu.matmul %97, %96, %cst_48 {dimension_numbers = #tpu.dot_dimension_numbers<[1], [0], [0], [1], [0, 0, 1, 1], [], []>} : vector<8x128xbf16>, vector<128x128xbf16>, vector<8x128xf32> -> vector<8x128xf32>
    %c127_i32_49 = arith.constant 127 : i32
    %99 = tpu.dynamic_rotate %98 by %c127_i32_49 dim 1 : vector<8x128xf32>, i32 -> vector<8x128xf32>
    %100 = arith.select %41, %99, %98 : vector<8x128xi1>, vector<8x128xf32>
    %c126_i32_50 = arith.constant 126 : i32
    %101 = tpu.dynamic_rotate %100 by %c126_i32_50 dim 1 : vector<8x128xf32>, i32 -> vector<8x128xf32>
    %102 = arith.select %49, %101, %100 : vector<8x128xi1>, vector<8x128xf32>
    %c124_i32_51 = arith.constant 124 : i32
    %103 = tpu.dynamic_rotate %102 by %c124_i32_51 dim 1 : vector<8x128xf32>, i32 -> vector<8x128xf32>
    %104 = arith.select %57, %103, %102 : vector<8x128xi1>, vector<8x128xf32>
    %105 = vector.extract_strided_slice %104 {offsets = [0, 0], sizes = [8, 8], strides = [1, 1]} : vector<8x128xf32> to vector<8x8xf32>
    %106 = arith.addf %94, %105 : vector<8x8xf32>
    %cst_52 = arith.constant dense<0xFF800000> : vector<8xf32>
    %107 = vector.multi_reduction <maximumf>, %106, %cst_52 [1] : vector<8x8xf32> to vector<8xf32>
    %108 = vector.shape_cast %107 : vector<8xf32> to vector<8x1xf32>
    %109 = vector.broadcast %108 : vector<8x1xf32> to vector<8x8xf32>
    %110 = arith.subf %106, %109 : vector<8x8xf32>
    %111 = math.exp %110 : vector<8x8xf32>
    %cst_53 = arith.constant dense<0.000000e+00> : vector<8xf32>
    %112 = vector.multi_reduction <add>, %111, %cst_53 [1] : vector<8x8xf32> to vector<8xf32>
    %113 = vector.shape_cast %112 : vector<8xf32> to vector<8x1xf32>
    %114 = tpu.reciprocal %113 {approx = true} : vector<8x1xf32> -> vector<8x1xf32>
    %115 = vector.broadcast %114 : vector<8x1xf32> to vector<8x8xf32>
    %116 = arith.mulf %111, %115 : vector<8x8xf32>
    %117 = arith.truncf %116 : vector<8x8xf32> to vector<8x8xbf16>
    %118 = vector.extract_strided_slice %30 {offsets = [0, 128], sizes = [8, 128], strides = [1, 1]} : vector<8x512xbf16> to vector<8x128xbf16>
    %cst_54 = arith.constant dense<0.000000e+00> : vector<8x128xf32>
    %119 = tpu.matmul %117, %118, %cst_54 {dimension_numbers = #tpu.dot_dimension_numbers<[1], [0], [0], [1], [0, 0, 1, 1], [], []>} : vector<8x8xbf16>, vector<8x128xbf16>, vector<8x128xf32> -> vector<8x128xf32>
    %120 = arith.truncf %119 : vector<8x128xf32> to vector<8x128xbf16>
    %c128_55 = arith.constant 128 : index
    %c0_56 = arith.constant 0 : index
    %121 = vector.load %arg11[%c128_55, %c0_56] : memref<512x32xbf16, #tpu.memory_space<vmem>>, vector<128x32xbf16>
    %cst_57 = arith.constant dense<0.000000e+00> : vector<8x32xf32>
    %122 = tpu.matmul %120, %121, %cst_57 {dimension_numbers = #tpu.dot_dimension_numbers<[1], [0], [0], [1], [0, 0, 1, 1], [], []>} : vector<8x128xbf16>, vector<128x32xbf16>, vector<8x32xf32> -> vector<8x32xf32>
    %123 = arith.addf %91, %122 : vector<8x32xf32>
    %124 = vector.extract_strided_slice %24 {offsets = [0, 256], sizes = [8, 128], strides = [1, 1]} : vector<8x512xbf16> to vector<8x128xbf16>
    %125 = vector.extract_strided_slice %29 {offsets = [256, 0], sizes = [128, 8], strides = [1, 1]} : vector<512x8xbf16> to vector<128x8xbf16>
    %cst_58 = arith.constant dense<0.000000e+00> : vector<8x8xf32>
    %126 = tpu.matmul %124, %125, %cst_58 {dimension_numbers = #tpu.dot_dimension_numbers<[1], [0], [0], [1], [0, 0, 1, 1], [], []>} : vector<8x128xbf16>, vector<128x8xbf16>, vector<8x8xf32> -> vector<8x8xf32>
    %c0_59 = arith.constant 0 : index
    %c256 = arith.constant 256 : index
    %c0_60 = arith.constant 0 : index
    %127 = vector.load %arg4[%c0_59, %c256, %c0_60] : memref<1x512x128xbf16, #tpu.memory_space<vmem>>, vector<1x128x128xbf16>
    %128 = vector.shape_cast %127 : vector<1x128x128xbf16> to vector<128x128xbf16>
    %129 = vector.extract_strided_slice %28 {offsets = [0, 256], sizes = [8, 128], strides = [1, 1]} : vector<8x512xbf16> to vector<8x128xbf16>
    %cst_61 = arith.constant dense<0.000000e+00> : vector<8x128xf32>
    %130 = tpu.matmul %129, %128, %cst_61 {dimension_numbers = #tpu.dot_dimension_numbers<[1], [0], [0], [1], [0, 0, 1, 1], [], []>} : vector<8x128xbf16>, vector<128x128xbf16>, vector<8x128xf32> -> vector<8x128xf32>
    %c127_i32_62 = arith.constant 127 : i32
    %131 = tpu.dynamic_rotate %130 by %c127_i32_62 dim 1 : vector<8x128xf32>, i32 -> vector<8x128xf32>
    %132 = arith.select %41, %131, %130 : vector<8x128xi1>, vector<8x128xf32>
    %c126_i32_63 = arith.constant 126 : i32
    %133 = tpu.dynamic_rotate %132 by %c126_i32_63 dim 1 : vector<8x128xf32>, i32 -> vector<8x128xf32>
    %134 = arith.select %49, %133, %132 : vector<8x128xi1>, vector<8x128xf32>
    %c124_i32_64 = arith.constant 124 : i32
    %135 = tpu.dynamic_rotate %134 by %c124_i32_64 dim 1 : vector<8x128xf32>, i32 -> vector<8x128xf32>
    %136 = arith.select %57, %135, %134 : vector<8x128xi1>, vector<8x128xf32>
    %137 = vector.extract_strided_slice %136 {offsets = [0, 0], sizes = [8, 8], strides = [1, 1]} : vector<8x128xf32> to vector<8x8xf32>
    %138 = arith.addf %126, %137 : vector<8x8xf32>
    %cst_65 = arith.constant dense<0xFF800000> : vector<8xf32>
    %139 = vector.multi_reduction <maximumf>, %138, %cst_65 [1] : vector<8x8xf32> to vector<8xf32>
    %140 = vector.shape_cast %139 : vector<8xf32> to vector<8x1xf32>
    %141 = vector.broadcast %140 : vector<8x1xf32> to vector<8x8xf32>
    %142 = arith.subf %138, %141 : vector<8x8xf32>
    %143 = math.exp %142 : vector<8x8xf32>
    %cst_66 = arith.constant dense<0.000000e+00> : vector<8xf32>
    %144 = vector.multi_reduction <add>, %143, %cst_66 [1] : vector<8x8xf32> to vector<8xf32>
    %145 = vector.shape_cast %144 : vector<8xf32> to vector<8x1xf32>
    %146 = tpu.reciprocal %145 {approx = true} : vector<8x1xf32> -> vector<8x1xf32>
    %147 = vector.broadcast %146 : vector<8x1xf32> to vector<8x8xf32>
    %148 = arith.mulf %143, %147 : vector<8x8xf32>
    %149 = arith.truncf %148 : vector<8x8xf32> to vector<8x8xbf16>
    %150 = vector.extract_strided_slice %30 {offsets = [0, 256], sizes = [8, 128], strides = [1, 1]} : vector<8x512xbf16> to vector<8x128xbf16>
    %cst_67 = arith.constant dense<0.000000e+00> : vector<8x128xf32>
    %151 = tpu.matmul %149, %150, %cst_67 {dimension_numbers = #tpu.dot_dimension_numbers<[1], [0], [0], [1], [0, 0, 1, 1], [], []>} : vector<8x8xbf16>, vector<8x128xbf16>, vector<8x128xf32> -> vector<8x128xf32>
    %152 = arith.truncf %151 : vector<8x128xf32> to vector<8x128xbf16>
    %c256_68 = arith.constant 256 : index
    %c0_69 = arith.constant 0 : index
    %153 = vector.load %arg11[%c256_68, %c0_69] : memref<512x32xbf16, #tpu.memory_space<vmem>>, vector<128x32xbf16>
    %cst_70 = arith.constant dense<0.000000e+00> : vector<8x32xf32>
    %154 = tpu.matmul %152, %153, %cst_70 {dimension_numbers = #tpu.dot_dimension_numbers<[1], [0], [0], [1], [0, 0, 1, 1], [], []>} : vector<8x128xbf16>, vector<128x32xbf16>, vector<8x32xf32> -> vector<8x32xf32>
    %155 = arith.addf %123, %154 : vector<8x32xf32>
    %156 = vector.extract_strided_slice %24 {offsets = [0, 384], sizes = [8, 128], strides = [1, 1]} : vector<8x512xbf16> to vector<8x128xbf16>
    %157 = vector.extract_strided_slice %29 {offsets = [384, 0], sizes = [128, 8], strides = [1, 1]} : vector<512x8xbf16> to vector<128x8xbf16>
    %cst_71 = arith.constant dense<0.000000e+00> : vector<8x8xf32>
    %158 = tpu.matmul %156, %157, %cst_71 {dimension_numbers = #tpu.dot_dimension_numbers<[1], [0], [0], [1], [0, 0, 1, 1], [], []>} : vector<8x128xbf16>, vector<128x8xbf16>, vector<8x8xf32> -> vector<8x8xf32>
    %c0_72 = arith.constant 0 : index
    %c384 = arith.constant 384 : index
    %c0_73 = arith.constant 0 : index
    %159 = vector.load %arg4[%c0_72, %c384, %c0_73] : memref<1x512x128xbf16, #tpu.memory_space<vmem>>, vector<1x128x128xbf16>
    %160 = vector.shape_cast %159 : vector<1x128x128xbf16> to vector<128x128xbf16>
    %161 = vector.extract_strided_slice %28 {offsets = [0, 384], sizes = [8, 128], strides = [1, 1]} : vector<8x512xbf16> to vector<8x128xbf16>
    %cst_74 = arith.constant dense<0.000000e+00> : vector<8x128xf32>
    %162 = tpu.matmul %161, %160, %cst_74 {dimension_numbers = #tpu.dot_dimension_numbers<[1], [0], [0], [1], [0, 0, 1, 1], [], []>} : vector<8x128xbf16>, vector<128x128xbf16>, vector<8x128xf32> -> vector<8x128xf32>
    %c127_i32_75 = arith.constant 127 : i32
    %163 = tpu.dynamic_rotate %162 by %c127_i32_75 dim 1 : vector<8x128xf32>, i32 -> vector<8x128xf32>
    %164 = arith.select %41, %163, %162 : vector<8x128xi1>, vector<8x128xf32>
    %c126_i32_76 = arith.constant 126 : i32
    %165 = tpu.dynamic_rotate %164 by %c126_i32_76 dim 1 : vector<8x128xf32>, i32 -> vector<8x128xf32>
    %166 = arith.select %49, %165, %164 : vector<8x128xi1>, vector<8x128xf32>
    %c124_i32_77 = arith.constant 124 : i32
    %167 = tpu.dynamic_rotate %166 by %c124_i32_77 dim 1 : vector<8x128xf32>, i32 -> vector<8x128xf32>
    %168 = arith.select %57, %167, %166 : vector<8x128xi1>, vector<8x128xf32>
    %169 = vector.extract_strided_slice %168 {offsets = [0, 0], sizes = [8, 8], strides = [1, 1]} : vector<8x128xf32> to vector<8x8xf32>
    %170 = arith.addf %158, %169 : vector<8x8xf32>
    %cst_78 = arith.constant dense<0xFF800000> : vector<8xf32>
    %171 = vector.multi_reduction <maximumf>, %170, %cst_78 [1] : vector<8x8xf32> to vector<8xf32>
    %172 = vector.shape_cast %171 : vector<8xf32> to vector<8x1xf32>
    %173 = vector.broadcast %172 : vector<8x1xf32> to vector<8x8xf32>
    %174 = arith.subf %170, %173 : vector<8x8xf32>
    %175 = math.exp %174 : vector<8x8xf32>
    %cst_79 = arith.constant dense<0.000000e+00> : vector<8xf32>
    %176 = vector.multi_reduction <add>, %175, %cst_79 [1] : vector<8x8xf32> to vector<8xf32>
    %177 = vector.shape_cast %176 : vector<8xf32> to vector<8x1xf32>
    %178 = tpu.reciprocal %177 {approx = true} : vector<8x1xf32> -> vector<8x1xf32>
    %179 = vector.broadcast %178 : vector<8x1xf32> to vector<8x8xf32>
    %180 = arith.mulf %175, %179 : vector<8x8xf32>
    %181 = arith.truncf %180 : vector<8x8xf32> to vector<8x8xbf16>
    %182 = vector.extract_strided_slice %30 {offsets = [0, 384], sizes = [8, 128], strides = [1, 1]} : vector<8x512xbf16> to vector<8x128xbf16>
    %cst_80 = arith.constant dense<0.000000e+00> : vector<8x128xf32>
    %183 = tpu.matmul %181, %182, %cst_80 {dimension_numbers = #tpu.dot_dimension_numbers<[1], [0], [0], [1], [0, 0, 1, 1], [], []>} : vector<8x8xbf16>, vector<8x128xbf16>, vector<8x128xf32> -> vector<8x128xf32>
    %184 = arith.truncf %183 : vector<8x128xf32> to vector<8x128xbf16>
    %c384_81 = arith.constant 384 : index
    %c0_82 = arith.constant 0 : index
    %185 = vector.load %arg11[%c384_81, %c0_82] : memref<512x32xbf16, #tpu.memory_space<vmem>>, vector<128x32xbf16>
    %cst_83 = arith.constant dense<0.000000e+00> : vector<8x32xf32>
    %186 = tpu.matmul %184, %185, %cst_83 {dimension_numbers = #tpu.dot_dimension_numbers<[1], [0], [0], [1], [0, 0, 1, 1], [], []>} : vector<8x128xbf16>, vector<128x32xbf16>, vector<8x32xf32> -> vector<8x32xf32>
    %187 = arith.addf %155, %186 : vector<8x32xf32>
    %c0_84 = arith.constant 0 : index
    %c0_85 = arith.constant 0 : index
    %c0_86 = arith.constant 0 : index
    %188 = vector.load %arg15[%c0_84, %c0_85, %c0_86] : memref<1x8x32xf32, #tpu.memory_space<vmem>>, vector<1x8x32xf32>
    %189 = vector.shape_cast %188 : vector<1x8x32xf32> to vector<8x32xf32>
    %190 = vector.shape_cast %187 : vector<8x32xf32> to vector<1x8x32xf32>
    tpu.vector_store %arg15[%c0_84, %c0_85, %c0_86], %190 {strides = array<i32>} : memref<1x8x32xf32, #tpu.memory_space<vmem>>, vector<1x8x32xf32>,
    return
  }
  func.func @transform_0(%arg0: i32) -> (i32, i32, i32) {
    %c0_i32 = arith.constant 0 : i32
    %c0_i32_0 = arith.constant 0 : i32
    %c0_i32_1 = arith.constant 0 : i32
    return %arg0, %c0_i32, %c0_i32_0 : i32, i32, i32
  }
  func.func @transform_1(%arg0: i32) -> (i32, i32, i32) {
    %c0_i32 = arith.constant 0 : i32
    %c0_i32_0 = arith.constant 0 : i32
    %c0_i32_1 = arith.constant 0 : i32
    return %arg0, %c0_i32, %c0_i32_0 : i32, i32, i32
  }
  func.func @transform_2(%arg0: i32) -> (i32, i32, i32) {
    %c0_i32 = arith.constant 0 : i32
    %c0_i32_0 = arith.constant 0 : i32
    %c0_i32_1 = arith.constant 0 : i32
    return %arg0, %c0_i32, %c0_i32_0 : i32, i32, i32
  }
  func.func @transform_3(%arg0: i32) -> (i32, i32, i32) {
    %c0_i32 = arith.constant 0 : i32
    %c0_i32_0 = arith.constant 0 : i32
    %c0_i32_1 = arith.constant 0 : i32
    %c0_i32_2 = arith.constant 0 : i32
    return %c0_i32, %c0_i32_0, %c0_i32_1 : i32, i32, i32
  }
  func.func @transform_4(%arg0: i32) -> (i32, i32) {
    %c0_i32 = arith.constant 0 : i32
    %c0_i32_0 = arith.constant 0 : i32
    %c0_i32_1 = arith.constant 0 : i32
    return %c0_i32, %c0_i32_0 : i32, i32
  }
  func.func @transform_5(%arg0: i32) -> (i32, i32) {
    %c0_i32 = arith.constant 0 : i32
    %c0_i32_0 = arith.constant 0 : i32
    %c0_i32_1 = arith.constant 0 : i32
    return %c0_i32, %c0_i32_0 : i32, i32
  }
  func.func @transform_6(%arg0: i32) -> (i32, i32) {
    %c0_i32 = arith.constant 0 : i32
    %c0_i32_0 = arith.constant 0 : i32
    %c0_i32_1 = arith.constant 0 : i32
    return %c0_i32, %c0_i32_0 : i32, i32
  }
  func.func @transform_7(%arg0: i32) -> (i32, i32) {
    %c0_i32 = arith.constant 0 : i32
    %c0_i32_0 = arith.constant 0 : i32
    %c0_i32_1 = arith.constant 0 : i32
    return %c0_i32, %c0_i32_0 : i32, i32
  }
  func.func @transform_8(%arg0: i32) -> (i32, i32) {
    %c0_i32 = arith.constant 0 : i32
    %c0_i32_0 = arith.constant 0 : i32
    %c0_i32_1 = arith.constant 0 : i32
    return %c0_i32, %c0_i32_0 : i32, i32
  }
  func.func @transform_9(%arg0: i32) -> (i32, i32) {
    %c0_i32 = arith.constant 0 : i32
    %c0_i32_0 = arith.constant 0 : i32
    %c0_i32_1 = arith.constant 0 : i32
    return %c0_i32, %c0_i32_0 : i32, i32
  }
  func.func @transform_10(%arg0: i32) -> (i32, i32) {
    %c0_i32 = arith.constant 0 : i32
    %c0_i32_0 = arith.constant 0 : i32
    %c0_i32_1 = arith.constant 0 : i32
    return %c0_i32, %c0_i32_0 : i32, i32
  }
  func.func @transform_11(%arg0: i32) -> (i32, i32) {
    %c0_i32 = arith.constant 0 : i32
    %c0_i32_0 = arith.constant 0 : i32
    %c0_i32_1 = arith.constant 0 : i32
    return %c0_i32, %c0_i32_0 : i32, i32
  }
  func.func @transform_12(%arg0: i32) -> (i32, i32) {
    %c0_i32 = arith.constant 0 : i32
    %c0_i32_0 = arith.constant 0 : i32
    %c0_i32_1 = arith.constant 0 : i32
    return %c0_i32, %c0_i32_0 : i32, i32
  }
  func.func @transform_13(%arg0: i32) -> (i32, i32) {
    %c0_i32 = arith.constant 0 : i32
    %c0_i32_0 = arith.constant 0 : i32
    %c0_i32_1 = arith.constant 0 : i32
    return %c0_i32, %c0_i32_0 : i32, i32
  }
  func.func @transform_14(%arg0: i32) -> (i32, i32, i32) {
    %c0_i32 = arith.constant 0 : i32
    %c0_i32_0 = arith.constant 0 : i32
    %c0_i32_1 = arith.constant 0 : i32
    return %arg0, %c0_i32, %c0_i32_0 : i32, i32, i32
  }
}

</mosaic_0001>

<llo_original>
// kernel: tpu_custom_call.1
$region0: #{tpu_custom_call.1}
  #allocation0 [shape = 'u32[]', space=smem, size = 0x4, offset = 0x4, fixed_abs, tag = 'smem constant byte address 0x4 - core index']
  #allocation1 [shape = 'u32[144,128]{1,0:T(1,128)}', space=vmem, size = 0x12000, scoped, tag = 'internal scratch']
  %s0 = inlined_call_operand.vmem [shape: bf16[2,8,32], index: 0, kind: input, shape index: {}]
  %s1 = inlined_call_operand.vmem [shape: bf16[2,32,8], index: 1, kind: input, shape index: {}]
  %s2 = inlined_call_operand.vmem [shape: bf16[2,8,32], index: 2, kind: input, shape index: {}]
  %s3 = inlined_call_operand.vmem [shape: bf16[1,512,128], index: 3, kind: input, shape index: {}]
  %s4 = inlined_call_operand.vmem [shape: bf16[32,512], index: 4, kind: input, shape index: {}]
  %s5 = inlined_call_operand.vmem [shape: f32[1,512], index: 5, kind: input, shape index: {}]
  %s6 = inlined_call_operand.vmem [shape: bf16[512,32], index: 6, kind: input, shape index: {}]
  %s7 = inlined_call_operand.vmem [shape: f32[512,1], index: 7, kind: input, shape index: {}]
  %s8 = inlined_call_operand.vmem [shape: bf16[32,512], index: 8, kind: input, shape index: {}]
  %s9 = inlined_call_operand.vmem [shape: f32[1,512], index: 9, kind: input, shape index: {}]
  %s10 = inlined_call_operand.vmem [shape: bf16[512,32], index: 10, kind: input, shape index: {}]
  %s11 = inlined_call_operand.vmem [shape: f32[1,32], index: 11, kind: input, shape index: {}]
  %s12 = inlined_call_operand.vmem [shape: f32[1,512], index: 12, kind: input, shape index: {}]
  %s13 = inlined_call_operand.vmem [shape: f32[1,512], index: 13, kind: input, shape index: {}]
  %s14 = inlined_call_operand.hbm [shape: f32[2,8,32], index: 14, kind: output, shape index: {}]
  %s15 = sld [smem:[#allocation0]]
  $region89: #{tpu_custom_call.1} parent=0
    _
  %s17 = ssub.s32 1, %s15
  %s18 = scalar_select 0, %s17, %s15
  $region1: #{tpu_custom_call.1} parent=0
    #allocation2 [shape = 'u8[8192]{0}', space=vmem, size = 0x2000, scoped, tag = 'output window, operand 0']
    #allocation3 [shape = 's32[2]{0}', space=sflag, size = 0x8, scoped, tag = 'scoped memory for tpu_custom_call.1']
    %19 = vsyncpa [#allocation3], 0
    %s20 = scalar_lea.sflag [#allocation3], 1
    %21 = vsyncpa %s20, 0
    loop: start=0, step=1, limit=4
    $region2: #{tpu_custom_call.1} parent=1 // loop_pre_header
      _
    $region3: #{tpu_custom_call.1} parent=1 // loop_header
      %s23 = sphi 0, %s27
      %p24 = scmp.ge.s32.totalorder %s23, 4
      %s33 = sphi 0, %s35
      %s36 = sphi 0, %s33
      %s37 = sphi 0, %s36
      %s53 = sphi 0, %s37
      %s59 = sphi 0, %s61
      %s62 = sphi 0, %s59
      %s63 = sphi 0, %s62
      %s79 = sphi 0, %s63
      %s85 = sphi 0, %s87
      %s88 = sphi 0, %s85
      %s89 = sphi 0, %s88
      %s105 = sphi 0, %s89
      %s109 = sphi 0, %s109
      %s111 = sphi 0, %s109
      %s112 = sphi 0, %s111
      %s126 = sphi 0, %s112
      %s130 = sphi 0, %s130
      %s132 = sphi 0, %s130
      %s133 = sphi 0, %s132
      %s147 = sphi 0, %s133
      %s151 = sphi 0, %s151
      %s153 = sphi 0, %s151
      %s154 = sphi 0, %s153
      %s168 = sphi 0, %s154
      %s172 = sphi 0, %s172
      %s174 = sphi 0, %s172
      %s175 = sphi 0, %s174
      %s189 = sphi 0, %s175
      %s193 = sphi 0, %s193
      %s195 = sphi 0, %s193
      %s196 = sphi 0, %s195
      %s210 = sphi 0, %s196
      %s214 = sphi 0, %s214
      %s216 = sphi 0, %s214
      %s217 = sphi 0, %s216
      %s231 = sphi 0, %s217
      %s235 = sphi 0, %s235
      %s237 = sphi 0, %s235
      %s238 = sphi 0, %s237
      %s252 = sphi 0, %s238
      %s256 = sphi 0, %s256
      %s258 = sphi 0, %s256
      %s259 = sphi 0, %s258
      %s273 = sphi 0, %s259
      %s277 = sphi 0, %s277
      %s279 = sphi 0, %s277
      %s280 = sphi 0, %s279
      %s294 = sphi 0, %s280
      %s298 = sphi 0, %s298
      %s300 = sphi 0, %s298
      %s301 = sphi 0, %s300
      %s315 = sphi 0, %s301
      %s319 = sphi 0, %s319
      %s321 = sphi 0, %s319
      %s322 = sphi 0, %s321
      %s336 = sphi 0, %s322
      %s342 = sphi 0, %s344
      %s345 = sphi 0, %s342
      %s346 = sphi 0, %s345
      %s362 = sphi 0, %s346
    $region4: #{tpu_custom_call.1} parent=1 // loop_header_branch
      %26 = sbr.rel (%p24) target = $region8
    $region5: #{tpu_custom_call.1} parent=1 // loop_body
      %s28 = ssub.s32 %s23, 1
      %s29 = ssub.s32 %s23, 2
      %s30 = sadd.s32 %s23, 1
      %s31 = ssub.s32 %s23, %s30
      %p32 = scmp.eq.s32.totalorder %s31, 0
      %s34 = sadd.s32 %s33, 1
      %s35 = scalar_select %p32, %s33, %s34
      %p38 = pneg %p32
      %p39 = scmp.eq.s32.totalorder %s23, 1
      %p40 = por %p38, %p39
      %p41 = scmp.ne.s32.totalorder %s33, %s36
      %p42 = scmp.eq.s32.totalorder %s23, 0
      %p43 = por %p41, %p42
      %p44 = scmp.ne.s32.totalorder %s33, %s36
      %p45 = scmp.eq.s32.totalorder %s28, 1
      %p46 = por %p44, %p45
      %p47 = scmp.ne.s32.totalorder %s36, %s37
      %p48 = scmp.eq.s32.totalorder %s28, 0
      %p49 = por %p47, %p48
      %p50 = scmp.ne.s32.totalorder %s36, %s37
      %p51 = scmp.eq.s32.totalorder %s29, 1
      %p52 = por %p50, %p51
      %p54 = scmp.ne.s32.totalorder %s37, %s53
      %p55 = scmp.eq.s32.totalorder %s29, 0
      %p56 = por %p54, %p55
      %s57 = ssub.s32 %s23, %s30
      %p58 = scmp.eq.s32.totalorder %s57, 0
      %s60 = sadd.s32 %s59, 1
      %s61 = scalar_select %p58, %s59, %s60
      %p64 = pneg %p58
      %p65 = scmp.eq.s32.totalorder %s23, 1
      %p66 = por %p64, %p65
      %p67 = scmp.ne.s32.totalorder %s59, %s62
      %p68 = scmp.eq.s32.totalorder %s23, 0
      %p69 = por %p67, %p68
      %p70 = scmp.ne.s32.totalorder %s59, %s62
      %p71 = scmp.eq.s32.totalorder %s28, 1
      %p72 = por %p70, %p71
      %p73 = scmp.ne.s32.totalorder %s62, %s63
      %p74 = scmp.eq.s32.totalorder %s28, 0
      %p75 = por %p73, %p74
      %p76 = scmp.ne.s32.totalorder %s62, %s63
      %p77 = scmp.eq.s32.totalorder %s29, 1
      %p78 = por %p76, %p77
      %p80 = scmp.ne.s32.totalorder %s63, %s79
      %p81 = scmp.eq.s32.totalorder %s29, 0
      %p82 = por %p80, %p81
      %s83 = ssub.s32 %s23, %s30
      %p84 = scmp.eq.s32.totalorder %s83, 0
      %s86 = sadd.s32 %s85, 1
      %s87 = scalar_select %p84, %s85, %s86
      %p90 = pneg %p84
      %p91 = scmp.eq.s32.totalorder %s23, 1
      %p92 = por %p90, %p91
      %p93 = scmp.ne.s32.totalorder %s85, %s88
      %p94 = scmp.eq.s32.totalorder %s23, 0
      %p95 = por %p93, %p94
      %p96 = scmp.ne.s32.totalorder %s85, %s88
      %p97 = scmp.eq.s32.totalorder %s28, 1
      %p98 = por %p96, %p97
      %p99 = scmp.ne.s32.totalorder %s88, %s89
      %p100 = scmp.eq.s32.totalorder %s28, 0
      %p101 = por %p99, %p100
      %p102 = scmp.ne.s32.totalorder %s88, %s89
      %p103 = scmp.eq.s32.totalorder %s29, 1
      %p104 = por %p102, %p103
      %p106 = scmp.ne.s32.totalorder %s89, %s105
      %p107 = scmp.eq.s32.totalorder %s29, 0
      %p108 = por %p106, %p107
      %s110 = sadd.s32 %s109, 1
      %p113 = scmp.eq.s32.totalorder %s23, 1
      %p114 = scmp.ne.s32.totalorder %s109, %s111
      %p115 = scmp.eq.s32.totalorder %s23, 0
      %p116 = por %p114, %p115
      %p117 = scmp.ne.s32.totalorder %s109, %s111
      %p118 = scmp.eq.s32.totalorder %s28, 1
      %p119 = por %p117, %p118
      %p120 = scmp.ne.s32.totalorder %s111, %s112
      %p121 = scmp.eq.s32.totalorder %s28, 0
      %p122 = por %p120, %p121
      %p123 = scmp.ne.s32.totalorder %s111, %s112
      %p124 = scmp.eq.s32.totalorder %s29, 1
      %p125 = por %p123, %p124
      %p127 = scmp.ne.s32.totalorder %s112, %s126
      %p128 = scmp.eq.s32.totalorder %s29, 0
      %p129 = por %p127, %p128
      %s131 = sadd.s32 %s130, 1
      %p134 = scmp.eq.s32.totalorder %s23, 1
      %p135 = scmp.ne.s32.totalorder %s130, %s132
      %p136 = scmp.eq.s32.totalorder %s23, 0
      %p137 = por %p135, %p136
      %p138 = scmp.ne.s32.totalorder %s130, %s132
      %p139 = scmp.eq.s32.totalorder %s28, 1
      %p140 = por %p138, %p139
      %p141 = scmp.ne.s32.totalorder %s132, %s133
      %p142 = scmp.eq.s32.totalorder %s28, 0
      %p143 = por %p141, %p142
      %p144 = scmp.ne.s32.totalorder %s132, %s133
      %p145 = scmp.eq.s32.totalorder %s29, 1
      %p146 = por %p144, %p145
      %p148 = scmp.ne.s32.totalorder %s133, %s147
      %p149 = scmp.eq.s32.totalorder %s29, 0
      %p150 = por %p148, %p149
      %s152 = sadd.s32 %s151, 1
      %p155 = scmp.eq.s32.totalorder %s23, 1
      %p156 = scmp.ne.s32.totalorder %s151, %s153
      %p157 = scmp.eq.s32.totalorder %s23, 0
      %p158 = por %p156, %p157
      %p159 = scmp.ne.s32.totalorder %s151, %s153
      %p160 = scmp.eq.s32.totalorder %s28, 1
      %p161 = por %p159, %p160
      %p162 = scmp.ne.s32.totalorder %s153, %s154
      %p163 = scmp.eq.s32.totalorder %s28, 0
      %p164 = por %p162, %p163
      %p165 = scmp.ne.s32.totalorder %s153, %s154
      %p166 = scmp.eq.s32.totalorder %s29, 1
      %p167 = por %p165, %p166
      %p169 = scmp.ne.s32.totalorder %s154, %s168
      %p170 = scmp.eq.s32.totalorder %s29, 0
      %p171 = por %p169, %p170
      %s173 = sadd.s32 %s172, 1
      %p176 = scmp.eq.s32.totalorder %s23, 1
      %p177 = scmp.ne.s32.totalorder %s172, %s174
      %p178 = scmp.eq.s32.totalorder %s23, 0
      %p179 = por %p177, %p178
      %p180 = scmp.ne.s32.totalorder %s172, %s174
      %p181 = scmp.eq.s32.totalorder %s28, 1
      %p182 = por %p180, %p181
      %p183 = scmp.ne.s32.totalorder %s174, %s175
      %p184 = scmp.eq.s32.totalorder %s28, 0
      %p185 = por %p183, %p184
      %p186 = scmp.ne.s32.totalorder %s174, %s175
      %p187 = scmp.eq.s32.totalorder %s29, 1
      %p188 = por %p186, %p187
      %p190 = scmp.ne.s32.totalorder %s175, %s189
      %p191 = scmp.eq.s32.totalorder %s29, 0
      %p192 = por %p190, %p191
      %s194 = sadd.s32 %s193, 1
      %p197 = scmp.eq.s32.totalorder %s23, 1
      %p198 = scmp.ne.s32.totalorder %s193, %s195
      %p199 = scmp.eq.s32.totalorder %s23, 0
      %p200 = por %p198, %p199
      %p201 = scmp.ne.s32.totalorder %s193, %s195
      %p202 = scmp.eq.s32.totalorder %s28, 1
      %p203 = por %p201, %p202
      %p204 = scmp.ne.s32.totalorder %s195, %s196
      %p205 = scmp.eq.s32.totalorder %s28, 0
      %p206 = por %p204, %p205
      %p207 = scmp.ne.s32.totalorder %s195, %s196
      %p208 = scmp.eq.s32.totalorder %s29, 1
      %p209 = por %p207, %p208
      %p211 = scmp.ne.s32.totalorder %s196, %s210
      %p212 = scmp.eq.s32.totalorder %s29, 0
      %p213 = por %p211, %p212
      %s215 = sadd.s32 %s214, 1
      %p218 = scmp.eq.s32.totalorder %s23, 1
      %p219 = scmp.ne.s32.totalorder %s214, %s216
      %p220 = scmp.eq.s32.totalorder %s23, 0
      %p221 = por %p219, %p220
      %p222 = scmp.ne.s32.totalorder %s214, %s216
      %p223 = scmp.eq.s32.totalorder %s28, 1
      %p224 = por %p222, %p223
      %p225 = scmp.ne.s32.totalorder %s216, %s217
      %p226 = scmp.eq.s32.totalorder %s28, 0
      %p227 = por %p225, %p226
      %p228 = scmp.ne.s32.totalorder %s216, %s217
      %p229 = scmp.eq.s32.totalorder %s29, 1
      %p230 = por %p228, %p229
      %p232 = scmp.ne.s32.totalorder %s217, %s231
      %p233 = scmp.eq.s32.totalorder %s29, 0
      %p234 = por %p232, %p233
      %s236 = sadd.s32 %s235, 1
      %p239 = scmp.eq.s32.totalorder %s23, 1
      %p240 = scmp.ne.s32.totalorder %s235, %s237
      %p241 = scmp.eq.s32.totalorder %s23, 0
      %p242 = por %p240, %p241
      %p243 = scmp.ne.s32.totalorder %s235, %s237
      %p244 = scmp.eq.s32.totalorder %s28, 1
      %p245 = por %p243, %p244
      %p246 = scmp.ne.s32.totalorder %s237, %s238
      %p247 = scmp.eq.s32.totalorder %s28, 0
      %p248 = por %p246, %p247
      %p249 = scmp.ne.s32.totalorder %s237, %s238
      %p250 = scmp.eq.s32.totalorder %s29, 1
      %p251 = por %p249, %p250
      %p253 = scmp.ne.s32.totalorder %s238, %s252
      %p254 = scmp.eq.s32.totalorder %s29, 0
      %p255 = por %p253, %p254
      %s257 = sadd.s32 %s256, 1
      %p260 = scmp.eq.s32.totalorder %s23, 1
      %p261 = scmp.ne.s32.totalorder %s256, %s258
      %p262 = scmp.eq.s32.totalorder %s23, 0
      %p263 = por %p261, %p262
      %p264 = scmp.ne.s32.totalorder %s256, %s258
      %p265 = scmp.eq.s32.totalorder %s28, 1
      %p266 = por %p264, %p265
      %p267 = scmp.ne.s32.totalorder %s258, %s259
      %p268 = scmp.eq.s32.totalorder %s28, 0
      %p269 = por %p267, %p268
      %p270 = scmp.ne.s32.totalorder %s258, %s259
      %p271 = scmp.eq.s32.totalorder %s29, 1
      %p272 = por %p270, %p271
      %p274 = scmp.ne.s32.totalorder %s259, %s273
      %p275 = scmp.eq.s32.totalorder %s29, 0
      %p276 = por %p274, %p275
      %s278 = sadd.s32 %s277, 1
      %p281 = scmp.eq.s32.totalorder %s23, 1
      %p282 = scmp.ne.s32.totalorder %s277, %s279
      %p283 = scmp.eq.s32.totalorder %s23, 0
      %p284 = por %p282, %p283
      %p285 = scmp.ne.s32.totalorder %s277, %s279
      %p286 = scmp.eq.s32.totalorder %s28, 1
      %p287 = por %p285, %p286
      %p288 = scmp.ne.s32.totalorder %s279, %s280
      %p289 = scmp.eq.s32.totalorder %s28, 0
      %p290 = por %p288, %p289
      %p291 = scmp.ne.s32.totalorder %s279, %s280
      %p292 = scmp.eq.s32.totalorder %s29, 1
      %p293 = por %p291, %p292
      %p295 = scmp.ne.s32.totalorder %s280, %s294
      %p296 = scmp.eq.s32.totalorder %s29, 0
      %p297 = por %p295, %p296
      %s299 = sadd.s32 %s298, 1
      %p302 = scmp.eq.s32.totalorder %s23, 1
      %p303 = scmp.ne.s32.totalorder %s298, %s300
      %p304 = scmp.eq.s32.totalorder %s23, 0
      %p305 = por %p303, %p304
      %p306 = scmp.ne.s32.totalorder %s298, %s300
      %p307 = scmp.eq.s32.totalorder %s28, 1
      %p308 = por %p306, %p307
      %p309 = scmp.ne.s32.totalorder %s300, %s301
      %p310 = scmp.eq.s32.totalorder %s28, 0
      %p311 = por %p309, %p310
      %p312 = scmp.ne.s32.totalorder %s300, %s301
      %p313 = scmp.eq.s32.totalorder %s29, 1
      %p314 = por %p312, %p313
      %p316 = scmp.ne.s32.totalorder %s301, %s315
      %p317 = scmp.eq.s32.totalorder %s29, 0
      %p318 = por %p316, %p317
      %s320 = sadd.s32 %s319, 1
      %p323 = scmp.eq.s32.totalorder %s23, 1
      %p324 = scmp.ne.s32.totalorder %s319, %s321
      %p325 = scmp.eq.s32.totalorder %s23, 0
      %p326 = por %p324, %p325
      %p327 = scmp.ne.s32.totalorder %s319, %s321
      %p328 = scmp.eq.s32.totalorder %s28, 1
      %p329 = por %p327, %p328
      %p330 = scmp.ne.s32.totalorder %s321, %s322
      %p331 = scmp.eq.s32.totalorder %s28, 0
      %p332 = por %p330, %p331
      %p333 = scmp.ne.s32.totalorder %s321, %s322
      %p334 = scmp.eq.s32.totalorder %s29, 1
      %p335 = por %p333, %p334
      %p337 = scmp.ne.s32.totalorder %s322, %s336
      %p338 = scmp.eq.s32.totalorder %s29, 0
      %p339 = por %p337, %p338
      %s340 = ssub.s32 %s23, %s30
      %p341 = scmp.eq.s32.totalorder %s340, 0
      %s343 = sadd.s32 %s342, 1
      %s344 = scalar_select %p341, %s342, %s343
      %p347 = pneg %p341
      %p348 = scmp.eq.s32.totalorder %s23, 1
      %p349 = por %p347, %p348
      %p350 = scmp.ne.s32.totalorder %s342, %s345
      %p351 = scmp.eq.s32.totalorder %s23, 0
      %p352 = por %p350, %p351
      %p353 = scmp.ne.s32.totalorder %s342, %s345
      %p354 = scmp.eq.s32.totalorder %s28, 1
      %p355 = por %p353, %p354
      %p356 = scmp.ne.s32.totalorder %s345, %s346
      %p357 = scmp.eq.s32.totalorder %s28, 0
      %p358 = por %p356, %p357
      %p359 = scmp.ne.s32.totalorder %s345, %s346
      %p360 = scmp.eq.s32.totalorder %s29, 1
      %p361 = por %p359, %p360
      %p363 = scmp.ne.s32.totalorder %s346, %s362
      %p364 = scmp.eq.s32.totalorder %s29, 0
      %p365 = por %p363, %p364
      %p366 = scmp.le.s32.totalorder 1, %s23
      %p367 = scmp.lt.s32.totalorder %s23, 3
      %p368 = pnand %p366, %p367
      %p369 = pneg %p368
      // Predicated region
      $region9: #{tpu_custom_call.1} parent=5 // pred_check
        _
      $region10: #{tpu_custom_call.1} parent=5 // pred_check_branch
        %371 = sbr.rel (%p368) target = $region12
      $region11: #{tpu_custom_call.1} parent=5 // pred_region
        %s372 = ssub.s32 %s23, 1
        // Predicated region
        $region13: #{tpu_custom_call.1} parent=11 // pred_check
          %p373 = pneg %p122
        $region14: #{tpu_custom_call.1} parent=11 // pred_check_branch
          %375 = sbr.rel (%p373) target = $region16
        $region15: #{tpu_custom_call.1} parent=11 // pred_region
          _
        $region16: #{tpu_custom_call.1} parent=11 // pred_fallthru
          _
        // Predicated region
        $region17: #{tpu_custom_call.1} parent=11 // pred_check
          %p376 = pneg %p143
        $region18: #{tpu_custom_call.1} parent=11 // pred_check_branch
          %378 = sbr.rel (%p376) target = $region20
        $region19: #{tpu_custom_call.1} parent=11 // pred_region
          _
        $region20: #{tpu_custom_call.1} parent=11 // pred_fallthru
          _
        // Predicated region
        $region21: #{tpu_custom_call.1} parent=11 // pred_check
          %p379 = pneg %p164
        $region22: #{tpu_custom_call.1} parent=11 // pred_check_branch
          %381 = sbr.rel (%p379) target = $region24
        $region23: #{tpu_custom_call.1} parent=11 // pred_region
          _
        $region24: #{tpu_custom_call.1} parent=11 // pred_fallthru
          _
        // Predicated region
        $region25: #{tpu_custom_call.1} parent=11 // pred_check
          %p382 = pneg %p185
        $region26: #{tpu_custom_call.1} parent=11 // pred_check_branch
          %384 = sbr.rel (%p382) target = $region28
        $region27: #{tpu_custom_call.1} parent=11 // pred_region
          _
        $region28: #{tpu_custom_call.1} parent=11 // pred_fallthru
          _
        // Predicated region
        $region29: #{tpu_custom_call.1} parent=11 // pred_check
          %p385 = pneg %p206
        $region30: #{tpu_custom_call.1} parent=11 // pred_check_branch
          %387 = sbr.rel (%p385) target = $region32
        $region31: #{tpu_custom_call.1} parent=11 // pred_region
          _
        $region32: #{tpu_custom_call.1} parent=11 // pred_fallthru
          _
        // Predicated region
        $region33: #{tpu_custom_call.1} parent=11 // pred_check
          %p388 = pneg %p227
        $region34: #{tpu_custom_call.1} parent=11 // pred_check_branch
          %390 = sbr.rel (%p388) target = $region36
        $region35: #{tpu_custom_call.1} parent=11 // pred_region
          _
        $region36: #{tpu_custom_call.1} parent=11 // pred_fallthru
          _
        // Predicated region
        $region37: #{tpu_custom_call.1} parent=11 // pred_check
          %p391 = pneg %p248
        $region38: #{tpu_custom_call.1} parent=11 // pred_check_branch
          %393 = sbr.rel (%p391) target = $region40
        $region39: #{tpu_custom_call.1} parent=11 // pred_region
          _
        $region40: #{tpu_custom_call.1} parent=11 // pred_fallthru
          _
        // Predicated region
        $region41: #{tpu_custom_call.1} parent=11 // pred_check
          %p394 = pneg %p269
        $region42: #{tpu_custom_call.1} parent=11 // pred_check_branch
          %396 = sbr.rel (%p394) target = $region44
        $region43: #{tpu_custom_call.1} parent=11 // pred_region
          _
        $region44: #{tpu_custom_call.1} parent=11 // pred_fallthru
          _
        // Predicated region
        $region45: #{tpu_custom_call.1} parent=11 // pred_check
          %p397 = pneg %p290
        $region46: #{tpu_custom_call.1} parent=11 // pred_check_branch
          %399 = sbr.rel (%p397) target = $region48
        $region47: #{tpu_custom_call.1} parent=11 // pred_region
          _
        $region48: #{tpu_custom_call.1} parent=11 // pred_fallthru
          _
        // Predicated region
        $region49: #{tpu_custom_call.1} parent=11 // pred_check
          %p400 = pneg %p311
        $region50: #{tpu_custom_call.1} parent=11 // pred_check_branch
          %402 = sbr.rel (%p400) target = $region52
        $region51: #{tpu_custom_call.1} parent=11 // pred_region
          _
        $region52: #{tpu_custom_call.1} parent=11 // pred_fallthru
          _
        // Predicated region
        $region53: #{tpu_custom_call.1} parent=11 // pred_check
          %p403 = pneg %p332
        $region54: #{tpu_custom_call.1} parent=11 // pred_check_branch
          %405 = sbr.rel (%p403) target = $region56
        $region55: #{tpu_custom_call.1} parent=11 // pred_region
          _
        $region56: #{tpu_custom_call.1} parent=11 // pred_fallthru
          _
      $region12: #{tpu_custom_call.1} parent=5 // pred_fallthru
        _
      %p406 = scmp.lt.s32.totalorder %s23, 2
      // Predicated region
      $region57: #{tpu_custom_call.1} parent=5 // pred_check
        %p407 = pneg %p406
      $region58: #{tpu_custom_call.1} parent=5 // pred_check_branch
        %409 = sbr.rel (%p407) target = $region60
      $region59: #{tpu_custom_call.1} parent=5 // pred_region
        // Predicated region
        $region61: #{tpu_custom_call.1} parent=59 // pred_check
          %p410 = pneg %p43
        $region62: #{tpu_custom_call.1} parent=59 // pred_check_branch
          %412 = sbr.rel (%p410) target = $region64
        $region63: #{tpu_custom_call.1} parent=59 // pred_region
          %p413 = scmp.lt.s32.totalorder %s23, 1
          %s414 = scalar_select %p413, %s23, 1
          %s415 = smul.addr %s414, 4
          %s416 = scalar_lea.vmem %s0, %s415
        $region64: #{tpu_custom_call.1} parent=59 // pred_fallthru
          _
        // Predicated region
        $region65: #{tpu_custom_call.1} parent=59 // pred_check
          %p417 = pneg %p69
        $region66: #{tpu_custom_call.1} parent=59 // pred_check_branch
          %419 = sbr.rel (%p417) target = $region68
        $region67: #{tpu_custom_call.1} parent=59 // pred_region
          %p420 = scmp.lt.s32.totalorder %s23, 1
          %s421 = scalar_select %p420, %s23, 1
          %s422 = smul.addr %s421, 4
          %s423 = smul.addr %s422, 4
          %s424 = scalar_lea.vmem %s1, %s423
        $region68: #{tpu_custom_call.1} parent=59 // pred_fallthru
          _
        // Predicated region
        $region69: #{tpu_custom_call.1} parent=59 // pred_check
          %p425 = pneg %p95
        $region70: #{tpu_custom_call.1} parent=59 // pred_check_branch
          %427 = sbr.rel (%p425) target = $region72
        $region71: #{tpu_custom_call.1} parent=59 // pred_region
          %p428 = scmp.lt.s32.totalorder %s23, 1
          %s429 = scalar_select %p428, %s23, 1
          %s430 = smul.addr %s429, 4
          %s431 = scalar_lea.vmem %s2, %s430
        $region72: #{tpu_custom_call.1} parent=59 // pred_fallthru
          _
      $region60: #{tpu_custom_call.1} parent=5 // pred_fallthru
        _
      %p432 = scmp.le.s32.totalorder 1, %s23
      %p433 = scmp.lt.s32.totalorder %s23, 3
      %p434 = pnand %p432, %p433
      %p435 = pneg %p434
      // Predicated region
      $region73: #{tpu_custom_call.1} parent=5 // pred_check
        _
      $region74: #{tpu_custom_call.1} parent=5 // pred_check_branch
        %437 = sbr.rel (%p434) target = $region76
      $region75: #{tpu_custom_call.1} parent=5 // pred_region
        %s438 = ssub.s32 %s23, 1
        %p439 = scmp.lt.s32.totalorder %s28, 1
        %s440 = scalar_select %p439, %s28, 1
        %s441 = smul.addr %s440, 4
        %s442 = scalar_lea.vmem %s0, %s441
        %p443 = pneg %p49
        %p444 = pneg %p46
        %p445 = scmp.lt.s32.totalorder %s28, 1
        %s446 = scalar_select %p445, %s28, 1
        %s447 = smul.addr %s446, 4
        %s448 = smul.addr %s447, 4
        %s449 = scalar_lea.vmem %s1, %s448
        %p450 = pneg %p75
        %p451 = pneg %p72
        %p452 = scmp.lt.s32.totalorder %s28, 1
        %s453 = scalar_select %p452, %s28, 1
        %s454 = smul.addr %s453, 4
        %s455 = scalar_lea.vmem %s2, %s454
        %p456 = pneg %p101
        %p457 = pneg %p98
        %p458 = pneg %p122
        %p459 = pneg %p119
        %p460 = pneg %p143
        %p461 = pneg %p140
        %p462 = pneg %p164
        %p463 = pneg %p161
        %p464 = pneg %p185
        %p465 = pneg %p182
        %p466 = pneg %p206
        %p467 = pneg %p203
        %p468 = pneg %p227
        %p469 = pneg %p224
        %p470 = pneg %p248
        %p471 = pneg %p245
        %p472 = pneg %p269
        %p473 = pneg %p266
        %p474 = pneg %p290
        %p475 = pneg %p287
        %p476 = pneg %p311
        %p477 = pneg %p308
        %p478 = pneg %p332
        %p479 = pneg %p329
        %p480 = pneg %p358
        %p481 = pneg %p355
        %s482 = sand.u32 %s345, 1
        %s483 = scalar_lea.sflag [#allocation3], %s482
        %s484 = sand.u32 %s345, 1
        %s485 = smul.addr %s484, 8
        %s486 = scalar_lea.vmem [#allocation2], %s485
        %p487 = scmp.lt.s32.totalorder %s28, 1
        %s488 = scalar_select %p487, %s28, 1
        %s489 = smul.addr %s488, 4
        %s490 = scalar_lea.vmem %s0, %s489
        %p491 = scmp.lt.s32.totalorder %s28, 1
        %s492 = scalar_select %p491, %s28, 1
        %s493 = smul.addr %s492, 4
        %s494 = smul.addr %s493, 4
        %s495 = scalar_lea.vmem %s1, %s494
        %p496 = scmp.lt.s32.totalorder %s28, 1
        %s497 = scalar_select %p496, %s28, 1
        %s498 = smul.addr %s497, 4
        %s499 = scalar_lea.vmem %s2, %s498
        %v501 = vld [vmem:[%s490] sm:$0xf]
        %v502 = vld [vmem:[%s495] sm:$0xf]
        %v503 = vld [vmem:[%s495 + $0x4] sm:$0xf]
        %v504 = vld [vmem:[%s495 + $0x8] sm:$0xf]
        %v505 = vld [vmem:[%s495 + $0xc] sm:$0xf]
        %v506 = vld [vmem:[%s499] sm:$0xf]
        %v507 = vld [vmem:[%s4] sm:$0xff]
        %v508 = vld [vmem:[%s4 + $0x8] sm:$0xff]
        %v509 = vld [vmem:[%s4 + $0x10] sm:$0xff]
        %v510 = vld [vmem:[%s4 + $0x18] sm:$0xff]
        %v511 = vld [vmem:[%s4 + $0x20] sm:$0xff]
        %v512 = vld [vmem:[%s4 + $0x28] sm:$0xff]
        %v513 = vld [vmem:[%s4 + $0x30] sm:$0xff]
        %v514 = vld [vmem:[%s4 + $0x38] sm:$0xff]
        %v515 = vld [vmem:[%s5] sm:$0xf]
        %v517 = vlaneseq
        %v518 = vshrl.u32 %v517, 7
        %v519 = vsub.s32 0, %v518
        %v520 = vrot.slane %v515, %v519
        %v521 = vlaneseq
        %v522 = vshrl.u32 %v521, 7
        %v523 = vsub.s32 1, %v522
        %v524 = vrot.slane %v515, %v523
        %v525 = vlaneseq
        %v526 = vshrl.u32 %v525, 7
        %v527 = vsub.s32 2, %v526
        %v528 = vrot.slane %v515, %v527
        %v529 = vlaneseq
        %v530 = vshrl.u32 %v529, 7
        %v531 = vsub.s32 3, %v530
        %v532 = vrot.slane %v515, %v531
        %v545 = vunpack.c.l.b16 %v507
        %v546 = vunpack.c.h.b16 %v507
        %v547 = vunpack.c.l.b16 %v508
        %v548 = vunpack.c.h.b16 %v508
        %v549 = vunpack.c.l.b16 %v509
        %v550 = vunpack.c.h.b16 %v509
        %v551 = vunpack.c.l.b16 %v510
        %v552 = vunpack.c.h.b16 %v510
        %v553 = vunpack.c.l.b16 %v511
        %v554 = vunpack.c.h.b16 %v511
        %v555 = vunpack.c.l.b16 %v512
        %v556 = vunpack.c.h.b16 %v512
        %v557 = vunpack.c.l.b16 %v513
        %v558 = vunpack.c.h.b16 %v513
        %v559 = vunpack.c.l.b16 %v514
        %v560 = vunpack.c.h.b16 %v514
        %v561 = vpack.c.b16 %v549, %v545
        %v562 = vpack.c.b16 %v550, %v546
        %v563 = vpack.c.b16 %v551, %v547
        %v564 = vpack.c.b16 %v552, %v548
        %v565 = vpack.c.b16 %v557, %v553
        %v566 = vpack.c.b16 %v558, %v554
        %v567 = vpack.c.b16 %v559, %v555
        %v568 = vpack.c.b16 %v560, %v556
        %vm577 = vcmask 261120
        %v579 = vsel %vm577, %v501, 0
        %581 = vmatprep.subr.bf16.mxu0 %v562
        %582 = vmatpush1.bf16.msra.mxu0 %v561
        %583 = vmatprep.subr.bf16.mxu0 %v566
        %584 = vmatpush1.bf16.msra.mxu0 %v565
        %585 = vmatprep.subr.bf16.mxu0 0
        %586 = vmatpush1.bf16.msra.mxu0 0
        %587 = vmatprep.subr.bf16.mxu0 0
        %588 = vmatpush1.bf16.msra.mxu0 0
        %589 = vmatprep.subr.bf16.mxu0 0
        %590 = vmatpush1.bf16.msra.mxu0 0
        %591 = vmatprep.subr.bf16.mxu0 0
        %592 = vmatpush1.bf16.msra.mxu0 0
        %593 = vmatprep.subr.bf16.mxu0 0
        %594 = vmatpush1.bf16.msra.mxu0 0
        %595 = vmatprep.subr.bf16.mxu0 0
        %596 = vmatpush1.bf16.msra.mxu0 0
        %597 = vmatprep.subr.bf16.mxu0 0
        %598 = vmatpush1.bf16.msra.mxu0 0
        %599 = vmatprep.subr.bf16.mxu0 0
        %600 = vmatpush1.bf16.msra.mxu0 0
        %601 = vmatprep.subr.bf16.mxu0 0
        %602 = vmatpush1.bf16.msra.mxu0 0
        %603 = vmatprep.subr.bf16.mxu0 0
        %604 = vmatpush1.bf16.msra.mxu0 0
        %605 = vmatprep.subr.bf16.mxu0 0
        %606 = vmatpush1.bf16.msra.mxu0 0
        %607 = vmatprep.subr.bf16.mxu0 0
        %608 = vmatpush1.bf16.msra.mxu0 0
        %609 = vmatprep.subr.bf16.mxu0 0
        %610 = vmatpush1.bf16.msra.mxu0 0
        %611 = vmatprep.subr.bf16.mxu0 0
        %612 = vmatpush1.bf16.msra.mxu0 0
        %613 = vmatprep.mubr.bf16.mxu0 0
        %614 = vmatmul.mubr.bf16.gmra.mrb[0].mxu0 %v579
        %v615 = vpop.f32.mrb[0].mxu0
        %v616 = vadd.f32 %v520, %v615
        %v617 = vpop.f32.mrb[0].mxu0
        %v618 = vadd.f32 %v524, %v617
        %v619 = vpop.f32.mrb[0].mxu0
        %v620 = vpop.f32.mrb[0].mxu0
        %621 = vdwg.mxu0
        %622 = vmatprep.subr.bf16.mxu0 %v564
        %623 = vmatpush1.bf16.msra.mxu0 %v563
        %624 = vmatprep.subr.bf16.mxu0 %v568
        %625 = vmatpush1.bf16.msra.mxu0 %v567
        %626 = vmatprep.subr.bf16.mxu0 0
        %627 = vmatpush1.bf16.msra.mxu0 0
        %628 = vmatprep.subr.bf16.mxu0 0
        %629 = vmatpush1.bf16.msra.mxu0 0
        %630 = vmatprep.subr.bf16.mxu0 0
        %631 = vmatpush1.bf16.msra.mxu0 0
        %632 = vmatprep.subr.bf16.mxu0 0
        %633 = vmatpush1.bf16.msra.mxu0 0
        %634 = vmatprep.subr.bf16.mxu0 0
        %635 = vmatpush1.bf16.msra.mxu0 0
        %636 = vmatprep.subr.bf16.mxu0 0
        %637 = vmatpush1.bf16.msra.mxu0 0
        %638 = vmatprep.subr.bf16.mxu0 0
        %639 = vmatpush1.bf16.msra.mxu0 0
        %640 = vmatprep.subr.bf16.mxu0 0
        %641 = vmatpush1.bf16.msra.mxu0 0
        %642 = vmatprep.subr.bf16.mxu0 0
        %643 = vmatpush1.bf16.msra.mxu0 0
        %644 = vmatprep.subr.bf16.mxu0 0
        %645 = vmatpush1.bf16.msra.mxu0 0
        %646 = vmatprep.subr.bf16.mxu0 0
        %647 = vmatpush1.bf16.msra.mxu0 0
        %648 = vmatprep.subr.bf16.mxu0 0
        %649 = vmatpush1.bf16.msra.mxu0 0
        %650 = vmatprep.subr.bf16.mxu0 0
        %651 = vmatpush1.bf16.msra.mxu0 0
        %652 = vmatprep.subr.bf16.mxu0 0
        %653 = vmatpush1.bf16.msra.mxu0 0
        %654 = vmatprep.mubr.bf16.mxu0 0
        %655 = vmatmul.mubr.bf16.gmra.mrb[0].mxu0 %v579
        %v656 = vpop.f32.mrb[0].mxu0
        %v657 = vadd.f32 %v528, %v656
        %v658 = vpop.f32.mrb[0].mxu0
        %v659 = vadd.f32 %v532, %v658
        %v660 = vpop.f32.mrb[0].mxu0
        %v661 = vpop.f32.mrb[0].mxu0
        %662 = vdwg.mxu0
        %v663 = vld [vmem:[%s6] sm:$0xf]
        %v664 = vld [vmem:[%s6 + $0x4] sm:$0xf]
        %v665 = vld [vmem:[%s6 + $0x8] sm:$0xf]
        %v666 = vld [vmem:[%s6 + $0xc] sm:$0xf]
        %v667 = vld [vmem:[%s6 + $0x10] sm:$0xf]
        %v668 = vld [vmem:[%s6 + $0x14] sm:$0xf]
        %v669 = vld [vmem:[%s6 + $0x18] sm:$0xf]
        %v670 = vld [vmem:[%s6 + $0x1c] sm:$0xf]
        %v671 = vld [vmem:[%s6 + $0x20] sm:$0xf]
        %v672 = vld [vmem:[%s6 + $0x24] sm:$0xf]
        %v673 = vld [vmem:[%s6 + $0x28] sm:$0xf]
        %v674 = vld [vmem:[%s6 + $0x2c] sm:$0xf]
        %v675 = vld [vmem:[%s6 + $0x30] sm:$0xf]
        %v676 = vld [vmem:[%s6 + $0x34] sm:$0xf]
        %v677 = vld [vmem:[%s6 + $0x38] sm:$0xf]
        %v678 = vld [vmem:[%s6 + $0x3c] sm:$0xf]
        %v679 = vld [vmem:[%s6 + $0x40] sm:$0xf]
        %v680 = vld [vmem:[%s6 + $0x44] sm:$0xf]
        %v681 = vld [vmem:[%s6 + $0x48] sm:$0xf]
        %v682 = vld [vmem:[%s6 + $0x4c] sm:$0xf]
        %v683 = vld [vmem:[%s6 + $0x50] sm:$0xf]
        %v684 = vld [vmem:[%s6 + $0x54] sm:$0xf]
        %v685 = vld [vmem:[%s6 + $0x58] sm:$0xf]
        %v686 = vld [vmem:[%s6 + $0x5c] sm:$0xf]
        %v687 = vld [vmem:[%s6 + $0x60] sm:$0xf]
        %v688 = vld [vmem:[%s6 + $0x64] sm:$0xf]
        %v689 = vld [vmem:[%s6 + $0x68] sm:$0xf]
        %v690 = vld [vmem:[%s6 + $0x6c] sm:$0xf]
        %v691 = vld [vmem:[%s6 + $0x70] sm:$0xf]
        %v692 = vld [vmem:[%s6 + $0x74] sm:$0xf]
        %v693 = vld [vmem:[%s6 + $0x78] sm:$0xf]
        %v694 = vld [vmem:[%s6 + $0x7c] sm:$0xf]
        %v695 = vld [vmem:[%s6 + $0x80] sm:$0xf]
        %v696 = vld [vmem:[%s6 + $0x84] sm:$0xf]
        %v697 = vld [vmem:[%s6 + $0x88] sm:$0xf]
        %v698 = vld [vmem:[%s6 + $0x8c] sm:$0xf]
        %v699 = vld [vmem:[%s6 + $0x90] sm:$0xf]
        %v700 = vld [vmem:[%s6 + $0x94] sm:$0xf]
        %v701 = vld [vmem:[%s6 + $0x98] sm:$0xf]
        %v702 = vld [vmem:[%s6 + $0x9c] sm:$0xf]
        %v703 = vld [vmem:[%s6 + $0xa0] sm:$0xf]
        %v704 = vld [vmem:[%s6 + $0xa4] sm:$0xf]
        %v705 = vld [vmem:[%s6 + $0xa8] sm:$0xf]
        %v706 = vld [vmem:[%s6 + $0xac] sm:$0xf]
        %v707 = vld [vmem:[%s6 + $0xb0] sm:$0xf]
        %v708 = vld [vmem:[%s6 + $0xb4] sm:$0xf]
        %v709 = vld [vmem:[%s6 + $0xb8] sm:$0xf]
        %v710 = vld [vmem:[%s6 + $0xbc] sm:$0xf]
        %v711 = vld [vmem:[%s6 + $0xc0] sm:$0xf]
        %v712 = vld [vmem:[%s6 + $0xc4] sm:$0xf]
        %v713 = vld [vmem:[%s6 + $0xc8] sm:$0xf]
        %v714 = vld [vmem:[%s6 + $0xcc] sm:$0xf]
        %v715 = vld [vmem:[%s6 + $0xd0] sm:$0xf]
        %v716 = vld [vmem:[%s6 + $0xd4] sm:$0xf]
        %v717 = vld [vmem:[%s6 + $0xd8] sm:$0xf]
        %v718 = vld [vmem:[%s6 + $0xdc] sm:$0xf]
        %v719 = vld [vmem:[%s6 + $0xe0] sm:$0xf]
        %v720 = vld [vmem:[%s6 + $0xe4] sm:$0xf]
        %v721 = vld [vmem:[%s6 + $0xe8] sm:$0xf]
        %v722 = vld [vmem:[%s6 + $0xec] sm:$0xf]
        %v723 = vld [vmem:[%s6 + $0xf0] sm:$0xf]
        %v724 = vld [vmem:[%s6 + $0xf4] sm:$0xf]
        %v725 = vld [vmem:[%s6 + $0xf8] sm:$0xf]
        %v726 = vld [vmem:[%s6 + $0xfc] sm:$0xf]
        %v727 = vld [vmem:[%s7] sm:$0xff]
        %v728 = vld [vmem:[%s7 + $0x8] sm:$0xff]
        %v729 = vld [vmem:[%s7 + $0x10] sm:$0xff]
        %v730 = vld [vmem:[%s7 + $0x18] sm:$0xff]
        %v731 = vld [vmem:[%s7 + $0x20] sm:$0xff]
        %v732 = vld [vmem:[%s7 + $0x28] sm:$0xff]
        %v733 = vld [vmem:[%s7 + $0x30] sm:$0xff]
        %v734 = vld [vmem:[%s7 + $0x38] sm:$0xff]
        %v735 = vld [vmem:[%s7 + $0x40] sm:$0xff]
        %v736 = vld [vmem:[%s7 + $0x48] sm:$0xff]
        %v737 = vld [vmem:[%s7 + $0x50] sm:$0xff]
        %v738 = vld [vmem:[%s7 + $0x58] sm:$0xff]
        %v739 = vld [vmem:[%s7 + $0x60] sm:$0xff]
        %v740 = vld [vmem:[%s7 + $0x68] sm:$0xff]
        %v741 = vld [vmem:[%s7 + $0x70] sm:$0xff]
        %v742 = vld [vmem:[%s7 + $0x78] sm:$0xff]
        %v743 = vld [vmem:[%s7 + $0x80] sm:$0xff]
        %v744 = vld [vmem:[%s7 + $0x88] sm:$0xff]
        %v745 = vld [vmem:[%s7 + $0x90] sm:$0xff]
        %v746 = vld [vmem:[%s7 + $0x98] sm:$0xff]
        %v747 = vld [vmem:[%s7 + $0xa0] sm:$0xff]
        %v748 = vld [vmem:[%s7 + $0xa8] sm:$0xff]
        %v749 = vld [vmem:[%s7 + $0xb0] sm:$0xff]
        %v750 = vld [vmem:[%s7 + $0xb8] sm:$0xff]
        %v751 = vld [vmem:[%s7 + $0xc0] sm:$0xff]
        %v752 = vld [vmem:[%s7 + $0xc8] sm:$0xff]
        %v753 = vld [vmem:[%s7 + $0xd0] sm:$0xff]
        %v754 = vld [vmem:[%s7 + $0xd8] sm:$0xff]
        %v755 = vld [vmem:[%s7 + $0xe0] sm:$0xff]
        %v756 = vld [vmem:[%s7 + $0xe8] sm:$0xff]
        %v757 = vld [vmem:[%s7 + $0xf0] sm:$0xff]
        %v758 = vld [vmem:[%s7 + $0xf8] sm:$0xff]
        %v759 = vld [vmem:[%s7 + $0x100] sm:$0xff]
        %v760 = vld [vmem:[%s7 + $0x108] sm:$0xff]
        %v761 = vld [vmem:[%s7 + $0x110] sm:$0xff]
        %v762 = vld [vmem:[%s7 + $0x118] sm:$0xff]
        %v763 = vld [vmem:[%s7 + $0x120] sm:$0xff]
        %v764 = vld [vmem:[%s7 + $0x128] sm:$0xff]
        %v765 = vld [vmem:[%s7 + $0x130] sm:$0xff]
        %v766 = vld [vmem:[%s7 + $0x138] sm:$0xff]
        %v767 = vld [vmem:[%s7 + $0x140] sm:$0xff]
        %v768 = vld [vmem:[%s7 + $0x148] sm:$0xff]
        %v769 = vld [vmem:[%s7 + $0x150] sm:$0xff]
        %v770 = vld [vmem:[%s7 + $0x158] sm:$0xff]
        %v771 = vld [vmem:[%s7 + $0x160] sm:$0xff]
        %v772 = vld [vmem:[%s7 + $0x168] sm:$0xff]
        %v773 = vld [vmem:[%s7 + $0x170] sm:$0xff]
        %v774 = vld [vmem:[%s7 + $0x178] sm:$0xff]
        %v775 = vld [vmem:[%s7 + $0x180] sm:$0xff]
        %v776 = vld [vmem:[%s7 + $0x188] sm:$0xff]
        %v777 = vld [vmem:[%s7 + $0x190] sm:$0xff]
        %v778 = vld [vmem:[%s7 + $0x198] sm:$0xff]
        %v779 = vld [vmem:[%s7 + $0x1a0] sm:$0xff]
        %v780 = vld [vmem:[%s7 + $0x1a8] sm:$0xff]
        %v781 = vld [vmem:[%s7 + $0x1b0] sm:$0xff]
        %v782 = vld [vmem:[%s7 + $0x1b8] sm:$0xff]
        %v783 = vld [vmem:[%s7 + $0x1c0] sm:$0xff]
        %v784 = vld [vmem:[%s7 + $0x1c8] sm:$0xff]
        %v785 = vld [vmem:[%s7 + $0x1d0] sm:$0xff]
        %v786 = vld [vmem:[%s7 + $0x1d8] sm:$0xff]
        %v787 = vld [vmem:[%s7 + $0x1e0] sm:$0xff]
        %v788 = vld [vmem:[%s7 + $0x1e8] sm:$0xff]
        %v789 = vld [vmem:[%s7 + $0x1f0] sm:$0xff]
        %v790 = vld [vmem:[%s7 + $0x1f8] sm:$0xff]
        %792 = vset.pattern.permute.xlu0 0
        %793 = vperm.xlu0 %792, %v727
        %v794 = vpop.permute.xlu0 %793
        %797 = vset.pattern.permute.xlu0 0
        %798 = vperm.xlu0 %797, %v728
        %v799 = vpop.permute.xlu0 %798
        %802 = vset.pattern.permute.xlu0 0
        %803 = vperm.xlu0 %802, %v729
        %v804 = vpop.permute.xlu0 %803
        %807 = vset.pattern.permute.xlu0 0
        %808 = vperm.xlu0 %807, %v730
        %v809 = vpop.permute.xlu0 %808
        %812 = vset.pattern.permute.xlu0 0
        %813 = vperm.xlu0 %812, %v731
        %v814 = vpop.permute.xlu0 %813
        %817 = vset.pattern.permute.xlu0 0
        %818 = vperm.xlu0 %817, %v732
        %v819 = vpop.permute.xlu0 %818
        %822 = vset.pattern.permute.xlu0 0
        %823 = vperm.xlu0 %822, %v733
        %v824 = vpop.permute.xlu0 %823
        %827 = vset.pattern.permute.xlu0 0
        %828 = vperm.xlu0 %827, %v734
        %v829 = vpop.permute.xlu0 %828
        %832 = vset.pattern.permute.xlu0 0
        %833 = vperm.xlu0 %832, %v735
        %v834 = vpop.permute.xlu0 %833
        %837 = vset.pattern.permute.xlu0 0
        %838 = vperm.xlu0 %837, %v736
        %v839 = vpop.permute.xlu0 %838
        %842 = vset.pattern.permute.xlu0 0
        %843 = vperm.xlu0 %842, %v737
        %v844 = vpop.permute.xlu0 %843
        %847 = vset.pattern.permute.xlu0 0
        %848 = vperm.xlu0 %847, %v738
        %v849 = vpop.permute.xlu0 %848
        %852 = vset.pattern.permute.xlu0 0
        %853 = vperm.xlu0 %852, %v739
        %v854 = vpop.permute.xlu0 %853
        %857 = vset.pattern.permute.xlu0 0
        %858 = vperm.xlu0 %857, %v740
        %v859 = vpop.permute.xlu0 %858
        %862 = vset.pattern.permute.xlu0 0
        %863 = vperm.xlu0 %862, %v741
        %v864 = vpop.permute.xlu0 %863
        %867 = vset.pattern.permute.xlu0 0
        %868 = vperm.xlu0 %867, %v742
        %v869 = vpop.permute.xlu0 %868
        %872 = vset.pattern.permute.xlu0 0
        %873 = vperm.xlu0 %872, %v743
        %v874 = vpop.permute.xlu0 %873
        %877 = vset.pattern.permute.xlu0 0
        %878 = vperm.xlu0 %877, %v744
        %v879 = vpop.permute.xlu0 %878
        %882 = vset.pattern.permute.xlu0 0
        %883 = vperm.xlu0 %882, %v745
        %v884 = vpop.permute.xlu0 %883
        %887 = vset.pattern.permute.xlu0 0
        %888 = vperm.xlu0 %887, %v746
        %v889 = vpop.permute.xlu0 %888
        %892 = vset.pattern.permute.xlu0 0
        %893 = vperm.xlu0 %892, %v747
        %v894 = vpop.permute.xlu0 %893
        %897 = vset.pattern.permute.xlu0 0
        %898 = vperm.xlu0 %897, %v748
        %v899 = vpop.permute.xlu0 %898
        %902 = vset.pattern.permute.xlu0 0
        %903 = vperm.xlu0 %902, %v749
        %v904 = vpop.permute.xlu0 %903
        %907 = vset.pattern.permute.xlu0 0
        %908 = vperm.xlu0 %907, %v750
        %v909 = vpop.permute.xlu0 %908
        %912 = vset.pattern.permute.xlu0 0
        %913 = vperm.xlu0 %912, %v751
        %v914 = vpop.permute.xlu0 %913
        %917 = vset.pattern.permute.xlu0 0
        %918 = vperm.xlu0 %917, %v752
        %v919 = vpop.permute.xlu0 %918
        %922 = vset.pattern.permute.xlu0 0
        %923 = vperm.xlu0 %922, %v753
        %v924 = vpop.permute.xlu0 %923
        %927 = vset.pattern.permute.xlu0 0
        %928 = vperm.xlu0 %927, %v754
        %v929 = vpop.permute.xlu0 %928
        %932 = vset.pattern.permute.xlu0 0
        %933 = vperm.xlu0 %932, %v755
        %v934 = vpop.permute.xlu0 %933
        %937 = vset.pattern.permute.xlu0 0
        %938 = vperm.xlu0 %937, %v756
        %v939 = vpop.permute.xlu0 %938
        %942 = vset.pattern.permute.xlu0 0
        %943 = vperm.xlu0 %942, %v757
        %v944 = vpop.permute.xlu0 %943
        %947 = vset.pattern.permute.xlu0 0
        %948 = vperm.xlu0 %947, %v758
        %v949 = vpop.permute.xlu0 %948
        %952 = vset.pattern.permute.xlu0 0
        %953 = vperm.xlu0 %952, %v759
        %v954 = vpop.permute.xlu0 %953
        %957 = vset.pattern.permute.xlu0 0
        %958 = vperm.xlu0 %957, %v760
        %v959 = vpop.permute.xlu0 %958
        %962 = vset.pattern.permute.xlu0 0
        %963 = vperm.xlu0 %962, %v761
        %v964 = vpop.permute.xlu0 %963
        %967 = vset.pattern.permute.xlu0 0
        %968 = vperm.xlu0 %967, %v762
        %v969 = vpop.permute.xlu0 %968
        %972 = vset.pattern.permute.xlu0 0
        %973 = vperm.xlu0 %972, %v763
        %v974 = vpop.permute.xlu0 %973
        %977 = vset.pattern.permute.xlu0 0
        %978 = vperm.xlu0 %977, %v764
        %v979 = vpop.permute.xlu0 %978
        %982 = vset.pattern.permute.xlu0 0
        %983 = vperm.xlu0 %982, %v765
        %v984 = vpop.permute.xlu0 %983
        %987 = vset.pattern.permute.xlu0 0
        %988 = vperm.xlu0 %987, %v766
        %v989 = vpop.permute.xlu0 %988
        %992 = vset.pattern.permute.xlu0 0
        %993 = vperm.xlu0 %992, %v767
        %v994 = vpop.permute.xlu0 %993
        %997 = vset.pattern.permute.xlu0 0
        %998 = vperm.xlu0 %997, %v768
        %v999 = vpop.permute.xlu0 %998
        %1002 = vset.pattern.permute.xlu0 0
        %1003 = vperm.xlu0 %1002, %v769
        %v1004 = vpop.permute.xlu0 %1003
        %1007 = vset.pattern.permute.xlu0 0
        %1008 = vperm.xlu0 %1007, %v770
        %v1009 = vpop.permute.xlu0 %1008
        %1012 = vset.pattern.permute.xlu0 0
        %1013 = vperm.xlu0 %1012, %v771
        %v1014 = vpop.permute.xlu0 %1013
        %1017 = vset.pattern.permute.xlu0 0
        %1018 = vperm.xlu0 %1017, %v772
        %v1019 = vpop.permute.xlu0 %1018
        %1022 = vset.pattern.permute.xlu0 0
        %1023 = vperm.xlu0 %1022, %v773
        %v1024 = vpop.permute.xlu0 %1023
        %1027 = vset.pattern.permute.xlu0 0
        %1028 = vperm.xlu0 %1027, %v774
        %v1029 = vpop.permute.xlu0 %1028
        %1032 = vset.pattern.permute.xlu0 0
        %1033 = vperm.xlu0 %1032, %v775
        %v1034 = vpop.permute.xlu0 %1033
        %1037 = vset.pattern.permute.xlu0 0
        %1038 = vperm.xlu0 %1037, %v776
        %v1039 = vpop.permute.xlu0 %1038
        %1042 = vset.pattern.permute.xlu0 0
        %1043 = vperm.xlu0 %1042, %v777
        %v1044 = vpop.permute.xlu0 %1043
        %1047 = vset.pattern.permute.xlu0 0
        %1048 = vperm.xlu0 %1047, %v778
        %v1049 = vpop.permute.xlu0 %1048
        %1052 = vset.pattern.permute.xlu0 0
        %1053 = vperm.xlu0 %1052, %v779
        %v1054 = vpop.permute.xlu0 %1053
        %1057 = vset.pattern.permute.xlu0 0
        %1058 = vperm.xlu0 %1057, %v780
        %v1059 = vpop.permute.xlu0 %1058
        %1062 = vset.pattern.permute.xlu0 0
        %1063 = vperm.xlu0 %1062, %v781
        %v1064 = vpop.permute.xlu0 %1063
        %1067 = vset.pattern.permute.xlu0 0
        %1068 = vperm.xlu0 %1067, %v782
        %v1069 = vpop.permute.xlu0 %1068
        %1072 = vset.pattern.permute.xlu0 0
        %1073 = vperm.xlu0 %1072, %v783
        %v1074 = vpop.permute.xlu0 %1073
        %1077 = vset.pattern.permute.xlu0 0
        %1078 = vperm.xlu0 %1077, %v784
        %v1079 = vpop.permute.xlu0 %1078
        %1082 = vset.pattern.permute.xlu0 0
        %1083 = vperm.xlu0 %1082, %v785
        %v1084 = vpop.permute.xlu0 %1083
        %1087 = vset.pattern.permute.xlu0 0
        %1088 = vperm.xlu0 %1087, %v786
        %v1089 = vpop.permute.xlu0 %1088
        %1092 = vset.pattern.permute.xlu0 0
        %1093 = vperm.xlu0 %1092, %v787
        %v1094 = vpop.permute.xlu0 %1093
        %1097 = vset.pattern.permute.xlu0 0
        %1098 = vperm.xlu0 %1097, %v788
        %v1099 = vpop.permute.xlu0 %1098
        %1102 = vset.pattern.permute.xlu0 0
        %1103 = vperm.xlu0 %1102, %v789
        %v1104 = vpop.permute.xlu0 %1103
        %1107 = vset.pattern.permute.xlu0 0
        %1108 = vperm.xlu0 %1107, %v790
        %v1109 = vpop.permute.xlu0 %1108
        %v1175 = vunpack.c.l.b16 %v663
        %v1176 = vunpack.c.l.b16 %v664
        %v1177 = vunpack.c.l.b16 %v665
        %v1178 = vunpack.c.l.b16 %v666
        %v1179 = vunpack.c.l.b16 %v667
        %v1180 = vunpack.c.l.b16 %v668
        %v1181 = vunpack.c.l.b16 %v669
        %v1182 = vunpack.c.l.b16 %v670
        %v1183 = vunpack.c.l.b16 %v671
        %v1184 = vunpack.c.l.b16 %v672
        %v1185 = vunpack.c.l.b16 %v673
        %v1186 = vunpack.c.l.b16 %v674
        %v1187 = vunpack.c.l.b16 %v675
        %v1188 = vunpack.c.l.b16 %v676
        %v1189 = vunpack.c.l.b16 %v677
        %v1190 = vunpack.c.l.b16 %v678
        %v1191 = vunpack.c.l.b16 %v679
        %v1192 = vunpack.c.l.b16 %v680
        %v1193 = vunpack.c.l.b16 %v681
        %v1194 = vunpack.c.l.b16 %v682
        %v1195 = vunpack.c.l.b16 %v683
        %v1196 = vunpack.c.l.b16 %v684
        %v1197 = vunpack.c.l.b16 %v685
        %v1198 = vunpack.c.l.b16 %v686
        %v1199 = vunpack.c.l.b16 %v687
        %v1200 = vunpack.c.l.b16 %v688
        %v1201 = vunpack.c.l.b16 %v689
        %v1202 = vunpack.c.l.b16 %v690
        %v1203 = vunpack.c.l.b16 %v691
        %v1204 = vunpack.c.l.b16 %v692
        %v1205 = vunpack.c.l.b16 %v693
        %v1206 = vunpack.c.l.b16 %v694
        %v1207 = vunpack.c.l.b16 %v695
        %v1208 = vunpack.c.l.b16 %v696
        %v1209 = vunpack.c.l.b16 %v697
        %v1210 = vunpack.c.l.b16 %v698
        %v1211 = vunpack.c.l.b16 %v699
        %v1212 = vunpack.c.l.b16 %v700
        %v1213 = vunpack.c.l.b16 %v701
        %v1214 = vunpack.c.l.b16 %v702
        %v1215 = vunpack.c.l.b16 %v703
        %v1216 = vunpack.c.l.b16 %v704
        %v1217 = vunpack.c.l.b16 %v705
        %v1218 = vunpack.c.l.b16 %v706
        %v1219 = vunpack.c.l.b16 %v707
        %v1220 = vunpack.c.l.b16 %v708
        %v1221 = vunpack.c.l.b16 %v709
        %v1222 = vunpack.c.l.b16 %v710
        %v1223 = vunpack.c.l.b16 %v711
        %v1224 = vunpack.c.l.b16 %v712
        %v1225 = vunpack.c.l.b16 %v713
        %v1226 = vunpack.c.l.b16 %v714
        %v1227 = vunpack.c.l.b16 %v715
        %v1228 = vunpack.c.l.b16 %v716
        %v1229 = vunpack.c.l.b16 %v717
        %v1230 = vunpack.c.l.b16 %v718
        %v1231 = vunpack.c.l.b16 %v719
        %v1232 = vunpack.c.l.b16 %v720
        %v1233 = vunpack.c.l.b16 %v721
        %v1234 = vunpack.c.l.b16 %v722
        %v1235 = vunpack.c.l.b16 %v723
        %v1236 = vunpack.c.l.b16 %v724
        %v1237 = vunpack.c.l.b16 %v725
        %v1238 = vunpack.c.l.b16 %v726
        %v1239 = vpack.c.b16 %v1176, %v1175
        %v1240 = vpack.c.b16 %v1178, %v1177
        %v1241 = vpack.c.b16 %v1180, %v1179
        %v1242 = vpack.c.b16 %v1182, %v1181
        %v1243 = vpack.c.b16 %v1184, %v1183
        %v1244 = vpack.c.b16 %v1186, %v1185
        %v1245 = vpack.c.b16 %v1188, %v1187
        %v1246 = vpack.c.b16 %v1190, %v1189
        %v1247 = vpack.c.b16 %v1192, %v1191
        %v1248 = vpack.c.b16 %v1194, %v1193
        %v1249 = vpack.c.b16 %v1196, %v1195
        %v1250 = vpack.c.b16 %v1198, %v1197
        %v1251 = vpack.c.b16 %v1200, %v1199
        %v1252 = vpack.c.b16 %v1202, %v1201
        %v1253 = vpack.c.b16 %v1204, %v1203
        %v1254 = vpack.c.b16 %v1206, %v1205
        %v1255 = vpack.c.b16 %v1208, %v1207
        %v1256 = vpack.c.b16 %v1210, %v1209
        %v1257 = vpack.c.b16 %v1212, %v1211
        %v1258 = vpack.c.b16 %v1214, %v1213
        %v1259 = vpack.c.b16 %v1216, %v1215
        %v1260 = vpack.c.b16 %v1218, %v1217
        %v1261 = vpack.c.b16 %v1220, %v1219
        %v1262 = vpack.c.b16 %v1222, %v1221
        %v1263 = vpack.c.b16 %v1224, %v1223
        %v1264 = vpack.c.b16 %v1226, %v1225
        %v1265 = vpack.c.b16 %v1228, %v1227
        %v1266 = vpack.c.b16 %v1230, %v1229
        %v1267 = vpack.c.b16 %v1232, %v1231
        %v1268 = vpack.c.b16 %v1234, %v1233
        %v1269 = vpack.c.b16 %v1236, %v1235
        %v1270 = vpack.c.b16 %v1238, %v1237
        %v1275 = vunpack.c.l.b16 %v502
        %v1276 = vunpack.c.l.b16 %v503
        %v1277 = vunpack.c.l.b16 %v504
        %v1278 = vunpack.c.l.b16 %v505
        %v1279 = vpack.c.b16 %v1276, %v1275
        %v1280 = vpack.c.b16 %v1278, %v1277
        %v1284 = vsel %vm577, %v1239, 0
        %v1287 = vsel %vm577, %v1240, 0
        %v1290 = vsel %vm577, %v1241, 0
        %v1293 = vsel %vm577, %v1242, 0
        %v1296 = vsel %vm577, %v1243, 0
        %v1299 = vsel %vm577, %v1244, 0
        %v1302 = vsel %vm577, %v1245, 0
        %v1305 = vsel %vm577, %v1246, 0
        %v1308 = vsel %vm577, %v1247, 0
        %v1311 = vsel %vm577, %v1248, 0
        %v1314 = vsel %vm577, %v1249, 0
        %v1317 = vsel %vm577, %v1250, 0
        %v1320 = vsel %vm577, %v1251, 0
        %v1323 = vsel %vm577, %v1252, 0
        %v1326 = vsel %vm577, %v1253, 0
        %v1329 = vsel %vm577, %v1254, 0
        %v1332 = vsel %vm577, %v1255, 0
        %v1335 = vsel %vm577, %v1256, 0
        %v1338 = vsel %vm577, %v1257, 0
        %v1341 = vsel %vm577, %v1258, 0
        %v1344 = vsel %vm577, %v1259, 0
        %v1347 = vsel %vm577, %v1260, 0
        %v1350 = vsel %vm577, %v1261, 0
        %v1353 = vsel %vm577, %v1262, 0
        %v1356 = vsel %vm577, %v1263, 0
        %v1359 = vsel %vm577, %v1264, 0
        %v1362 = vsel %vm577, %v1265, 0
        %v1365 = vsel %vm577, %v1266, 0
        %v1368 = vsel %vm577, %v1267, 0
        %v1371 = vsel %vm577, %v1268, 0
        %v1374 = vsel %vm577, %v1269, 0
        %v1377 = vsel %vm577, %v1270, 0
        %1379 = vmatprep.subr.bf16.mxu0 0
        %1380 = vmatpush1.bf16.msra.mxu0 %v1279
        %1381 = vmatprep.subr.bf16.mxu0 0
        %1382 = vmatpush1.bf16.msra.mxu0 %v1280
        %1383 = vmatprep.subr.bf16.mxu0 0
        %1384 = vmatpush1.bf16.msra.mxu0 0
        %1385 = vmatprep.subr.bf16.mxu0 0
        %1386 = vmatpush1.bf16.msra.mxu0 0
        %1387 = vmatprep.subr.bf16.mxu0 0
        %1388 = vmatpush1.bf16.msra.mxu0 0
        %1389 = vmatprep.subr.bf16.mxu0 0
        %1390 = vmatpush1.bf16.msra.mxu0 0
        %1391 = vmatprep.subr.bf16.mxu0 0
        %1392 = vmatpush1.bf16.msra.mxu0 0
        %1393 = vmatprep.subr.bf16.mxu0 0
        %1394 = vmatpush1.bf16.msra.mxu0 0
        %1395 = vmatprep.subr.bf16.mxu0 0
        %1396 = vmatpush1.bf16.msra.mxu0 0
        %1397 = vmatprep.subr.bf16.mxu0 0
        %1398 = vmatpush1.bf16.msra.mxu0 0
        %1399 = vmatprep.subr.bf16.mxu0 0
        %1400 = vmatpush1.bf16.msra.mxu0 0
        %1401 = vmatprep.subr.bf16.mxu0 0
        %1402 = vmatpush1.bf16.msra.mxu0 0
        %1403 = vmatprep.subr.bf16.mxu0 0
        %1404 = vmatpush1.bf16.msra.mxu0 0
        %1405 = vmatprep.subr.bf16.mxu0 0
        %1406 = vmatpush1.bf16.msra.mxu0 0
        %1407 = vmatprep.subr.bf16.mxu0 0
        %1408 = vmatpush1.bf16.msra.mxu0 0
        %1409 = vmatprep.subr.bf16.mxu0 0
        %1410 = vmatpush1.bf16.msra.mxu0 0
        %1411 = vmatprep.mubr.bf16.mxu0 0
        %1412 = vmatmul.mubr.bf16.gmra.mrb[0].mxu0 %v1284
        %v1413 = vpop.f32.mrb[0].mxu0
        %v1414 = vadd.f32 %v794, %v1413
        %v1415 = vpop.f32.mrb[0].mxu0
        %v1416 = vpop.f32.mrb[0].mxu0
        %v1417 = vadd.f32 %v799, %v1416
        %v1418 = vpop.f32.mrb[0].mxu0
        %1419 = vmatprep.mubr.bf16.mxu0 0
        %1420 = vmatmul.mubr.bf16.gmra.mrb[0].mxu0 %v1287
        %v1421 = vpop.f32.mrb[0].mxu0
        %v1422 = vadd.f32 %v804, %v1421
        %v1423 = vpop.f32.mrb[0].mxu0
        %v1424 = vpop.f32.mrb[0].mxu0
        %v1425 = vadd.f32 %v809, %v1424
        %v1426 = vpop.f32.mrb[0].mxu0
        %1427 = vmatprep.mubr.bf16.mxu0 0
        %1428 = vmatmul.mubr.bf16.gmra.mrb[0].mxu0 %v1290
        %v1429 = vpop.f32.mrb[0].mxu0
        %v1430 = vadd.f32 %v814, %v1429
        %v1431 = vpop.f32.mrb[0].mxu0
        %v1432 = vpop.f32.mrb[0].mxu0
        %v1433 = vadd.f32 %v819, %v1432
        %v1434 = vpop.f32.mrb[0].mxu0
        %1435 = vmatprep.mubr.bf16.mxu0 0
        %1436 = vmatmul.mubr.bf16.gmra.mrb[0].mxu0 %v1293
        %v1437 = vpop.f32.mrb[0].mxu0
        %v1438 = vadd.f32 %v824, %v1437
        %v1439 = vpop.f32.mrb[0].mxu0
        %v1440 = vpop.f32.mrb[0].mxu0
        %v1441 = vadd.f32 %v829, %v1440
        %v1442 = vpop.f32.mrb[0].mxu0
        %1443 = vmatprep.mubr.bf16.mxu0 0
        %1444 = vmatmul.mubr.bf16.gmra.mrb[0].mxu0 %v1296
        %v1445 = vpop.f32.mrb[0].mxu0
        %v1446 = vadd.f32 %v834, %v1445
        %v1447 = vpop.f32.mrb[0].mxu0
        %v1448 = vpop.f32.mrb[0].mxu0
        %v1449 = vadd.f32 %v839, %v1448
        %v1450 = vpop.f32.mrb[0].mxu0
        %1451 = vmatprep.mubr.bf16.mxu0 0
        %1452 = vmatmul.mubr.bf16.gmra.mrb[0].mxu0 %v1299
        %v1453 = vpop.f32.mrb[0].mxu0
        %v1454 = vadd.f32 %v844, %v1453
        %v1455 = vpop.f32.mrb[0].mxu0
        %v1456 = vpop.f32.mrb[0].mxu0
        %v1457 = vadd.f32 %v849, %v1456
        %v1458 = vpop.f32.mrb[0].mxu0
        %1459 = vmatprep.mubr.bf16.mxu0 0
        %1460 = vmatmul.mubr.bf16.gmra.mrb[0].mxu0 %v1302
        %v1461 = vpop.f32.mrb[0].mxu0
        %v1462 = vadd.f32 %v854, %v1461
        %v1463 = vpop.f32.mrb[0].mxu0
        %v1464 = vpop.f32.mrb[0].mxu0
        %v1465 = vadd.f32 %v859, %v1464
        %v1466 = vpop.f32.mrb[0].mxu0
        %1467 = vmatprep.mubr.bf16.mxu0 0
        %1468 = vmatmul.mubr.bf16.gmra.mrb[0].mxu0 %v1305
        %v1469 = vpop.f32.mrb[0].mxu0
        %v1470 = vadd.f32 %v864, %v1469
        %v1471 = vpop.f32.mrb[0].mxu0
        %v1472 = vpop.f32.mrb[0].mxu0
        %v1473 = vadd.f32 %v869, %v1472
        %v1474 = vpop.f32.mrb[0].mxu0
        %1475 = vmatprep.mubr.bf16.mxu0 0
        %1476 = vmatmul.mubr.bf16.gmra.mrb[0].mxu0 %v1308
        %v1477 = vpop.f32.mrb[0].mxu0
        %v1478 = vadd.f32 %v874, %v1477
        %v1479 = vpop.f32.mrb[0].mxu0
        %v1480 = vpop.f32.mrb[0].mxu0
        %v1481 = vadd.f32 %v879, %v1480
        %v1482 = vpop.f32.mrb[0].mxu0
        %1483 = vmatprep.mubr.bf16.mxu0 0
        %1484 = vmatmul.mubr.bf16.gmra.mrb[0].mxu0 %v1311
        %v1485 = vpop.f32.mrb[0].mxu0
        %v1486 = vadd.f32 %v884, %v1485
        %v1487 = vpop.f32.mrb[0].mxu0
        %v1488 = vpop.f32.mrb[0].mxu0
        %v1489 = vadd.f32 %v889, %v1488
        %v1490 = vpop.f32.mrb[0].mxu0
        %1491 = vmatprep.mubr.bf16.mxu0 0
        %1492 = vmatmul.mubr.bf16.gmra.mrb[0].mxu0 %v1314
        %v1493 = vpop.f32.mrb[0].mxu0
        %v1494 = vadd.f32 %v894, %v1493
        %v1495 = vpop.f32.mrb[0].mxu0
        %v1496 = vpop.f32.mrb[0].mxu0
        %v1497 = vadd.f32 %v899, %v1496
        %v1498 = vpop.f32.mrb[0].mxu0
        %1499 = vmatprep.mubr.bf16.mxu0 0
        %1500 = vmatmul.mubr.bf16.gmra.mrb[0].mxu0 %v1317
        %v1501 = vpop.f32.mrb[0].mxu0
        %v1502 = vadd.f32 %v904, %v1501
        %v1503 = vpop.f32.mrb[0].mxu0
        %v1504 = vpop.f32.mrb[0].mxu0
        %v1505 = vadd.f32 %v909, %v1504
        %v1506 = vpop.f32.mrb[0].mxu0
        %1507 = vmatprep.mubr.bf16.mxu0 0
        %1508 = vmatmul.mubr.bf16.gmra.mrb[0].mxu0 %v1320
        %v1509 = vpop.f32.mrb[0].mxu0
        %v1510 = vadd.f32 %v914, %v1509
        %v1511 = vpop.f32.mrb[0].mxu0
        %v1512 = vpop.f32.mrb[0].mxu0
        %v1513 = vadd.f32 %v919, %v1512
        %v1514 = vpop.f32.mrb[0].mxu0
        %1515 = vmatprep.mubr.bf16.mxu0 0
        %1516 = vmatmul.mubr.bf16.gmra.mrb[0].mxu0 %v1323
        %v1517 = vpop.f32.mrb[0].mxu0
        %v1518 = vadd.f32 %v924, %v1517
        %v1519 = vpop.f32.mrb[0].mxu0
        %v1520 = vpop.f32.mrb[0].mxu0
        %v1521 = vadd.f32 %v929, %v1520
        %v1522 = vpop.f32.mrb[0].mxu0
        %1523 = vmatprep.mubr.bf16.mxu0 0
        %1524 = vmatmul.mubr.bf16.gmra.mrb[0].mxu0 %v1326
        %v1525 = vpop.f32.mrb[0].mxu0
        %v1526 = vadd.f32 %v934, %v1525
        %v1527 = vpop.f32.mrb[0].mxu0
        %v1528 = vpop.f32.mrb[0].mxu0
        %v1529 = vadd.f32 %v939, %v1528
        %v1530 = vpop.f32.mrb[0].mxu0
        %1531 = vmatprep.mubr.bf16.mxu0 0
        %1532 = vmatmul.mubr.bf16.gmra.mrb[0].mxu0 %v1329
        %v1533 = vpop.f32.mrb[0].mxu0
        %v1534 = vadd.f32 %v944, %v1533
        %v1535 = vpop.f32.mrb[0].mxu0
        %v1536 = vpop.f32.mrb[0].mxu0
        %v1537 = vadd.f32 %v949, %v1536
        %v1538 = vpop.f32.mrb[0].mxu0
        %1539 = vmatprep.mubr.bf16.mxu0 0
        %1540 = vmatmul.mubr.bf16.gmra.mrb[0].mxu0 %v1332
        %v1541 = vpop.f32.mrb[0].mxu0
        %v1542 = vadd.f32 %v954, %v1541
        %v1543 = vpop.f32.mrb[0].mxu0
        %v1544 = vpop.f32.mrb[0].mxu0
        %v1545 = vadd.f32 %v959, %v1544
        %v1546 = vpop.f32.mrb[0].mxu0
        %1547 = vmatprep.mubr.bf16.mxu0 0
        %1548 = vmatmul.mubr.bf16.gmra.mrb[0].mxu0 %v1335
        %v1549 = vpop.f32.mrb[0].mxu0
        %v1550 = vadd.f32 %v964, %v1549
        %v1551 = vpop.f32.mrb[0].mxu0
        %v1552 = vpop.f32.mrb[0].mxu0
        %v1553 = vadd.f32 %v969, %v1552
        %v1554 = vpop.f32.mrb[0].mxu0
        %1555 = vmatprep.mubr.bf16.mxu0 0
        %1556 = vmatmul.mubr.bf16.gmra.mrb[0].mxu0 %v1338
        %v1557 = vpop.f32.mrb[0].mxu0
        %v1558 = vadd.f32 %v974, %v1557
        %v1559 = vpop.f32.mrb[0].mxu0
        %v1560 = vpop.f32.mrb[0].mxu0
        %v1561 = vadd.f32 %v979, %v1560
        %v1562 = vpop.f32.mrb[0].mxu0
        %1563 = vmatprep.mubr.bf16.mxu0 0
        %1564 = vmatmul.mubr.bf16.gmra.mrb[0].mxu0 %v1341
        %v1565 = vpop.f32.mrb[0].mxu0
        %v1566 = vadd.f32 %v984, %v1565
        %v1567 = vpop.f32.mrb[0].mxu0
        %v1568 = vpop.f32.mrb[0].mxu0
        %v1569 = vadd.f32 %v989, %v1568
        %v1570 = vpop.f32.mrb[0].mxu0
        %1571 = vmatprep.mubr.bf16.mxu0 0
        %1572 = vmatmul.mubr.bf16.gmra.mrb[0].mxu0 %v1344
        %v1573 = vpop.f32.mrb[0].mxu0
        %v1574 = vadd.f32 %v994, %v1573
        %v1575 = vpop.f32.mrb[0].mxu0
        %v1576 = vpop.f32.mrb[0].mxu0
        %v1577 = vadd.f32 %v999, %v1576
        %v1578 = vpop.f32.mrb[0].mxu0
        %1579 = vmatprep.mubr.bf16.mxu0 0
        %1580 = vmatmul.mubr.bf16.gmra.mrb[0].mxu0 %v1347
        %v1581 = vpop.f32.mrb[0].mxu0
        %v1582 = vadd.f32 %v1004, %v1581
        %v1583 = vpop.f32.mrb[0].mxu0
        %v1584 = vpop.f32.mrb[0].mxu0
        %v1585 = vadd.f32 %v1009, %v1584
        %v1586 = vpop.f32.mrb[0].mxu0
        %1587 = vmatprep.mubr.bf16.mxu0 0
        %1588 = vmatmul.mubr.bf16.gmra.mrb[0].mxu0 %v1350
        %v1589 = vpop.f32.mrb[0].mxu0
        %v1590 = vadd.f32 %v1014, %v1589
        %v1591 = vpop.f32.mrb[0].mxu0
        %v1592 = vpop.f32.mrb[0].mxu0
        %v1593 = vadd.f32 %v1019, %v1592
        %v1594 = vpop.f32.mrb[0].mxu0
        %1595 = vmatprep.mubr.bf16.mxu0 0
        %1596 = vmatmul.mubr.bf16.gmra.mrb[0].mxu0 %v1353
        %v1597 = vpop.f32.mrb[0].mxu0
        %v1598 = vadd.f32 %v1024, %v1597
        %v1599 = vpop.f32.mrb[0].mxu0
        %v1600 = vpop.f32.mrb[0].mxu0
        %v1601 = vadd.f32 %v1029, %v1600
        %v1602 = vpop.f32.mrb[0].mxu0
        %1603 = vmatprep.mubr.bf16.mxu0 0
        %1604 = vmatmul.mubr.bf16.gmra.mrb[0].mxu0 %v1356
        %v1605 = vpop.f32.mrb[0].mxu0
        %v1606 = vadd.f32 %v1034, %v1605
        %v1607 = vpop.f32.mrb[0].mxu0
        %v1608 = vpop.f32.mrb[0].mxu0
        %v1609 = vadd.f32 %v1039, %v1608
        %v1610 = vpop.f32.mrb[0].mxu0
        %1611 = vmatprep.mubr.bf16.mxu0 0
        %1612 = vmatmul.mubr.bf16.gmra.mrb[0].mxu0 %v1359
        %v1613 = vpop.f32.mrb[0].mxu0
        %v1614 = vadd.f32 %v1044, %v1613
        %v1615 = vpop.f32.mrb[0].mxu0
        %v1616 = vpop.f32.mrb[0].mxu0
        %v1617 = vadd.f32 %v1049, %v1616
        %v1618 = vpop.f32.mrb[0].mxu0
        %1619 = vmatprep.mubr.bf16.mxu0 0
        %1620 = vmatmul.mubr.bf16.gmra.mrb[0].mxu0 %v1362
        %v1621 = vpop.f32.mrb[0].mxu0
        %v1622 = vadd.f32 %v1054, %v1621
        %v1623 = vpop.f32.mrb[0].mxu0
        %v1624 = vpop.f32.mrb[0].mxu0
        %v1625 = vadd.f32 %v1059, %v1624
        %v1626 = vpop.f32.mrb[0].mxu0
        %1627 = vmatprep.mubr.bf16.mxu0 0
        %1628 = vmatmul.mubr.bf16.gmra.mrb[0].mxu0 %v1365
        %v1629 = vpop.f32.mrb[0].mxu0
        %v1630 = vadd.f32 %v1064, %v1629
        %v1631 = vpop.f32.mrb[0].mxu0
        %v1632 = vpop.f32.mrb[0].mxu0
        %v1633 = vadd.f32 %v1069, %v1632
        %v1634 = vpop.f32.mrb[0].mxu0
        %1635 = vmatprep.mubr.bf16.mxu0 0
        %1636 = vmatmul.mubr.bf16.gmra.mrb[0].mxu0 %v1368
        %v1637 = vpop.f32.mrb[0].mxu0
        %v1638 = vadd.f32 %v1074, %v1637
        %v1639 = vpop.f32.mrb[0].mxu0
        %v1640 = vpop.f32.mrb[0].mxu0
        %v1641 = vadd.f32 %v1079, %v1640
        %v1642 = vpop.f32.mrb[0].mxu0
        %1643 = vmatprep.mubr.bf16.mxu0 0
        %1644 = vmatmul.mubr.bf16.gmra.mrb[0].mxu0 %v1371
        %v1645 = vpop.f32.mrb[0].mxu0
        %v1646 = vadd.f32 %v1084, %v1645
        %v1647 = vpop.f32.mrb[0].mxu0
        %v1648 = vpop.f32.mrb[0].mxu0
        %v1649 = vadd.f32 %v1089, %v1648
        %v1650 = vpop.f32.mrb[0].mxu0
        %1651 = vmatprep.mubr.bf16.mxu0 0
        %1652 = vmatmul.mubr.bf16.gmra.mrb[0].mxu0 %v1374
        %v1653 = vpop.f32.mrb[0].mxu0
        %v1654 = vadd.f32 %v1094, %v1653
        %v1655 = vpop.f32.mrb[0].mxu0
        %v1656 = vpop.f32.mrb[0].mxu0
        %v1657 = vadd.f32 %v1099, %v1656
        %v1658 = vpop.f32.mrb[0].mxu0
        %1659 = vmatprep.mubr.bf16.mxu0 0
        %1660 = vmatmul.mubr.bf16.gmra.mrb[0].mxu0 %v1377
        %v1661 = vpop.f32.mrb[0].mxu0
        %v1662 = vadd.f32 %v1104, %v1661
        %v1663 = vpop.f32.mrb[0].mxu0
        %v1664 = vpop.f32.mrb[0].mxu0
        %v1665 = vadd.f32 %v1109, %v1664
        %v1666 = vpop.f32.mrb[0].mxu0
        %1667 = vdwg.mxu0
        %v1668 = vld [vmem:[%s8] sm:$0xff]
        %v1669 = vld [vmem:[%s8 + $0x8] sm:$0xff]
        %v1670 = vld [vmem:[%s8 + $0x10] sm:$0xff]
        %v1671 = vld [vmem:[%s8 + $0x18] sm:$0xff]
        %v1672 = vld [vmem:[%s8 + $0x20] sm:$0xff]
        %v1673 = vld [vmem:[%s8 + $0x28] sm:$0xff]
        %v1674 = vld [vmem:[%s8 + $0x30] sm:$0xff]
        %v1675 = vld [vmem:[%s8 + $0x38] sm:$0xff]
        %v1676 = vld [vmem:[%s9] sm:$0xf]
        %v1678 = vlaneseq
        %v1679 = vshrl.u32 %v1678, 7
        %v1680 = vsub.s32 0, %v1679
        %v1681 = vrot.slane %v1676, %v1680
        %v1682 = vlaneseq
        %v1683 = vshrl.u32 %v1682, 7
        %v1684 = vsub.s32 1, %v1683
        %v1685 = vrot.slane %v1676, %v1684
        %v1686 = vlaneseq
        %v1687 = vshrl.u32 %v1686, 7
        %v1688 = vsub.s32 2, %v1687
        %v1689 = vrot.slane %v1676, %v1688
        %v1690 = vlaneseq
        %v1691 = vshrl.u32 %v1690, 7
        %v1692 = vsub.s32 3, %v1691
        %v1693 = vrot.slane %v1676, %v1692
        %v1706 = vunpack.c.l.b16 %v1668
        %v1707 = vunpack.c.h.b16 %v1668
        %v1708 = vunpack.c.l.b16 %v1669
        %v1709 = vunpack.c.h.b16 %v1669
        %v1710 = vunpack.c.l.b16 %v1670
        %v1711 = vunpack.c.h.b16 %v1670
        %v1712 = vunpack.c.l.b16 %v1671
        %v1713 = vunpack.c.h.b16 %v1671
        %v1714 = vunpack.c.l.b16 %v1672
        %v1715 = vunpack.c.h.b16 %v1672
        %v1716 = vunpack.c.l.b16 %v1673
        %v1717 = vunpack.c.h.b16 %v1673
        %v1718 = vunpack.c.l.b16 %v1674
        %v1719 = vunpack.c.h.b16 %v1674
        %v1720 = vunpack.c.l.b16 %v1675
        %v1721 = vunpack.c.h.b16 %v1675
        %v1722 = vpack.c.b16 %v1710, %v1706
        %v1723 = vpack.c.b16 %v1711, %v1707
        %v1724 = vpack.c.b16 %v1712, %v1708
        %v1725 = vpack.c.b16 %v1713, %v1709
        %v1726 = vpack.c.b16 %v1718, %v1714
        %v1727 = vpack.c.b16 %v1719, %v1715
        %v1728 = vpack.c.b16 %v1720, %v1716
        %v1729 = vpack.c.b16 %v1721, %v1717
        %v1739 = vsel %vm577, %v506, 0
        %1741 = vmatprep.subr.bf16.mxu0 %v1723
        %1742 = vmatpush1.bf16.msra.mxu0 %v1722
        %1743 = vmatprep.subr.bf16.mxu0 %v1727
        %1744 = vmatpush1.bf16.msra.mxu0 %v1726
        %1745 = vmatprep.subr.bf16.mxu0 0
        %1746 = vmatpush1.bf16.msra.mxu0 0
        %1747 = vmatprep.subr.bf16.mxu0 0
        %1748 = vmatpush1.bf16.msra.mxu0 0
        %1749 = vmatprep.subr.bf16.mxu0 0
        %1750 = vmatpush1.bf16.msra.mxu0 0
        %1751 = vmatprep.subr.bf16.mxu0 0
        %1752 = vmatpush1.bf16.msra.mxu0 0
        %1753 = vmatprep.subr.bf16.mxu0 0
        %1754 = vmatpush1.bf16.msra.mxu0 0
        %1755 = vmatprep.subr.bf16.mxu0 0
        %1756 = vmatpush1.bf16.msra.mxu0 0
        %1757 = vmatprep.subr.bf16.mxu0 0
        %1758 = vmatpush1.bf16.msra.mxu0 0
        %1759 = vmatprep.subr.bf16.mxu0 0
        %1760 = vmatpush1.bf16.msra.mxu0 0
        %1761 = vmatprep.subr.bf16.mxu0 0
        %1762 = vmatpush1.bf16.msra.mxu0 0
        %1763 = vmatprep.subr.bf16.mxu0 0
        %1764 = vmatpush1.bf16.msra.mxu0 0
        %1765 = vmatprep.subr.bf16.mxu0 0
        %1766 = vmatpush1.bf16.msra.mxu0 0
        %1767 = vmatprep.subr.bf16.mxu0 0
        %1768 = vmatpush1.bf16.msra.mxu0 0
        %1769 = vmatprep.subr.bf16.mxu0 0
        %1770 = vmatpush1.bf16.msra.mxu0 0
        %1771 = vmatprep.subr.bf16.mxu0 0
        %1772 = vmatpush1.bf16.msra.mxu0 0
        %1773 = vmatprep.mubr.bf16.mxu0 0
        %1774 = vmatmul.mubr.bf16.gmra.mrb[0].mxu0 %v1739
        %v1775 = vpop.f32.mrb[0].mxu0
        %v1776 = vadd.f32 %v1681, %v1775
        %v1777 = vpop.f32.mrb[0].mxu0
        %v1778 = vadd.f32 %v1685, %v1777
        %v1779 = vpop.f32.mrb[0].mxu0
        %v1780 = vpop.f32.mrb[0].mxu0
        %1781 = vdwg.mxu0
        %1782 = vmatprep.subr.bf16.mxu0 %v1725
        %1783 = vmatpush1.bf16.msra.mxu0 %v1724
        %1784 = vmatprep.subr.bf16.mxu0 %v1729
        %1785 = vmatpush1.bf16.msra.mxu0 %v1728
        %1786 = vmatprep.subr.bf16.mxu0 0
        %1787 = vmatpush1.bf16.msra.mxu0 0
        %1788 = vmatprep.subr.bf16.mxu0 0
        %1789 = vmatpush1.bf16.msra.mxu0 0
        %1790 = vmatprep.subr.bf16.mxu0 0
        %1791 = vmatpush1.bf16.msra.mxu0 0
        %1792 = vmatprep.subr.bf16.mxu0 0
        %1793 = vmatpush1.bf16.msra.mxu0 0
        %1794 = vmatprep.subr.bf16.mxu0 0
        %1795 = vmatpush1.bf16.msra.mxu0 0
        %1796 = vmatprep.subr.bf16.mxu0 0
        %1797 = vmatpush1.bf16.msra.mxu0 0
        %1798 = vmatprep.subr.bf16.mxu0 0
        %1799 = vmatpush1.bf16.msra.mxu0 0
        %1800 = vmatprep.subr.bf16.mxu0 0
        %1801 = vmatpush1.bf16.msra.mxu0 0
        %1802 = vmatprep.subr.bf16.mxu0 0
        %1803 = vmatpush1.bf16.msra.mxu0 0
        %1804 = vmatprep.subr.bf16.mxu0 0
        %1805 = vmatpush1.bf16.msra.mxu0 0
        %1806 = vmatprep.subr.bf16.mxu0 0
        %1807 = vmatpush1.bf16.msra.mxu0 0
        %1808 = vmatprep.subr.bf16.mxu0 0
        %1809 = vmatpush1.bf16.msra.mxu0 0
        %1810 = vmatprep.subr.bf16.mxu0 0
        %1811 = vmatpush1.bf16.msra.mxu0 0
        %1812 = vmatprep.subr.bf16.mxu0 0
        %1813 = vmatpush1.bf16.msra.mxu0 0
        %1814 = vmatprep.mubr.bf16.mxu0 0
        %1815 = vmatmul.mubr.bf16.gmra.mrb[0].mxu0 %v1739
        %v1816 = vpop.f32.mrb[0].mxu0
        %v1817 = vadd.f32 %v1689, %v1816
        %v1818 = vpop.f32.mrb[0].mxu0
        %v1819 = vadd.f32 %v1693, %v1818
        %v1820 = vpop.f32.mrb[0].mxu0
        %v1821 = vpop.f32.mrb[0].mxu0
        %1822 = vdwg.mxu0
        %v1823 = vld [vmem:[%s12] sm:$0xf]
        %v1825 = vlaneseq
        %v1826 = vshrl.u32 %v1825, 7
        %v1827 = vsub.s32 0, %v1826
        %v1828 = vrot.slane %v1823, %v1827
        %v1829 = vlaneseq
        %v1830 = vshrl.u32 %v1829, 7
        %v1831 = vsub.s32 1, %v1830
        %v1832 = vrot.slane %v1823, %v1831
        %v1833 = vlaneseq
        %v1834 = vshrl.u32 %v1833, 7
        %v1835 = vsub.s32 2, %v1834
        %v1836 = vrot.slane %v1823, %v1835
        %v1837 = vlaneseq
        %v1838 = vshrl.u32 %v1837, 7
        %v1839 = vsub.s32 3, %v1838
        %v1840 = vrot.slane %v1823, %v1839
        %v1845 = vadd.f32 %v616, %v1828
        %v1846 = vadd.f32 %v618, %v1832
        %v1847 = vadd.f32 %v657, %v1836
        %v1848 = vadd.f32 %v659, %v1840
        %v1849 = vpack.c.bf16 %v1845, %v1845
        %v1850 = vpack.c.bf16 %v1846, %v1846
        %v1851 = vpack.c.bf16 %v1847, %v1847
        %v1852 = vpack.c.bf16 %v1848, %v1848
        %v1853 = vld [vmem:[%s13] sm:$0xf]
        %v1855 = vlaneseq
        %v1856 = vshrl.u32 %v1855, 7
        %v1857 = vsub.s32 0, %v1856
        %v1858 = vrot.slane %v1853, %v1857
        %v1859 = vlaneseq
        %v1860 = vshrl.u32 %v1859, 7
        %v1861 = vsub.s32 1, %v1860
        %v1862 = vrot.slane %v1853, %v1861
        %v1863 = vlaneseq
        %v1864 = vshrl.u32 %v1863, 7
        %v1865 = vsub.s32 2, %v1864
        %v1866 = vrot.slane %v1853, %v1865
        %v1867 = vlaneseq
        %v1868 = vshrl.u32 %v1867, 7
        %v1869 = vsub.s32 3, %v1868
        %v1870 = vrot.slane %v1853, %v1869
        %v1875 = vadd.f32 %v616, %v1858
        %v1876 = vadd.f32 %v618, %v1862
        %v1877 = vadd.f32 %v657, %v1866
        %v1878 = vadd.f32 %v659, %v1870
        %v1879 = vpack.c.bf16 %v1875, %v1875
        %v1880 = vpack.c.bf16 %v1876, %v1876
        %v1881 = vpack.c.bf16 %v1877, %v1877
        %v1882 = vpack.c.bf16 %v1878, %v1878
        %v1883 = vpack.c.bf16 %v1417, %v1414
        %v1884 = vpack.c.bf16 %v1425, %v1422
        %v1885 = vpack.c.bf16 %v1433, %v1430
        %v1886 = vpack.c.bf16 %v1441, %v1438
        %v1887 = vpack.c.bf16 %v1449, %v1446
        %v1888 = vpack.c.bf16 %v1457, %v1454
        %v1889 = vpack.c.bf16 %v1465, %v1462
        %v1890 = vpack.c.bf16 %v1473, %v1470
        %v1891 = vpack.c.bf16 %v1481, %v1478
        %v1892 = vpack.c.bf16 %v1489, %v1486
        %v1893 = vpack.c.bf16 %v1497, %v1494
        %v1894 = vpack.c.bf16 %v1505, %v1502
        %v1895 = vpack.c.bf16 %v1513, %v1510
        %v1896 = vpack.c.bf16 %v1521, %v1518
        %v1897 = vpack.c.bf16 %v1529, %v1526
        %v1898 = vpack.c.bf16 %v1537, %v1534
        %v1899 = vpack.c.bf16 %v1545, %v1542
        %v1900 = vpack.c.bf16 %v1553, %v1550
        %v1901 = vpack.c.bf16 %v1561, %v1558
        %v1902 = vpack.c.bf16 %v1569, %v1566
        %v1903 = vpack.c.bf16 %v1577, %v1574
        %v1904 = vpack.c.bf16 %v1585, %v1582
        %v1905 = vpack.c.bf16 %v1593, %v1590
        %v1906 = vpack.c.bf16 %v1601, %v1598
        %v1907 = vpack.c.bf16 %v1609, %v1606
        %v1908 = vpack.c.bf16 %v1617, %v1614
        %v1909 = vpack.c.bf16 %v1625, %v1622
        %v1910 = vpack.c.bf16 %v1633, %v1630
        %v1911 = vpack.c.bf16 %v1641, %v1638
        %v1912 = vpack.c.bf16 %v1649, %v1646
        %v1913 = vpack.c.bf16 %v1657, %v1654
        %v1914 = vpack.c.bf16 %v1665, %v1662
        %v1915 = vpack.c.bf16 %v1776, %v1776
        %v1916 = vpack.c.bf16 %v1778, %v1778
        %v1917 = vpack.c.bf16 %v1817, %v1817
        %v1918 = vpack.c.bf16 %v1819, %v1819
        %v1919 = vlaneseq
        %v1920 = vshrl.u32 %v1919, 7
        %v1921 = vsub.s32 7, %v1920
        %v1922 = vand.u32 %v1921, 1
        %vm1923 = vcmp.eq.s32.totalorder %v1922, 1
        %v1924 = vsel %vm1923, 1, 0
        %vm1925 = vcmp.eq.s32.totalorder %v1924, 1
        %v1926 = vshra.s32 %v1921, 1
        %v1927 = vand.u32 %v1926, 1
        %vm1928 = vcmp.eq.s32.totalorder %v1927, 1
        %v1929 = vsel %vm1928, 1, 0
        %vm1930 = vcmp.eq.s32.totalorder %v1929, 1
        %v1931 = vshra.s32 %v1921, 2
        %v1932 = vand.u32 %v1931, 1
        %vm1933 = vcmp.eq.s32.totalorder %v1932, 1
        %v1934 = vsel %vm1933, 1, 0
        %vm1935 = vcmp.eq.s32.totalorder %v1934, 1
        %v1936 = vld [vmem:[%s11] sm:$0x1]
        %v1937 = vld [vmem:[%s3] sm:$0xf]
        %v1938 = vld [vmem:[%s3 + $0x4] sm:$0xf]
        %v1939 = vld [vmem:[%s3 + $0x8] sm:$0xf]
        %v1940 = vld [vmem:[%s3 + $0xc] sm:$0xf]
        %v1941 = vld [vmem:[%s3 + $0x10] sm:$0xf]
        %v1942 = vld [vmem:[%s3 + $0x14] sm:$0xf]
        %v1943 = vld [vmem:[%s3 + $0x18] sm:$0xf]
        %v1944 = vld [vmem:[%s3 + $0x1c] sm:$0xf]
        %v1945 = vld [vmem:[%s3 + $0x20] sm:$0xf]
        %v1946 = vld [vmem:[%s3 + $0x24] sm:$0xf]
        %v1947 = vld [vmem:[%s3 + $0x28] sm:$0xf]
        %v1948 = vld [vmem:[%s3 + $0x2c] sm:$0xf]
        %v1949 = vld [vmem:[%s3 + $0x30] sm:$0xf]
        %v1950 = vld [vmem:[%s3 + $0x34] sm:$0xf]
        %v1951 = vld [vmem:[%s3 + $0x38] sm:$0xf]
        %v1952 = vld [vmem:[%s3 + $0x3c] sm:$0xf]
        %v1969 = vunpack.c.l.b16 %v1937
        %v1970 = vunpack.c.l.b16 %v1938
        %v1971 = vunpack.c.l.b16 %v1939
        %v1972 = vunpack.c.l.b16 %v1940
        %v1973 = vunpack.c.l.b16 %v1941
        %v1974 = vunpack.c.l.b16 %v1942
        %v1975 = vunpack.c.l.b16 %v1943
        %v1976 = vunpack.c.l.b16 %v1944
        %v1977 = vunpack.c.l.b16 %v1945
        %v1978 = vunpack.c.l.b16 %v1946
        %v1979 = vunpack.c.l.b16 %v1947
        %v1980 = vunpack.c.l.b16 %v1948
        %v1981 = vunpack.c.l.b16 %v1949
        %v1982 = vunpack.c.l.b16 %v1950
        %v1983 = vunpack.c.l.b16 %v1951
        %v1984 = vunpack.c.l.b16 %v1952
        %v1985 = vpack.c.b16 %v1970, %v1969
        %v1986 = vpack.c.b16 %v1972, %v1971
        %v1987 = vpack.c.b16 %v1974, %v1973
        %v1988 = vpack.c.b16 %v1976, %v1975
        %v1989 = vpack.c.b16 %v1978, %v1977
        %v1990 = vpack.c.b16 %v1980, %v1979
        %v1991 = vpack.c.b16 %v1982, %v1981
        %v1992 = vpack.c.b16 %v1984, %v1983
        %2001 = vmatprep.subr.bf16.mxu0 0
        %2002 = vmatpush1.bf16.msra.mxu0 %v1985
        %2003 = vmatprep.subr.bf16.mxu0 0
        %2004 = vmatpush1.bf16.msra.mxu0 %v1986
        %2005 = vmatprep.subr.bf16.mxu0 0
        %2006 = vmatpush1.bf16.msra.mxu0 %v1987
        %2007 = vmatprep.subr.bf16.mxu0 0
        %2008 = vmatpush1.bf16.msra.mxu0 %v1988
        %2009 = vmatprep.subr.bf16.mxu0 0
        %2010 = vmatpush1.bf16.msra.mxu0 %v1989
        %2011 = vmatprep.subr.bf16.mxu0 0
        %2012 = vmatpush1.bf16.msra.mxu0 %v1990
        %2013 = vmatprep.subr.bf16.mxu0 0
        %2014 = vmatpush1.bf16.msra.mxu0 %v1991
        %2015 = vmatprep.subr.bf16.mxu0 0
        %2016 = vmatpush1.bf16.msra.mxu0 %v1992
        %2017 = vmatprep.subr.bf16.mxu0 0
        %2018 = vmatpush1.bf16.msra.mxu0 0
        %2019 = vmatprep.subr.bf16.mxu0 0
        %2020 = vmatpush1.bf16.msra.mxu0 0
        %2021 = vmatprep.subr.bf16.mxu0 0
        %2022 = vmatpush1.bf16.msra.mxu0 0
        %2023 = vmatprep.subr.bf16.mxu0 0
        %2024 = vmatpush1.bf16.msra.mxu0 0
        %2025 = vmatprep.subr.bf16.mxu0 0
        %2026 = vmatpush1.bf16.msra.mxu0 0
        %2027 = vmatprep.subr.bf16.mxu0 0
        %2028 = vmatpush1.bf16.msra.mxu0 0
        %2029 = vmatprep.subr.bf16.mxu0 0
        %2030 = vmatpush1.bf16.msra.mxu0 0
        %2031 = vmatprep.subr.bf16.mxu0 0
        %2032 = vmatpush1.bf16.msra.mxu0 0
        %2033 = vmatprep.mubr.bf16.mxu0 0
        %2034 = vmatmul.mubr.bf16.gmra.mrb[0].mxu0 %v1879
        %v2035 = vpop.f32.mrb[0].mxu0
        %v2036 = vadd.f32 0.0, %v2035
        %v2037 = vpop.f32.mrb[0].mxu0
        %v2038 = vpop.f32.mrb[0].mxu0
        %v2039 = vpop.f32.mrb[0].mxu0
        %2040 = vdwg.mxu0
        %2041 = vrot.lane.b32.xlu0 %v2036, 127
        %v2042 = vpop.permute.xlu0 %2041
        %v2043 = vsel %vm1925, %v2042, %v2036
        %2044 = vrot.lane.b32.xlu0 %v2043, 126
        %v2045 = vpop.permute.xlu0 %2044
        %v2046 = vsel %vm1930, %v2045, %v2043
        %2047 = vrot.lane.b32.xlu0 %v2046, 124
        %v2048 = vpop.permute.xlu0 %2047
        %v2049 = vsel %vm1935, %v2048, %v2046
        %2050 = vmatprep.subr.bf16.mxu0 0
        %2051 = vmatpush1.bf16.msra.mxu0 %v1883
        %2052 = vmatprep.subr.bf16.mxu0 0
        %2053 = vmatpush1.bf16.msra.mxu0 %v1884
        %2054 = vmatprep.subr.bf16.mxu0 0
        %2055 = vmatpush1.bf16.msra.mxu0 %v1885
        %2056 = vmatprep.subr.bf16.mxu0 0
        %2057 = vmatpush1.bf16.msra.mxu0 %v1886
        %2058 = vmatprep.subr.bf16.mxu0 0
        %2059 = vmatpush1.bf16.msra.mxu0 %v1887
        %2060 = vmatprep.subr.bf16.mxu0 0
        %2061 = vmatpush1.bf16.msra.mxu0 %v1888
        %2062 = vmatprep.subr.bf16.mxu0 0
        %2063 = vmatpush1.bf16.msra.mxu0 %v1889
        %2064 = vmatprep.subr.bf16.mxu0 0
        %2065 = vmatpush1.bf16.msra.mxu0 %v1890
        %2066 = vmatprep.subr.bf16.mxu0 0
        %2067 = vmatpush1.bf16.msra.mxu0 0
        %2068 = vmatprep.subr.bf16.mxu0 0
        %2069 = vmatpush1.bf16.msra.mxu0 0
        %2070 = vmatprep.subr.bf16.mxu0 0
        %2071 = vmatpush1.bf16.msra.mxu0 0
        %2072 = vmatprep.subr.bf16.mxu0 0
        %2073 = vmatpush1.bf16.msra.mxu0 0
        %2074 = vmatprep.subr.bf16.mxu0 0
        %2075 = vmatpush1.bf16.msra.mxu0 0
        %2076 = vmatprep.subr.bf16.mxu0 0
        %2077 = vmatpush1.bf16.msra.mxu0 0
        %2078 = vmatprep.subr.bf16.mxu0 0
        %2079 = vmatpush1.bf16.msra.mxu0 0
        %2080 = vmatprep.subr.bf16.mxu0 0
        %2081 = vmatpush1.bf16.msra.mxu0 0
        %2082 = vmatprep.mubr.bf16.mxu0 0
        %2083 = vmatmul.mubr.bf16.gmra.mrb[0].mxu0 %v1849
        %v2084 = vpop.f32.mrb[0].mxu0
        %v2085 = vadd.f32 %v2049, %v2084
        %v2086 = vpop.f32.mrb[0].mxu0
        %v2087 = vpop.f32.mrb[0].mxu0
        %v2088 = vpop.f32.mrb[0].mxu0
        %2089 = vdwg.mxu0
        %vm2090 = vcmask 64512
        %v2091 = vsel %vm2090, %v2085, -inf
        %2092 = vmax.xlane.f32.xlu0 %v2091
        %v2093 = vpop.xlane.xlu0 %2092
        %v2094 = vsub.f32 %v2085, %v2093
        %v2095 = vmul.f32 %v2094, 1.442695
        %v2096 = vpow.pop %v2095
        %v2097 = vsel %vm2090, %v2096, 0.0
        %2098 = vadd.xlane.f32.xlu0 %v2097
        %v2099 = vpop.xlane.xlu0 %2098
        %v2100 = vrcp.pop %v2099
        %v2101 = vmul.f32 %v2096, %v2100
        %v2102 = vpack.c.bf16 %v2101, %v2101
        %v2104 = vsel %vm2090, %v2102, 0
        %vm2106 = vcmask 1043456
        %v2108 = vsel %vm2106, %v1915, 0
        %2110 = vmatprep.subr.bf16.mxu0 0
        %2111 = vmatpush1.bf16.msra.mxu0 %v2108
        %2112 = vmatprep.subr.bf16.mxu0 0
        %2113 = vmatpush1.bf16.msra.mxu0 0
        %2114 = vmatprep.subr.bf16.mxu0 0
        %2115 = vmatpush1.bf16.msra.mxu0 0
        %2116 = vmatprep.subr.bf16.mxu0 0
        %2117 = vmatpush1.bf16.msra.mxu0 0
        %2118 = vmatprep.subr.bf16.mxu0 0
        %2119 = vmatpush1.bf16.msra.mxu0 0
        %2120 = vmatprep.subr.bf16.mxu0 0
        %2121 = vmatpush1.bf16.msra.mxu0 0
        %2122 = vmatprep.subr.bf16.mxu0 0
        %2123 = vmatpush1.bf16.msra.mxu0 0
        %2124 = vmatprep.subr.bf16.mxu0 0
        %2125 = vmatpush1.bf16.msra.mxu0 0
        %2126 = vmatprep.subr.bf16.mxu0 0
        %2127 = vmatpush1.bf16.msra.mxu0 0
        %2128 = vmatprep.subr.bf16.mxu0 0
        %2129 = vmatpush1.bf16.msra.mxu0 0
        %2130 = vmatprep.subr.bf16.mxu0 0
        %2131 = vmatpush1.bf16.msra.mxu0 0
        %2132 = vmatprep.subr.bf16.mxu0 0
        %2133 = vmatpush1.bf16.msra.mxu0 0
        %2134 = vmatprep.subr.bf16.mxu0 0
        %2135 = vmatpush1.bf16.msra.mxu0 0
        %2136 = vmatprep.subr.bf16.mxu0 0
        %2137 = vmatpush1.bf16.msra.mxu0 0
        %2138 = vmatprep.subr.bf16.mxu0 0
        %2139 = vmatpush1.bf16.msra.mxu0 0
        %2140 = vmatprep.subr.bf16.mxu0 0
        %2141 = vmatpush1.bf16.msra.mxu0 0
        %2142 = vmatprep.mubr.bf16.mxu0 0
        %2143 = vmatmul.mubr.bf16.gmra.mrb[0].mxu0 %v2104
        %v2144 = vpop.f32.mrb[0].mxu0
        %v2145 = vadd.f32 0.0, %v2144
        %v2146 = vpop.f32.mrb[0].mxu0
        %v2147 = vpop.f32.mrb[0].mxu0
        %v2148 = vpop.f32.mrb[0].mxu0
        %2149 = vdwg.mxu0
        %v2150 = vpack.c.bf16 %v2145, %v2145
        %v2151 = vld [vmem:[%s10] sm:$0xf]
        %v2152 = vld [vmem:[%s10 + $0x4] sm:$0xf]
        %v2153 = vld [vmem:[%s10 + $0x8] sm:$0xf]
        %v2154 = vld [vmem:[%s10 + $0xc] sm:$0xf]
        %v2155 = vld [vmem:[%s10 + $0x10] sm:$0xf]
        %v2156 = vld [vmem:[%s10 + $0x14] sm:$0xf]
        %v2157 = vld [vmem:[%s10 + $0x18] sm:$0xf]
        %v2158 = vld [vmem:[%s10 + $0x1c] sm:$0xf]
        %v2159 = vld [vmem:[%s10 + $0x20] sm:$0xf]
        %v2160 = vld [vmem:[%s10 + $0x24] sm:$0xf]
        %v2161 = vld [vmem:[%s10 + $0x28] sm:$0xf]
        %v2162 = vld [vmem:[%s10 + $0x2c] sm:$0xf]
        %v2163 = vld [vmem:[%s10 + $0x30] sm:$0xf]
        %v2164 = vld [vmem:[%s10 + $0x34] sm:$0xf]
        %v2165 = vld [vmem:[%s10 + $0x38] sm:$0xf]
        %v2166 = vld [vmem:[%s10 + $0x3c] sm:$0xf]
        %v2183 = vunpack.c.l.b16 %v2151
        %v2184 = vunpack.c.l.b16 %v2152
        %v2185 = vunpack.c.l.b16 %v2153
        %v2186 = vunpack.c.l.b16 %v2154
        %v2187 = vunpack.c.l.b16 %v2155
        %v2188 = vunpack.c.l.b16 %v2156
        %v2189 = vunpack.c.l.b16 %v2157
        %v2190 = vunpack.c.l.b16 %v2158
        %v2191 = vunpack.c.l.b16 %v2159
        %v2192 = vunpack.c.l.b16 %v2160
        %v2193 = vunpack.c.l.b16 %v2161
        %v2194 = vunpack.c.l.b16 %v2162
        %v2195 = vunpack.c.l.b16 %v2163
        %v2196 = vunpack.c.l.b16 %v2164
        %v2197 = vunpack.c.l.b16 %v2165
        %v2198 = vunpack.c.l.b16 %v2166
        %v2199 = vpack.c.b16 %v2184, %v2183
        %v2200 = vpack.c.b16 %v2186, %v2185
        %v2201 = vpack.c.b16 %v2188, %v2187
        %v2202 = vpack.c.b16 %v2190, %v2189
        %v2203 = vpack.c.b16 %v2192, %v2191
        %v2204 = vpack.c.b16 %v2194, %v2193
        %v2205 = vpack.c.b16 %v2196, %v2195
        %v2206 = vpack.c.b16 %v2198, %v2197
        %2215 = vmatprep.subr.bf16.mxu0 0
        %2216 = vmatpush1.bf16.msra.mxu0 %v2199
        %2217 = vmatprep.subr.bf16.mxu0 0
        %2218 = vmatpush1.bf16.msra.mxu0 %v2200
        %2219 = vmatprep.subr.bf16.mxu0 0
        %2220 = vmatpush1.bf16.msra.mxu0 %v2201
        %2221 = vmatprep.subr.bf16.mxu0 0
        %2222 = vmatpush1.bf16.msra.mxu0 %v2202
        %2223 = vmatprep.subr.bf16.mxu0 0
        %2224 = vmatpush1.bf16.msra.mxu0 %v2203
        %2225 = vmatprep.subr.bf16.mxu0 0
        %2226 = vmatpush1.bf16.msra.mxu0 %v2204
        %2227 = vmatprep.subr.bf16.mxu0 0
        %2228 = vmatpush1.bf16.msra.mxu0 %v2205
        %2229 = vmatprep.subr.bf16.mxu0 0
        %2230 = vmatpush1.bf16.msra.mxu0 %v2206
        %2231 = vmatprep.subr.bf16.mxu0 0
        %2232 = vmatpush1.bf16.msra.mxu0 0
        %2233 = vmatprep.subr.bf16.mxu0 0
        %2234 = vmatpush1.bf16.msra.mxu0 0
        %2235 = vmatprep.subr.bf16.mxu0 0
        %2236 = vmatpush1.bf16.msra.mxu0 0
        %2237 = vmatprep.subr.bf16.mxu0 0
        %2238 = vmatpush1.bf16.msra.mxu0 0
        %2239 = vmatprep.subr.bf16.mxu0 0
        %2240 = vmatpush1.bf16.msra.mxu0 0
        %2241 = vmatprep.subr.bf16.mxu0 0
        %2242 = vmatpush1.bf16.msra.mxu0 0
        %2243 = vmatprep.subr.bf16.mxu0 0
        %2244 = vmatpush1.bf16.msra.mxu0 0
        %2245 = vmatprep.subr.bf16.mxu0 0
        %2246 = vmatpush1.bf16.msra.mxu0 0
        %2247 = vmatprep.mubr.bf16.mxu0 0
        %2248 = vmatmul.mubr.bf16.gmra.mrb[0].mxu0 %v2150
        %v2249 = vpop.f32.mrb[0].mxu0
        %v2250 = vadd.f32 0.0, %v2249
        %v2251 = vpop.f32.mrb[0].mxu0
        %v2252 = vpop.f32.mrb[0].mxu0
        %v2253 = vpop.f32.mrb[0].mxu0
        %2254 = vdwg.mxu0
        %v2256 = vlaneseq
        %v2257 = vshrl.u32 %v2256, 7
        %v2258 = vsub.s32 0, %v2257
        %v2259 = vrot.slane %v1936, %v2258
        %v2261 = vadd.f32 %v2259, %v2250
        %v2262 = vld [vmem:[%s3 + $0x40] sm:$0xf]
        %v2263 = vld [vmem:[%s3 + $0x44] sm:$0xf]
        %v2264 = vld [vmem:[%s3 + $0x48] sm:$0xf]
        %v2265 = vld [vmem:[%s3 + $0x4c] sm:$0xf]
        %v2266 = vld [vmem:[%s3 + $0x50] sm:$0xf]
        %v2267 = vld [vmem:[%s3 + $0x54] sm:$0xf]
        %v2268 = vld [vmem:[%s3 + $0x58] sm:$0xf]
        %v2269 = vld [vmem:[%s3 + $0x5c] sm:$0xf]
        %v2270 = vld [vmem:[%s3 + $0x60] sm:$0xf]
        %v2271 = vld [vmem:[%s3 + $0x64] sm:$0xf]
        %v2272 = vld [vmem:[%s3 + $0x68] sm:$0xf]
        %v2273 = vld [vmem:[%s3 + $0x6c] sm:$0xf]
        %v2274 = vld [vmem:[%s3 + $0x70] sm:$0xf]
        %v2275 = vld [vmem:[%s3 + $0x74] sm:$0xf]
        %v2276 = vld [vmem:[%s3 + $0x78] sm:$0xf]
        %v2277 = vld [vmem:[%s3 + $0x7c] sm:$0xf]
        %v2294 = vunpack.c.l.b16 %v2262
        %v2295 = vunpack.c.l.b16 %v2263
        %v2296 = vunpack.c.l.b16 %v2264
        %v2297 = vunpack.c.l.b16 %v2265
        %v2298 = vunpack.c.l.b16 %v2266
        %v2299 = vunpack.c.l.b16 %v2267
        %v2300 = vunpack.c.l.b16 %v2268
        %v2301 = vunpack.c.l.b16 %v2269
        %v2302 = vunpack.c.l.b16 %v2270
        %v2303 = vunpack.c.l.b16 %v2271
        %v2304 = vunpack.c.l.b16 %v2272
        %v2305 = vunpack.c.l.b16 %v2273
        %v2306 = vunpack.c.l.b16 %v2274
        %v2307 = vunpack.c.l.b16 %v2275
        %v2308 = vunpack.c.l.b16 %v2276
        %v2309 = vunpack.c.l.b16 %v2277
        %v2310 = vpack.c.b16 %v2295, %v2294
        %v2311 = vpack.c.b16 %v2297, %v2296
        %v2312 = vpack.c.b16 %v2299, %v2298
        %v2313 = vpack.c.b16 %v2301, %v2300
        %v2314 = vpack.c.b16 %v2303, %v2302
        %v2315 = vpack.c.b16 %v2305, %v2304
        %v2316 = vpack.c.b16 %v2307, %v2306
        %v2317 = vpack.c.b16 %v2309, %v2308
        %2326 = vmatprep.subr.bf16.mxu0 0
        %2327 = vmatpush1.bf16.msra.mxu0 %v2310
        %2328 = vmatprep.subr.bf16.mxu0 0
        %2329 = vmatpush1.bf16.msra.mxu0 %v2311
        %2330 = vmatprep.subr.bf16.mxu0 0
        %2331 = vmatpush1.bf16.msra.mxu0 %v2312
        %2332 = vmatprep.subr.bf16.mxu0 0
        %2333 = vmatpush1.bf16.msra.mxu0 %v2313
        %2334 = vmatprep.subr.bf16.mxu0 0
        %2335 = vmatpush1.bf16.msra.mxu0 %v2314
        %2336 = vmatprep.subr.bf16.mxu0 0
        %2337 = vmatpush1.bf16.msra.mxu0 %v2315
        %2338 = vmatprep.subr.bf16.mxu0 0
        %2339 = vmatpush1.bf16.msra.mxu0 %v2316
        %2340 = vmatprep.subr.bf16.mxu0 0
        %2341 = vmatpush1.bf16.msra.mxu0 %v2317
        %2342 = vmatprep.subr.bf16.mxu0 0
        %2343 = vmatpush1.bf16.msra.mxu0 0
        %2344 = vmatprep.subr.bf16.mxu0 0
        %2345 = vmatpush1.bf16.msra.mxu0 0
        %2346 = vmatprep.subr.bf16.mxu0 0
        %2347 = vmatpush1.bf16.msra.mxu0 0
        %2348 = vmatprep.subr.bf16.mxu0 0
        %2349 = vmatpush1.bf16.msra.mxu0 0
        %2350 = vmatprep.subr.bf16.mxu0 0
        %2351 = vmatpush1.bf16.msra.mxu0 0
        %2352 = vmatprep.subr.bf16.mxu0 0
        %2353 = vmatpush1.bf16.msra.mxu0 0
        %2354 = vmatprep.subr.bf16.mxu0 0
        %2355 = vmatpush1.bf16.msra.mxu0 0
        %2356 = vmatprep.subr.bf16.mxu0 0
        %2357 = vmatpush1.bf16.msra.mxu0 0
        %2358 = vmatprep.mubr.bf16.mxu0 0
        %2359 = vmatmul.mubr.bf16.gmra.mrb[0].mxu0 %v1880
        %v2360 = vpop.f32.mrb[0].mxu0
        %v2361 = vadd.f32 0.0, %v2360
        %v2362 = vpop.f32.mrb[0].mxu0
        %v2363 = vpop.f32.mrb[0].mxu0
        %v2364 = vpop.f32.mrb[0].mxu0
        %2365 = vdwg.mxu0
        %2366 = vrot.lane.b32.xlu0 %v2361, 127
        %v2367 = vpop.permute.xlu0 %2366
        %v2368 = vsel %vm1925, %v2367, %v2361
        %2369 = vrot.lane.b32.xlu0 %v2368, 126
        %v2370 = vpop.permute.xlu0 %2369
        %v2371 = vsel %vm1930, %v2370, %v2368
        %2372 = vrot.lane.b32.xlu0 %v2371, 124
        %v2373 = vpop.permute.xlu0 %2372
        %v2374 = vsel %vm1935, %v2373, %v2371
        %2375 = vmatprep.subr.bf16.mxu0 0
        %2376 = vmatpush1.bf16.msra.mxu0 %v1891
        %2377 = vmatprep.subr.bf16.mxu0 0
        %2378 = vmatpush1.bf16.msra.mxu0 %v1892
        %2379 = vmatprep.subr.bf16.mxu0 0
        %2380 = vmatpush1.bf16.msra.mxu0 %v1893
        %2381 = vmatprep.subr.bf16.mxu0 0
        %2382 = vmatpush1.bf16.msra.mxu0 %v1894
        %2383 = vmatprep.subr.bf16.mxu0 0
        %2384 = vmatpush1.bf16.msra.mxu0 %v1895
        %2385 = vmatprep.subr.bf16.mxu0 0
        %2386 = vmatpush1.bf16.msra.mxu0 %v1896
        %2387 = vmatprep.subr.bf16.mxu0 0
        %2388 = vmatpush1.bf16.msra.mxu0 %v1897
        %2389 = vmatprep.subr.bf16.mxu0 0
        %2390 = vmatpush1.bf16.msra.mxu0 %v1898
        %2391 = vmatprep.subr.bf16.mxu0 0
        %2392 = vmatpush1.bf16.msra.mxu0 0
        %2393 = vmatprep.subr.bf16.mxu0 0
        %2394 = vmatpush1.bf16.msra.mxu0 0
        %2395 = vmatprep.subr.bf16.mxu0 0
        %2396 = vmatpush1.bf16.msra.mxu0 0
        %2397 = vmatprep.subr.bf16.mxu0 0
        %2398 = vmatpush1.bf16.msra.mxu0 0
        %2399 = vmatprep.subr.bf16.mxu0 0
        %2400 = vmatpush1.bf16.msra.mxu0 0
        %2401 = vmatprep.subr.bf16.mxu0 0
        %2402 = vmatpush1.bf16.msra.mxu0 0
        %2403 = vmatprep.subr.bf16.mxu0 0
        %2404 = vmatpush1.bf16.msra.mxu0 0
        %2405 = vmatprep.subr.bf16.mxu0 0
        %2406 = vmatpush1.bf16.msra.mxu0 0
        %2407 = vmatprep.mubr.bf16.mxu0 0
        %2408 = vmatmul.mubr.bf16.gmra.mrb[0].mxu0 %v1850
        %v2409 = vpop.f32.mrb[0].mxu0
        %v2410 = vadd.f32 %v2374, %v2409
        %v2411 = vpop.f32.mrb[0].mxu0
        %v2412 = vpop.f32.mrb[0].mxu0
        %v2413 = vpop.f32.mrb[0].mxu0
        %2414 = vdwg.mxu0
        %v2415 = vsel %vm2090, %v2410, -inf
        %2416 = vmax.xlane.f32.xlu0 %v2415
        %v2417 = vpop.xlane.xlu0 %2416
        %v2418 = vsub.f32 %v2410, %v2417
        %v2419 = vmul.f32 %v2418, 1.442695
        %v2420 = vpow.pop %v2419
        %v2421 = vsel %vm2090, %v2420, 0.0
        %2422 = vadd.xlane.f32.xlu0 %v2421
        %v2423 = vpop.xlane.xlu0 %2422
        %v2424 = vrcp.pop %v2423
        %v2425 = vmul.f32 %v2420, %v2424
        %v2426 = vpack.c.bf16 %v2425, %v2425
        %v2428 = vsel %vm2090, %v2426, 0
        %v2431 = vsel %vm2106, %v1916, 0
        %2433 = vmatprep.subr.bf16.mxu0 0
        %2434 = vmatpush1.bf16.msra.mxu0 %v2431
        %2435 = vmatprep.subr.bf16.mxu0 0
        %2436 = vmatpush1.bf16.msra.mxu0 0
        %2437 = vmatprep.subr.bf16.mxu0 0
        %2438 = vmatpush1.bf16.msra.mxu0 0
        %2439 = vmatprep.subr.bf16.mxu0 0
        %2440 = vmatpush1.bf16.msra.mxu0 0
        %2441 = vmatprep.subr.bf16.mxu0 0
        %2442 = vmatpush1.bf16.msra.mxu0 0
        %2443 = vmatprep.subr.bf16.mxu0 0
        %2444 = vmatpush1.bf16.msra.mxu0 0
        %2445 = vmatprep.subr.bf16.mxu0 0
        %2446 = vmatpush1.bf16.msra.mxu0 0
        %2447 = vmatprep.subr.bf16.mxu0 0
        %2448 = vmatpush1.bf16.msra.mxu0 0
        %2449 = vmatprep.subr.bf16.mxu0 0
        %2450 = vmatpush1.bf16.msra.mxu0 0
        %2451 = vmatprep.subr.bf16.mxu0 0
        %2452 = vmatpush1.bf16.msra.mxu0 0
        %2453 = vmatprep.subr.bf16.mxu0 0
        %2454 = vmatpush1.bf16.msra.mxu0 0
        %2455 = vmatprep.subr.bf16.mxu0 0
        %2456 = vmatpush1.bf16.msra.mxu0 0
        %2457 = vmatprep.subr.bf16.mxu0 0
        %2458 = vmatpush1.bf16.msra.mxu0 0
        %2459 = vmatprep.subr.bf16.mxu0 0
        %2460 = vmatpush1.bf16.msra.mxu0 0
        %2461 = vmatprep.subr.bf16.mxu0 0
        %2462 = vmatpush1.bf16.msra.mxu0 0
        %2463 = vmatprep.subr.bf16.mxu0 0
        %2464 = vmatpush1.bf16.msra.mxu0 0
        %2465 = vmatprep.mubr.bf16.mxu0 0
        %2466 = vmatmul.mubr.bf16.gmra.mrb[0].mxu0 %v2428
        %v2467 = vpop.f32.mrb[0].mxu0
        %v2468 = vadd.f32 0.0, %v2467
        %v2469 = vpop.f32.mrb[0].mxu0
        %v2470 = vpop.f32.mrb[0].mxu0
        %v2471 = vpop.f32.mrb[0].mxu0
        %2472 = vdwg.mxu0
        %v2473 = vpack.c.bf16 %v2468, %v2468
        %v2474 = vld [vmem:[%s10 + $0x40] sm:$0xf]
        %v2475 = vld [vmem:[%s10 + $0x44] sm:$0xf]
        %v2476 = vld [vmem:[%s10 + $0x48] sm:$0xf]
        %v2477 = vld [vmem:[%s10 + $0x4c] sm:$0xf]
        %v2478 = vld [vmem:[%s10 + $0x50] sm:$0xf]
        %v2479 = vld [vmem:[%s10 + $0x54] sm:$0xf]
        %v2480 = vld [vmem:[%s10 + $0x58] sm:$0xf]
        %v2481 = vld [vmem:[%s10 + $0x5c] sm:$0xf]
        %v2482 = vld [vmem:[%s10 + $0x60] sm:$0xf]
        %v2483 = vld [vmem:[%s10 + $0x64] sm:$0xf]
        %v2484 = vld [vmem:[%s10 + $0x68] sm:$0xf]
        %v2485 = vld [vmem:[%s10 + $0x6c] sm:$0xf]
        %v2486 = vld [vmem:[%s10 + $0x70] sm:$0xf]
        %v2487 = vld [vmem:[%s10 + $0x74] sm:$0xf]
        %v2488 = vld [vmem:[%s10 + $0x78] sm:$0xf]
        %v2489 = vld [vmem:[%s10 + $0x7c] sm:$0xf]
        %v2506 = vunpack.c.l.b16 %v2474
        %v2507 = vunpack.c.l.b16 %v2475
        %v2508 = vunpack.c.l.b16 %v2476
        %v2509 = vunpack.c.l.b16 %v2477
        %v2510 = vunpack.c.l.b16 %v2478
        %v2511 = vunpack.c.l.b16 %v2479
        %v2512 = vunpack.c.l.b16 %v2480
        %v2513 = vunpack.c.l.b16 %v2481
        %v2514 = vunpack.c.l.b16 %v2482
        %v2515 = vunpack.c.l.b16 %v2483
        %v2516 = vunpack.c.l.b16 %v2484
        %v2517 = vunpack.c.l.b16 %v2485
        %v2518 = vunpack.c.l.b16 %v2486
        %v2519 = vunpack.c.l.b16 %v2487
        %v2520 = vunpack.c.l.b16 %v2488
        %v2521 = vunpack.c.l.b16 %v2489
        %v2522 = vpack.c.b16 %v2507, %v2506
        %v2523 = vpack.c.b16 %v2509, %v2508
        %v2524 = vpack.c.b16 %v2511, %v2510
        %v2525 = vpack.c.b16 %v2513, %v2512
        %v2526 = vpack.c.b16 %v2515, %v2514
        %v2527 = vpack.c.b16 %v2517, %v2516
        %v2528 = vpack.c.b16 %v2519, %v2518
        %v2529 = vpack.c.b16 %v2521, %v2520
        %2538 = vmatprep.subr.bf16.mxu0 0
        %2539 = vmatpush1.bf16.msra.mxu0 %v2522
        %2540 = vmatprep.subr.bf16.mxu0 0
        %2541 = vmatpush1.bf16.msra.mxu0 %v2523
        %2542 = vmatprep.subr.bf16.mxu0 0
        %2543 = vmatpush1.bf16.msra.mxu0 %v2524
        %2544 = vmatprep.subr.bf16.mxu0 0
        %2545 = vmatpush1.bf16.msra.mxu0 %v2525
        %2546 = vmatprep.subr.bf16.mxu0 0
        %2547 = vmatpush1.bf16.msra.mxu0 %v2526
        %2548 = vmatprep.subr.bf16.mxu0 0
        %2549 = vmatpush1.bf16.msra.mxu0 %v2527
        %2550 = vmatprep.subr.bf16.mxu0 0
        %2551 = vmatpush1.bf16.msra.mxu0 %v2528
        %2552 = vmatprep.subr.bf16.mxu0 0
        %2553 = vmatpush1.bf16.msra.mxu0 %v2529
        %2554 = vmatprep.subr.bf16.mxu0 0
        %2555 = vmatpush1.bf16.msra.mxu0 0
        %2556 = vmatprep.subr.bf16.mxu0 0
        %2557 = vmatpush1.bf16.msra.mxu0 0
        %2558 = vmatprep.subr.bf16.mxu0 0
        %2559 = vmatpush1.bf16.msra.mxu0 0
        %2560 = vmatprep.subr.bf16.mxu0 0
        %2561 = vmatpush1.bf16.msra.mxu0 0
        %2562 = vmatprep.subr.bf16.mxu0 0
        %2563 = vmatpush1.bf16.msra.mxu0 0
        %2564 = vmatprep.subr.bf16.mxu0 0
        %2565 = vmatpush1.bf16.msra.mxu0 0
        %2566 = vmatprep.subr.bf16.mxu0 0
        %2567 = vmatpush1.bf16.msra.mxu0 0
        %2568 = vmatprep.subr.bf16.mxu0 0
        %2569 = vmatpush1.bf16.msra.mxu0 0
        %2570 = vmatprep.mubr.bf16.mxu0 0
        %2571 = vmatmul.mubr.bf16.gmra.mrb[0].mxu0 %v2473
        %v2572 = vpop.f32.mrb[0].mxu0
        %v2573 = vadd.f32 0.0, %v2572
        %v2574 = vpop.f32.mrb[0].mxu0
        %v2575 = vpop.f32.mrb[0].mxu0
        %v2576 = vpop.f32.mrb[0].mxu0
        %2577 = vdwg.mxu0
        %v2578 = vadd.f32 %v2261, %v2573
        %v2579 = vld [vmem:[%s3 + $0x80] sm:$0xf]
        %v2580 = vld [vmem:[%s3 + $0x84] sm:$0xf]
        %v2581 = vld [vmem:[%s3 + $0x88] sm:$0xf]
        %v2582 = vld [vmem:[%s3 + $0x8c] sm:$0xf]
        %v2583 = vld [vmem:[%s3 + $0x90] sm:$0xf]
        %v2584 = vld [vmem:[%s3 + $0x94] sm:$0xf]
        %v2585 = vld [vmem:[%s3 + $0x98] sm:$0xf]
        %v2586 = vld [vmem:[%s3 + $0x9c] sm:$0xf]
        %v2587 = vld [vmem:[%s3 + $0xa0] sm:$0xf]
        %v2588 = vld [vmem:[%s3 + $0xa4] sm:$0xf]
        %v2589 = vld [vmem:[%s3 + $0xa8] sm:$0xf]
        %v2590 = vld [vmem:[%s3 + $0xac] sm:$0xf]
        %v2591 = vld [vmem:[%s3 + $0xb0] sm:$0xf]
        %v2592 = vld [vmem:[%s3 + $0xb4] sm:$0xf]
        %v2593 = vld [vmem:[%s3 + $0xb8] sm:$0xf]
        %v2594 = vld [vmem:[%s3 + $0xbc] sm:$0xf]
        %v2611 = vunpack.c.l.b16 %v2579
        %v2612 = vunpack.c.l.b16 %v2580
        %v2613 = vunpack.c.l.b16 %v2581
        %v2614 = vunpack.c.l.b16 %v2582
        %v2615 = vunpack.c.l.b16 %v2583
        %v2616 = vunpack.c.l.b16 %v2584
        %v2617 = vunpack.c.l.b16 %v2585
        %v2618 = vunpack.c.l.b16 %v2586
        %v2619 = vunpack.c.l.b16 %v2587
        %v2620 = vunpack.c.l.b16 %v2588
        %v2621 = vunpack.c.l.b16 %v2589
        %v2622 = vunpack.c.l.b16 %v2590
        %v2623 = vunpack.c.l.b16 %v2591
        %v2624 = vunpack.c.l.b16 %v2592
        %v2625 = vunpack.c.l.b16 %v2593
        %v2626 = vunpack.c.l.b16 %v2594
        %v2627 = vpack.c.b16 %v2612, %v2611
        %v2628 = vpack.c.b16 %v2614, %v2613
        %v2629 = vpack.c.b16 %v2616, %v2615
        %v2630 = vpack.c.b16 %v2618, %v2617
        %v2631 = vpack.c.b16 %v2620, %v2619
        %v2632 = vpack.c.b16 %v2622, %v2621
        %v2633 = vpack.c.b16 %v2624, %v2623
        %v2634 = vpack.c.b16 %v2626, %v2625
        %2643 = vmatprep.subr.bf16.mxu0 0
        %2644 = vmatpush1.bf16.msra.mxu0 %v2627
        %2645 = vmatprep.subr.bf16.mxu0 0
        %2646 = vmatpush1.bf16.msra.mxu0 %v2628
        %2647 = vmatprep.subr.bf16.mxu0 0
        %2648 = vmatpush1.bf16.msra.mxu0 %v2629
        %2649 = vmatprep.subr.bf16.mxu0 0
        %2650 = vmatpush1.bf16.msra.mxu0 %v2630
        %2651 = vmatprep.subr.bf16.mxu0 0
        %2652 = vmatpush1.bf16.msra.mxu0 %v2631
        %2653 = vmatprep.subr.bf16.mxu0 0
        %2654 = vmatpush1.bf16.msra.mxu0 %v2632
        %2655 = vmatprep.subr.bf16.mxu0 0
        %2656 = vmatpush1.bf16.msra.mxu0 %v2633
        %2657 = vmatprep.subr.bf16.mxu0 0
        %2658 = vmatpush1.bf16.msra.mxu0 %v2634
        %2659 = vmatprep.subr.bf16.mxu0 0
        %2660 = vmatpush1.bf16.msra.mxu0 0
        %2661 = vmatprep.subr.bf16.mxu0 0
        %2662 = vmatpush1.bf16.msra.mxu0 0
        %2663 = vmatprep.subr.bf16.mxu0 0
        %2664 = vmatpush1.bf16.msra.mxu0 0
        %2665 = vmatprep.subr.bf16.mxu0 0
        %2666 = vmatpush1.bf16.msra.mxu0 0
        %2667 = vmatprep.subr.bf16.mxu0 0
        %2668 = vmatpush1.bf16.msra.mxu0 0
        %2669 = vmatprep.subr.bf16.mxu0 0
        %2670 = vmatpush1.bf16.msra.mxu0 0
        %2671 = vmatprep.subr.bf16.mxu0 0
        %2672 = vmatpush1.bf16.msra.mxu0 0
        %2673 = vmatprep.subr.bf16.mxu0 0
        %2674 = vmatpush1.bf16.msra.mxu0 0
        %2675 = vmatprep.mubr.bf16.mxu0 0
        %2676 = vmatmul.mubr.bf16.gmra.mrb[0].mxu0 %v1881
        %v2677 = vpop.f32.mrb[0].mxu0
        %v2678 = vadd.f32 0.0, %v2677
        %v2679 = vpop.f32.mrb[0].mxu0
        %v2680 = vpop.f32.mrb[0].mxu0
        %v2681 = vpop.f32.mrb[0].mxu0
        %2682 = vdwg.mxu0
        %2683 = vrot.lane.b32.xlu0 %v2678, 127
        %v2684 = vpop.permute.xlu0 %2683
        %v2685 = vsel %vm1925, %v2684, %v2678
        %2686 = vrot.lane.b32.xlu0 %v2685, 126
        %v2687 = vpop.permute.xlu0 %2686
        %v2688 = vsel %vm1930, %v2687, %v2685
        %2689 = vrot.lane.b32.xlu0 %v2688, 124
        %v2690 = vpop.permute.xlu0 %2689
        %v2691 = vsel %vm1935, %v2690, %v2688
        %2692 = vmatprep.subr.bf16.mxu0 0
        %2693 = vmatpush1.bf16.msra.mxu0 %v1899
        %2694 = vmatprep.subr.bf16.mxu0 0
        %2695 = vmatpush1.bf16.msra.mxu0 %v1900
        %2696 = vmatprep.subr.bf16.mxu0 0
        %2697 = vmatpush1.bf16.msra.mxu0 %v1901
        %2698 = vmatprep.subr.bf16.mxu0 0
        %2699 = vmatpush1.bf16.msra.mxu0 %v1902
        %2700 = vmatprep.subr.bf16.mxu0 0
        %2701 = vmatpush1.bf16.msra.mxu0 %v1903
        %2702 = vmatprep.subr.bf16.mxu0 0
        %2703 = vmatpush1.bf16.msra.mxu0 %v1904
        %2704 = vmatprep.subr.bf16.mxu0 0
        %2705 = vmatpush1.bf16.msra.mxu0 %v1905
        %2706 = vmatprep.subr.bf16.mxu0 0
        %2707 = vmatpush1.bf16.msra.mxu0 %v1906
        %2708 = vmatprep.subr.bf16.mxu0 0
        %2709 = vmatpush1.bf16.msra.mxu0 0
        %2710 = vmatprep.subr.bf16.mxu0 0
        %2711 = vmatpush1.bf16.msra.mxu0 0
        %2712 = vmatprep.subr.bf16.mxu0 0
        %2713 = vmatpush1.bf16.msra.mxu0 0
        %2714 = vmatprep.subr.bf16.mxu0 0
        %2715 = vmatpush1.bf16.msra.mxu0 0
        %2716 = vmatprep.subr.bf16.mxu0 0
        %2717 = vmatpush1.bf16.msra.mxu0 0
        %2718 = vmatprep.subr.bf16.mxu0 0
        %2719 = vmatpush1.bf16.msra.mxu0 0
        %2720 = vmatprep.subr.bf16.mxu0 0
        %2721 = vmatpush1.bf16.msra.mxu0 0
        %2722 = vmatprep.subr.bf16.mxu0 0
        %2723 = vmatpush1.bf16.msra.mxu0 0
        %2724 = vmatprep.mubr.bf16.mxu0 0
        %2725 = vmatmul.mubr.bf16.gmra.mrb[0].mxu0 %v1851
        %v2726 = vpop.f32.mrb[0].mxu0
        %v2727 = vadd.f32 %v2691, %v2726
        %v2728 = vpop.f32.mrb[0].mxu0
        %v2729 = vpop.f32.mrb[0].mxu0
        %v2730 = vpop.f32.mrb[0].mxu0
        %2731 = vdwg.mxu0
        %v2732 = vsel %vm2090, %v2727, -inf
        %2733 = vmax.xlane.f32.xlu0 %v2732
        %v2734 = vpop.xlane.xlu0 %2733
        %v2735 = vsub.f32 %v2727, %v2734
        %v2736 = vmul.f32 %v2735, 1.442695
        %v2737 = vpow.pop %v2736
        %v2738 = vsel %vm2090, %v2737, 0.0
        %2739 = vadd.xlane.f32.xlu0 %v2738
        %v2740 = vpop.xlane.xlu0 %2739
        %v2741 = vrcp.pop %v2740
        %v2742 = vmul.f32 %v2737, %v2741
        %v2743 = vpack.c.bf16 %v2742, %v2742
        %v2745 = vsel %vm2090, %v2743, 0
        %v2748 = vsel %vm2106, %v1917, 0
        %2750 = vmatprep.subr.bf16.mxu0 0
        %2751 = vmatpush1.bf16.msra.mxu0 %v2748
        %2752 = vmatprep.subr.bf16.mxu0 0
        %2753 = vmatpush1.bf16.msra.mxu0 0
        %2754 = vmatprep.subr.bf16.mxu0 0
        %2755 = vmatpush1.bf16.msra.mxu0 0
        %2756 = vmatprep.subr.bf16.mxu0 0
        %2757 = vmatpush1.bf16.msra.mxu0 0
        %2758 = vmatprep.subr.bf16.mxu0 0
        %2759 = vmatpush1.bf16.msra.mxu0 0
        %2760 = vmatprep.subr.bf16.mxu0 0
        %2761 = vmatpush1.bf16.msra.mxu0 0
        %2762 = vmatprep.subr.bf16.mxu0 0
        %2763 = vmatpush1.bf16.msra.mxu0 0
        %2764 = vmatprep.subr.bf16.mxu0 0
        %2765 = vmatpush1.bf16.msra.mxu0 0
        %2766 = vmatprep.subr.bf16.mxu0 0
        %2767 = vmatpush1.bf16.msra.mxu0 0
        %2768 = vmatprep.subr.bf16.mxu0 0
        %2769 = vmatpush1.bf16.msra.mxu0 0
        %2770 = vmatprep.subr.bf16.mxu0 0
        %2771 = vmatpush1.bf16.msra.mxu0 0
        %2772 = vmatprep.subr.bf16.mxu0 0
        %2773 = vmatpush1.bf16.msra.mxu0 0
        %2774 = vmatprep.subr.bf16.mxu0 0
        %2775 = vmatpush1.bf16.msra.mxu0 0
        %2776 = vmatprep.subr.bf16.mxu0 0
        %2777 = vmatpush1.bf16.msra.mxu0 0
        %2778 = vmatprep.subr.bf16.mxu0 0
        %2779 = vmatpush1.bf16.msra.mxu0 0
        %2780 = vmatprep.subr.bf16.mxu0 0
        %2781 = vmatpush1.bf16.msra.mxu0 0
        %2782 = vmatprep.mubr.bf16.mxu0 0
        %2783 = vmatmul.mubr.bf16.gmra.mrb[0].mxu0 %v2745
        %v2784 = vpop.f32.mrb[0].mxu0
        %v2785 = vadd.f32 0.0, %v2784
        %v2786 = vpop.f32.mrb[0].mxu0
        %v2787 = vpop.f32.mrb[0].mxu0
        %v2788 = vpop.f32.mrb[0].mxu0
        %2789 = vdwg.mxu0
        %v2790 = vpack.c.bf16 %v2785, %v2785
        %v2791 = vld [vmem:[%s10 + $0x80] sm:$0xf]
        %v2792 = vld [vmem:[%s10 + $0x84] sm:$0xf]
        %v2793 = vld [vmem:[%s10 + $0x88] sm:$0xf]
        %v2794 = vld [vmem:[%s10 + $0x8c] sm:$0xf]
        %v2795 = vld [vmem:[%s10 + $0x90] sm:$0xf]
        %v2796 = vld [vmem:[%s10 + $0x94] sm:$0xf]
        %v2797 = vld [vmem:[%s10 + $0x98] sm:$0xf]
        %v2798 = vld [vmem:[%s10 + $0x9c] sm:$0xf]
        %v2799 = vld [vmem:[%s10 + $0xa0] sm:$0xf]
        %v2800 = vld [vmem:[%s10 + $0xa4] sm:$0xf]
        %v2801 = vld [vmem:[%s10 + $0xa8] sm:$0xf]
        %v2802 = vld [vmem:[%s10 + $0xac] sm:$0xf]
        %v2803 = vld [vmem:[%s10 + $0xb0] sm:$0xf]
        %v2804 = vld [vmem:[%s10 + $0xb4] sm:$0xf]
        %v2805 = vld [vmem:[%s10 + $0xb8] sm:$0xf]
        %v2806 = vld [vmem:[%s10 + $0xbc] sm:$0xf]
        %v2823 = vunpack.c.l.b16 %v2791
        %v2824 = vunpack.c.l.b16 %v2792
        %v2825 = vunpack.c.l.b16 %v2793
        %v2826 = vunpack.c.l.b16 %v2794
        %v2827 = vunpack.c.l.b16 %v2795
        %v2828 = vunpack.c.l.b16 %v2796
        %v2829 = vunpack.c.l.b16 %v2797
        %v2830 = vunpack.c.l.b16 %v2798
        %v2831 = vunpack.c.l.b16 %v2799
        %v2832 = vunpack.c.l.b16 %v2800
        %v2833 = vunpack.c.l.b16 %v2801
        %v2834 = vunpack.c.l.b16 %v2802
        %v2835 = vunpack.c.l.b16 %v2803
        %v2836 = vunpack.c.l.b16 %v2804
        %v2837 = vunpack.c.l.b16 %v2805
        %v2838 = vunpack.c.l.b16 %v2806
        %v2839 = vpack.c.b16 %v2824, %v2823
        %v2840 = vpack.c.b16 %v2826, %v2825
        %v2841 = vpack.c.b16 %v2828, %v2827
        %v2842 = vpack.c.b16 %v2830, %v2829
        %v2843 = vpack.c.b16 %v2832, %v2831
        %v2844 = vpack.c.b16 %v2834, %v2833
        %v2845 = vpack.c.b16 %v2836, %v2835
        %v2846 = vpack.c.b16 %v2838, %v2837
        %2855 = vmatprep.subr.bf16.mxu0 0
        %2856 = vmatpush1.bf16.msra.mxu0 %v2839
        %2857 = vmatprep.subr.bf16.mxu0 0
        %2858 = vmatpush1.bf16.msra.mxu0 %v2840
        %2859 = vmatprep.subr.bf16.mxu0 0
        %2860 = vmatpush1.bf16.msra.mxu0 %v2841
        %2861 = vmatprep.subr.bf16.mxu0 0
        %2862 = vmatpush1.bf16.msra.mxu0 %v2842
        %2863 = vmatprep.subr.bf16.mxu0 0
        %2864 = vmatpush1.bf16.msra.mxu0 %v2843
        %2865 = vmatprep.subr.bf16.mxu0 0
        %2866 = vmatpush1.bf16.msra.mxu0 %v2844
        %2867 = vmatprep.subr.bf16.mxu0 0
        %2868 = vmatpush1.bf16.msra.mxu0 %v2845
        %2869 = vmatprep.subr.bf16.mxu0 0
        %2870 = vmatpush1.bf16.msra.mxu0 %v2846
        %2871 = vmatprep.subr.bf16.mxu0 0
        %2872 = vmatpush1.bf16.msra.mxu0 0
        %2873 = vmatprep.subr.bf16.mxu0 0
        %2874 = vmatpush1.bf16.msra.mxu0 0
        %2875 = vmatprep.subr.bf16.mxu0 0
        %2876 = vmatpush1.bf16.msra.mxu0 0
        %2877 = vmatprep.subr.bf16.mxu0 0
        %2878 = vmatpush1.bf16.msra.mxu0 0
        %2879 = vmatprep.subr.bf16.mxu0 0
        %2880 = vmatpush1.bf16.msra.mxu0 0
        %2881 = vmatprep.subr.bf16.mxu0 0
        %2882 = vmatpush1.bf16.msra.mxu0 0
        %2883 = vmatprep.subr.bf16.mxu0 0
        %2884 = vmatpush1.bf16.msra.mxu0 0
        %2885 = vmatprep.subr.bf16.mxu0 0
        %2886 = vmatpush1.bf16.msra.mxu0 0
        %2887 = vmatprep.mubr.bf16.mxu0 0
        %2888 = vmatmul.mubr.bf16.gmra.mrb[0].mxu0 %v2790
        %v2889 = vpop.f32.mrb[0].mxu0
        %v2890 = vadd.f32 0.0, %v2889
        %v2891 = vpop.f32.mrb[0].mxu0
        %v2892 = vpop.f32.mrb[0].mxu0
        %v2893 = vpop.f32.mrb[0].mxu0
        %2894 = vdwg.mxu0
        %v2895 = vadd.f32 %v2578, %v2890
        %v2896 = vld [vmem:[%s3 + $0xc0] sm:$0xf]
        %v2897 = vld [vmem:[%s3 + $0xc4] sm:$0xf]
        %v2898 = vld [vmem:[%s3 + $0xc8] sm:$0xf]
        %v2899 = vld [vmem:[%s3 + $0xcc] sm:$0xf]
        %v2900 = vld [vmem:[%s3 + $0xd0] sm:$0xf]
        %v2901 = vld [vmem:[%s3 + $0xd4] sm:$0xf]
        %v2902 = vld [vmem:[%s3 + $0xd8] sm:$0xf]
        %v2903 = vld [vmem:[%s3 + $0xdc] sm:$0xf]
        %v2904 = vld [vmem:[%s3 + $0xe0] sm:$0xf]
        %v2905 = vld [vmem:[%s3 + $0xe4] sm:$0xf]
        %v2906 = vld [vmem:[%s3 + $0xe8] sm:$0xf]
        %v2907 = vld [vmem:[%s3 + $0xec] sm:$0xf]
        %v2908 = vld [vmem:[%s3 + $0xf0] sm:$0xf]
        %v2909 = vld [vmem:[%s3 + $0xf4] sm:$0xf]
        %v2910 = vld [vmem:[%s3 + $0xf8] sm:$0xf]
        %v2911 = vld [vmem:[%s3 + $0xfc] sm:$0xf]
        %v2928 = vunpack.c.l.b16 %v2896
        %v2929 = vunpack.c.l.b16 %v2897
        %v2930 = vunpack.c.l.b16 %v2898
        %v2931 = vunpack.c.l.b16 %v2899
        %v2932 = vunpack.c.l.b16 %v2900
        %v2933 = vunpack.c.l.b16 %v2901
        %v2934 = vunpack.c.l.b16 %v2902
        %v2935 = vunpack.c.l.b16 %v2903
        %v2936 = vunpack.c.l.b16 %v2904
        %v2937 = vunpack.c.l.b16 %v2905
        %v2938 = vunpack.c.l.b16 %v2906
        %v2939 = vunpack.c.l.b16 %v2907
        %v2940 = vunpack.c.l.b16 %v2908
        %v2941 = vunpack.c.l.b16 %v2909
        %v2942 = vunpack.c.l.b16 %v2910
        %v2943 = vunpack.c.l.b16 %v2911
        %v2944 = vpack.c.b16 %v2929, %v2928
        %v2945 = vpack.c.b16 %v2931, %v2930
        %v2946 = vpack.c.b16 %v2933, %v2932
        %v2947 = vpack.c.b16 %v2935, %v2934
        %v2948 = vpack.c.b16 %v2937, %v2936
        %v2949 = vpack.c.b16 %v2939, %v2938
        %v2950 = vpack.c.b16 %v2941, %v2940
        %v2951 = vpack.c.b16 %v2943, %v2942
        %2960 = vmatprep.subr.bf16.mxu0 0
        %2961 = vmatpush1.bf16.msra.mxu0 %v2944
        %2962 = vmatprep.subr.bf16.mxu0 0
        %2963 = vmatpush1.bf16.msra.mxu0 %v2945
        %2964 = vmatprep.subr.bf16.mxu0 0
        %2965 = vmatpush1.bf16.msra.mxu0 %v2946
        %2966 = vmatprep.subr.bf16.mxu0 0
        %2967 = vmatpush1.bf16.msra.mxu0 %v2947
        %2968 = vmatprep.subr.bf16.mxu0 0
        %2969 = vmatpush1.bf16.msra.mxu0 %v2948
        %2970 = vmatprep.subr.bf16.mxu0 0
        %2971 = vmatpush1.bf16.msra.mxu0 %v2949
        %2972 = vmatprep.subr.bf16.mxu0 0
        %2973 = vmatpush1.bf16.msra.mxu0 %v2950
        %2974 = vmatprep.subr.bf16.mxu0 0
        %2975 = vmatpush1.bf16.msra.mxu0 %v2951
        %2976 = vmatprep.subr.bf16.mxu0 0
        %2977 = vmatpush1.bf16.msra.mxu0 0
        %2978 = vmatprep.subr.bf16.mxu0 0
        %2979 = vmatpush1.bf16.msra.mxu0 0
        %2980 = vmatprep.subr.bf16.mxu0 0
        %2981 = vmatpush1.bf16.msra.mxu0 0
        %2982 = vmatprep.subr.bf16.mxu0 0
        %2983 = vmatpush1.bf16.msra.mxu0 0
        %2984 = vmatprep.subr.bf16.mxu0 0
        %2985 = vmatpush1.bf16.msra.mxu0 0
        %2986 = vmatprep.subr.bf16.mxu0 0
        %2987 = vmatpush1.bf16.msra.mxu0 0
        %2988 = vmatprep.subr.bf16.mxu0 0
        %2989 = vmatpush1.bf16.msra.mxu0 0
        %2990 = vmatprep.subr.bf16.mxu0 0
        %2991 = vmatpush1.bf16.msra.mxu0 0
        %2992 = vmatprep.mubr.bf16.mxu0 0
        %2993 = vmatmul.mubr.bf16.gmra.mrb[0].mxu0 %v1882
        %v2994 = vpop.f32.mrb[0].mxu0
        %v2995 = vadd.f32 0.0, %v2994
        %v2996 = vpop.f32.mrb[0].mxu0
        %v2997 = vpop.f32.mrb[0].mxu0
        %v2998 = vpop.f32.mrb[0].mxu0
        %2999 = vdwg.mxu0
        %3000 = vrot.lane.b32.xlu0 %v2995, 127
        %v3001 = vpop.permute.xlu0 %3000
        %v3002 = vsel %vm1925, %v3001, %v2995
        %3003 = vrot.lane.b32.xlu0 %v3002, 126
        %v3004 = vpop.permute.xlu0 %3003
        %v3005 = vsel %vm1930, %v3004, %v3002
        %3006 = vrot.lane.b32.xlu0 %v3005, 124
        %v3007 = vpop.permute.xlu0 %3006
        %v3008 = vsel %vm1935, %v3007, %v3005
        %3009 = vmatprep.subr.bf16.mxu0 0
        %3010 = vmatpush1.bf16.msra.mxu0 %v1907
        %3011 = vmatprep.subr.bf16.mxu0 0
        %3012 = vmatpush1.bf16.msra.mxu0 %v1908
        %3013 = vmatprep.subr.bf16.mxu0 0
        %3014 = vmatpush1.bf16.msra.mxu0 %v1909
        %3015 = vmatprep.subr.bf16.mxu0 0
        %3016 = vmatpush1.bf16.msra.mxu0 %v1910
        %3017 = vmatprep.subr.bf16.mxu0 0
        %3018 = vmatpush1.bf16.msra.mxu0 %v1911
        %3019 = vmatprep.subr.bf16.mxu0 0
        %3020 = vmatpush1.bf16.msra.mxu0 %v1912
        %3021 = vmatprep.subr.bf16.mxu0 0
        %3022 = vmatpush1.bf16.msra.mxu0 %v1913
        %3023 = vmatprep.subr.bf16.mxu0 0
        %3024 = vmatpush1.bf16.msra.mxu0 %v1914
        %3025 = vmatprep.subr.bf16.mxu0 0
        %3026 = vmatpush1.bf16.msra.mxu0 0
        %3027 = vmatprep.subr.bf16.mxu0 0
        %3028 = vmatpush1.bf16.msra.mxu0 0
        %3029 = vmatprep.subr.bf16.mxu0 0
        %3030 = vmatpush1.bf16.msra.mxu0 0
        %3031 = vmatprep.subr.bf16.mxu0 0
        %3032 = vmatpush1.bf16.msra.mxu0 0
        %3033 = vmatprep.subr.bf16.mxu0 0
        %3034 = vmatpush1.bf16.msra.mxu0 0
        %3035 = vmatprep.subr.bf16.mxu0 0
        %3036 = vmatpush1.bf16.msra.mxu0 0
        %3037 = vmatprep.subr.bf16.mxu0 0
        %3038 = vmatpush1.bf16.msra.mxu0 0
        %3039 = vmatprep.subr.bf16.mxu0 0
        %3040 = vmatpush1.bf16.msra.mxu0 0
        %3041 = vmatprep.mubr.bf16.mxu0 0
        %3042 = vmatmul.mubr.bf16.gmra.mrb[0].mxu0 %v1852
        %v3043 = vpop.f32.mrb[0].mxu0
        %v3044 = vadd.f32 %v3008, %v3043
        %v3045 = vpop.f32.mrb[0].mxu0
        %v3046 = vpop.f32.mrb[0].mxu0
        %v3047 = vpop.f32.mrb[0].mxu0
        %3048 = vdwg.mxu0
        %v3049 = vsel %vm2090, %v3044, -inf
        %3050 = vmax.xlane.f32.xlu0 %v3049
        %v3051 = vpop.xlane.xlu0 %3050
        %v3052 = vsub.f32 %v3044, %v3051
        %v3053 = vmul.f32 %v3052, 1.442695
        %v3054 = vpow.pop %v3053
        %v3055 = vsel %vm2090, %v3054, 0.0
        %3056 = vadd.xlane.f32.xlu0 %v3055
        %v3057 = vpop.xlane.xlu0 %3056
        %v3058 = vrcp.pop %v3057
        %v3059 = vmul.f32 %v3054, %v3058
        %v3060 = vpack.c.bf16 %v3059, %v3059
        %v3062 = vsel %vm2090, %v3060, 0
        %v3065 = vsel %vm2106, %v1918, 0
        %3067 = vmatprep.subr.bf16.mxu0 0
        %3068 = vmatpush1.bf16.msra.mxu0 %v3065
        %3069 = vmatprep.subr.bf16.mxu0 0
        %3070 = vmatpush1.bf16.msra.mxu0 0
        %3071 = vmatprep.subr.bf16.mxu0 0
        %3072 = vmatpush1.bf16.msra.mxu0 0
        %3073 = vmatprep.subr.bf16.mxu0 0
        %3074 = vmatpush1.bf16.msra.mxu0 0
        %3075 = vmatprep.subr.bf16.mxu0 0
        %3076 = vmatpush1.bf16.msra.mxu0 0
        %3077 = vmatprep.subr.bf16.mxu0 0
        %3078 = vmatpush1.bf16.msra.mxu0 0
        %3079 = vmatprep.subr.bf16.mxu0 0
        %3080 = vmatpush1.bf16.msra.mxu0 0
        %3081 = vmatprep.subr.bf16.mxu0 0
        %3082 = vmatpush1.bf16.msra.mxu0 0
        %3083 = vmatprep.subr.bf16.mxu0 0
        %3084 = vmatpush1.bf16.msra.mxu0 0
        %3085 = vmatprep.subr.bf16.mxu0 0
        %3086 = vmatpush1.bf16.msra.mxu0 0
        %3087 = vmatprep.subr.bf16.mxu0 0
        %3088 = vmatpush1.bf16.msra.mxu0 0
        %3089 = vmatprep.subr.bf16.mxu0 0
        %3090 = vmatpush1.bf16.msra.mxu0 0
        %3091 = vmatprep.subr.bf16.mxu0 0
        %3092 = vmatpush1.bf16.msra.mxu0 0
        %3093 = vmatprep.subr.bf16.mxu0 0
        %3094 = vmatpush1.bf16.msra.mxu0 0
        %3095 = vmatprep.subr.bf16.mxu0 0
        %3096 = vmatpush1.bf16.msra.mxu0 0
        %3097 = vmatprep.subr.bf16.mxu0 0
        %3098 = vmatpush1.bf16.msra.mxu0 0
        %3099 = vmatprep.mubr.bf16.mxu0 0
        %3100 = vmatmul.mubr.bf16.gmra.mrb[0].mxu0 %v3062
        %v3101 = vpop.f32.mrb[0].mxu0
        %v3102 = vadd.f32 0.0, %v3101
        %v3103 = vpop.f32.mrb[0].mxu0
        %v3104 = vpop.f32.mrb[0].mxu0
        %v3105 = vpop.f32.mrb[0].mxu0
        %3106 = vdwg.mxu0
        %v3107 = vpack.c.bf16 %v3102, %v3102
        %v3108 = vld [vmem:[%s10 + $0xc0] sm:$0xf]
        %v3109 = vld [vmem:[%s10 + $0xc4] sm:$0xf]
        %v3110 = vld [vmem:[%s10 + $0xc8] sm:$0xf]
        %v3111 = vld [vmem:[%s10 + $0xcc] sm:$0xf]
        %v3112 = vld [vmem:[%s10 + $0xd0] sm:$0xf]
        %v3113 = vld [vmem:[%s10 + $0xd4] sm:$0xf]
        %v3114 = vld [vmem:[%s10 + $0xd8] sm:$0xf]
        %v3115 = vld [vmem:[%s10 + $0xdc] sm:$0xf]
        %v3116 = vld [vmem:[%s10 + $0xe0] sm:$0xf]
        %v3117 = vld [vmem:[%s10 + $0xe4] sm:$0xf]
        %v3118 = vld [vmem:[%s10 + $0xe8] sm:$0xf]
        %v3119 = vld [vmem:[%s10 + $0xec] sm:$0xf]
        %v3120 = vld [vmem:[%s10 + $0xf0] sm:$0xf]
        %v3121 = vld [vmem:[%s10 + $0xf4] sm:$0xf]
        %v3122 = vld [vmem:[%s10 + $0xf8] sm:$0xf]
        %v3123 = vld [vmem:[%s10 + $0xfc] sm:$0xf]
        %v3140 = vunpack.c.l.b16 %v3108
        %v3141 = vunpack.c.l.b16 %v3109
        %v3142 = vunpack.c.l.b16 %v3110
        %v3143 = vunpack.c.l.b16 %v3111
        %v3144 = vunpack.c.l.b16 %v3112
        %v3145 = vunpack.c.l.b16 %v3113
        %v3146 = vunpack.c.l.b16 %v3114
        %v3147 = vunpack.c.l.b16 %v3115
        %v3148 = vunpack.c.l.b16 %v3116
        %v3149 = vunpack.c.l.b16 %v3117
        %v3150 = vunpack.c.l.b16 %v3118
        %v3151 = vunpack.c.l.b16 %v3119
        %v3152 = vunpack.c.l.b16 %v3120
        %v3153 = vunpack.c.l.b16 %v3121
        %v3154 = vunpack.c.l.b16 %v3122
        %v3155 = vunpack.c.l.b16 %v3123
        %v3156 = vpack.c.b16 %v3141, %v3140
        %v3157 = vpack.c.b16 %v3143, %v3142
        %v3158 = vpack.c.b16 %v3145, %v3144
        %v3159 = vpack.c.b16 %v3147, %v3146
        %v3160 = vpack.c.b16 %v3149, %v3148
        %v3161 = vpack.c.b16 %v3151, %v3150
        %v3162 = vpack.c.b16 %v3153, %v3152
        %v3163 = vpack.c.b16 %v3155, %v3154
        %3172 = vmatprep.subr.bf16.mxu0 0
        %3173 = vmatpush1.bf16.msra.mxu0 %v3156
        %3174 = vmatprep.subr.bf16.mxu0 0
        %3175 = vmatpush1.bf16.msra.mxu0 %v3157
        %3176 = vmatprep.subr.bf16.mxu0 0
        %3177 = vmatpush1.bf16.msra.mxu0 %v3158
        %3178 = vmatprep.subr.bf16.mxu0 0
        %3179 = vmatpush1.bf16.msra.mxu0 %v3159
        %3180 = vmatprep.subr.bf16.mxu0 0
        %3181 = vmatpush1.bf16.msra.mxu0 %v3160
        %3182 = vmatprep.subr.bf16.mxu0 0
        %3183 = vmatpush1.bf16.msra.mxu0 %v3161
        %3184 = vmatprep.subr.bf16.mxu0 0
        %3185 = vmatpush1.bf16.msra.mxu0 %v3162
        %3186 = vmatprep.subr.bf16.mxu0 0
        %3187 = vmatpush1.bf16.msra.mxu0 %v3163
        %3188 = vmatprep.subr.bf16.mxu0 0
        %3189 = vmatpush1.bf16.msra.mxu0 0
        %3190 = vmatprep.subr.bf16.mxu0 0
        %3191 = vmatpush1.bf16.msra.mxu0 0
        %3192 = vmatprep.subr.bf16.mxu0 0
        %3193 = vmatpush1.bf16.msra.mxu0 0
        %3194 = vmatprep.subr.bf16.mxu0 0
        %3195 = vmatpush1.bf16.msra.mxu0 0
        %3196 = vmatprep.subr.bf16.mxu0 0
        %3197 = vmatpush1.bf16.msra.mxu0 0
        %3198 = vmatprep.subr.bf16.mxu0 0
        %3199 = vmatpush1.bf16.msra.mxu0 0
        %3200 = vmatprep.subr.bf16.mxu0 0
        %3201 = vmatpush1.bf16.msra.mxu0 0
        %3202 = vmatprep.subr.bf16.mxu0 0
        %3203 = vmatpush1.bf16.msra.mxu0 0
        %3204 = vmatprep.mubr.bf16.mxu0 0
        %3205 = vmatmul.mubr.bf16.gmra.mrb[0].mxu0 %v3107
        %v3206 = vpop.f32.mrb[0].mxu0
        %v3207 = vadd.f32 0.0, %v3206
        %v3208 = vpop.f32.mrb[0].mxu0
        %v3209 = vpop.f32.mrb[0].mxu0
        %v3210 = vpop.f32.mrb[0].mxu0
        %3211 = vdwg.mxu0
        %v3212 = vadd.f32 %v2895, %v3207
        %3213 = vst.msk [vmem:[%s486] sm:$0xff] %vm577, %v3212
        %s3214 = sand.u32 %s345, 1
        %s3215 = scalar_lea.sflag [#allocation3], %s3214
        %s3216 = sand.u32 %s345, 1
        %s3217 = smul.addr %s3216, 8
        %s3218 = scalar_lea.vmem [#allocation2], %s3217
        // Predicated region
        $region77: #{tpu_custom_call.1} parent=75 // pred_check
          %p3219 = pneg %p355
        $region78: #{tpu_custom_call.1} parent=75 // pred_check_branch
          %3221 = sbr.rel (%p3219) target = $region80
        $region79: #{tpu_custom_call.1} parent=75 // pred_region
          %s3223 = ssub.s32 128, 128
          %3224 = vsyncadd %s3215, %s3223
          %s3225 = smul.addr %s28, 128
          %s3226 = scalar_lea.hbm %s14, %s3225
          %s3228 = sshll.u32 %s3218, 4
          %s3229 = int_to_ptr.vmem [resolvable:$true] %s3228
          %3231 = dma.vmem_to_hbm [thread:$0]  %s3229, 128, %s3226, %s3215
        $region80: #{tpu_custom_call.1} parent=75 // pred_fallthru
          _
      $region76: #{tpu_custom_call.1} parent=5 // pred_fallthru
        _
      %p3232 = scmp.le.s32.totalorder 2, %s23
      // Predicated region
      $region81: #{tpu_custom_call.1} parent=5 // pred_check
        %p3233 = pneg %p3232
      $region82: #{tpu_custom_call.1} parent=5 // pred_check_branch
        %3235 = sbr.rel (%p3233) target = $region84
      $region83: #{tpu_custom_call.1} parent=5 // pred_region
        %s3236 = ssub.s32 %s23, 2
        // Predicated region
        $region85: #{tpu_custom_call.1} parent=83 // pred_check
          %p3237 = pneg %p361
        $region86: #{tpu_custom_call.1} parent=83 // pred_check_branch
          %3239 = sbr.rel (%p3237) target = $region88
        $region87: #{tpu_custom_call.1} parent=83 // pred_region
          %s3240 = sand.u32 %s346, 1
          %s3241 = scalar_lea.sflag [#allocation3], %s3240
          %s3242 = sand.u32 %s346, 1
          %s3243 = smul.addr %s3242, 8
          %s3244 = scalar_lea.vmem [#allocation2], %s3243
          %3245 = dma.done %s3241, 128
        $region88: #{tpu_custom_call.1} parent=83 // pred_fallthru
          _
      $region84: #{tpu_custom_call.1} parent=5 // pred_fallthru
        _
    $region6: #{tpu_custom_call.1} parent=1 // loop_footer
      %s27 = sadd.s32 1, %s23
    $region7: #{tpu_custom_call.1} parent=1 // loop_footer_branch
      %22 = sbr.rel target = $region3
    $region8: #{tpu_custom_call.1} parent=1 // loop_exit
      _
    %3246 = vsyncpa [#allocation3], 1
    %s3247 = scalar_lea.sflag [#allocation3], 1
    %3248 = vsyncpa %s3247, 1

</llo_original>
